<compile_context>
chip_gen: v6e
topology: v6e:2x2x1
jax: 0.10.0
libtpu: 0.0.40
codegen_flags: <defaults>
</compile_context>

<pallas_src>
import functools

import jax
import jax.numpy as jnp
from jax.experimental import pallas as pl
from jax.experimental.pallas import tpu as pltpu

BN_EPS = 1e-5
LANE = 128                           # channel dim padded to a lane multiple
TARGET_TILE_ROWS = 512               # >=512-row M tiles ~ HBM roofline
VMEM_LIMIT_BYTES = 32 * 1024 * 1024  # explicit scoped-VMEM budget (all gens)


def _round_up(x, m):
    return (x + m - 1) // m * m


def _pick_band(hout, wout, target_rows=TARGET_TILE_ROWS):
    """Output rows per grid step; keeps band*Wout near the target tile size."""
    th = hout
    while th % 2 == 0 and th * wout > target_rows:
        th //= 2
    return th


def _space_to_depth(x, s):
    """Fold stride-s phases into channels so strided convs use unit-stride reads.

    Tap (dy, dx) of a stride-s conv then reads channel block
    ((dy%s)*s + dx%s)*C at spatial offset (dy//s, dx//s).
    """
    if s == 1:
        return x
    n, h, w, c = x.shape
    hp, wp = _round_up(h, s), _round_up(w, s)
    if (hp, wp) != (h, w):
        x = jnp.pad(x, ((0, 0), (0, hp - h), (0, wp - w), (0, 0)))
    x = x.reshape(n, hp // s, s, wp // s, s, c)
    x = jnp.transpose(x, (0, 1, 3, 2, 4, 5))
    return x.reshape(n, hp // s, wp // s, s * s * c)


# ----------------------------------------------------------------------------
# Pass 1: conv taps (MXU, bf16 in / f32 acc) + partial BN statistics
# ----------------------------------------------------------------------------
def _conv_stats_kernel(kh, kw, stride, th, wout, cin):
    def kernel(x_ref, w_ref, b_ref, y_ref, st_ref):
        # x_ref : (1, Hp', Wp', s*s*Cin)  bf16   (whole padded image, resident)
        # w_ref : (kh*kw, Cin, Coutp)     bf16
        # b_ref : (1, Coutp)              f32
        # y_ref : (th*wout, Coutp)        f32    lane-dense pre-BN slab (band)
        # st_ref: (1, 2, Coutp)           f32    per-image [sum; sum_sq]
        t = pl.program_id(1)          # H-band index (reduction axis for stats)
        row0 = t * th
        acc = None
        k = 0
        for dy in range(kh):
            for dx in range(kw):
                oy, py = divmod(dy, stride)
                ox, px = divmod(dx, stride)
                coff = (py * stride + px) * cin
                xk = x_ref[0, pl.ds(row0 + oy, th), ox:ox + wout,
                           coff:coff + cin]
                xk = xk.reshape(th * wout, cin)
                part = jnp.dot(xk, w_ref[k],
                               preferred_element_type=jnp.float32)
                acc = part if acc is None else acc + part
                k += 1
        # Conv bias cancels exactly under training-mode BN, kept for
        # faithfulness to the nn.Module (one vadd per element).
        acc = acc + b_ref[...]
        y_ref[...] = acc

        s0 = jnp.sum(acc, axis=0, keepdims=True)          # (1, Coutp)
        s1 = jnp.sum(acc * acc, axis=0, keepdims=True)    # (1, Coutp)

        @pl.when(t == 0)
        def _():
            st_ref[0, 0:1, :] = s0
            st_ref[0, 1:2, :] = s1

        @pl.when(t != 0)
        def _():
            st_ref[0, 0:1, :] += s0
            st_ref[0, 1:2, :] += s1

    return kernel


# ----------------------------------------------------------------------------
# Pass 2: finish BN stats, normalize (folded scale/shift), activation, residual
# ----------------------------------------------------------------------------
def _bn_act_kernel(mode, inv_count):
    def kernel(*refs):
        if mode == "relu_add_relu":
            x_ref, st_ref, g_ref, be_ref, sc_ref, o_ref = refs
        else:
            x_ref, st_ref, g_ref, be_ref, o_ref = refs
            sc_ref = None
        # Finish the (tiny) cross-image reduction of the partial stats.
        stats = jnp.sum(st_ref[...], axis=0)               # (2, Coutp) f32
        mean = stats[0:1, :] * inv_count
        ex2 = stats[1:2, :] * inv_count
        var = ex2 - mean * mean                            # biased variance
        scale = jax.lax.rsqrt(var + BN_EPS) * g_ref[...]
        shift = be_ref[...] - mean * scale                 # fold centering
        y = x_ref[...] * scale + shift                     # one mul + one add
        if mode in ("relu", "relu_add_relu"):
            y = jnp.maximum(y, 0.0)
        if mode == "relu_add_relu":
            y = jnp.maximum(y + sc_ref[...].astype(jnp.float32), 0.0)
        o_ref[...] = y.astype(o_ref.dtype)

    return kernel


# ----------------------------------------------------------------------------
# One Conv2d + BatchNorm2d(train) + activation stage (two pallas_calls)
# ----------------------------------------------------------------------------
def _conv_bn_act(x_nhwc, w_oihw, bias, gamma, beta, *, stride, pad, mode,
                 shortcut=None, out_dtype=jnp.float32):
    """Returns a lane-dense (N*Hout*Wout, Cout_padded) slab and (Hout, Wout).

    `shortcut`, if given, must already be a lane-dense (M, Cout_padded) bf16
    slab; it is added after the ReLU and ReLU'd again (matches the module).
    """
    n, h, w, cin = x_nhwc.shape
    cout, cin_w, kh, kw = w_oihw.shape
    assert cin_w == cin
    hout = (h + 2 * pad - kh) // stride + 1
    wout = (w + 2 * pad - kw) // stride + 1
    coutp = _round_up(cout, LANE)

    # ---- glue: spatial pad, space-to-depth for strided convs, bf16 cast ----
    xp = x_nhwc
    if pad:
        xp = jnp.pad(xp, ((0, 0), (pad, pad), (pad, pad), (0, 0)))
    xp = _space_to_depth(xp, stride).astype(jnp.bfloat16)
    _, hp2, wp2, ce = xp.shape

    # ---- weights: OIHW -> (kh*kw, Cin, Coutp), BN params -> (1, Coutp) -----
    w3d = jnp.transpose(w_oihw, (2, 3, 1, 0)).reshape(kh * kw, cin, cout)
    w3d = jnp.pad(w3d, ((0, 0), (0, 0), (0, coutp - cout))).astype(jnp.bfloat16)
    b2d = jnp.pad(bias, (0, coutp - cout)).reshape(1, coutp).astype(jnp.float32)
    g2d = jnp.pad(gamma, (0, coutp - cout)).reshape(1, coutp).astype(jnp.float32)
    be2d = jnp.pad(beta, (0, coutp - cout)).reshape(1, coutp).astype(jnp.float32)

    th = _pick_band(hout, wout)
    n_bands = hout // th
    tm = th * wout                       # M-tile rows per grid step
    m = n * hout * wout
    # TODO(synk): ragged spatial shapes (tm not sublane-aligned) need M padding.
    assert tm % 8 == 0, "band rows must be sublane aligned"

    # ---------------- pass 1: conv + per-image partial BN stats -------------
    conv_pre, stats = pl.pallas_call(
        _conv_stats_kernel(kh, kw, stride, th, wout, cin),
        grid=(n, n_bands),
        in_specs=[
            pl.BlockSpec((1, hp2, wp2, ce), lambda i, t: (i, 0, 0, 0)),
            pl.BlockSpec((kh * kw, cin, coutp), lambda i, t: (0, 0, 0)),
            pl.BlockSpec((1, coutp), lambda i, t: (0, 0)),
        ],
        out_specs=[
            pl.BlockSpec((tm, coutp), lambda i, t: (i * n_bands + t, 0)),
            pl.BlockSpec((1, 2, coutp), lambda i, t: (i, 0, 0)),
        ],
        out_shape=[
            jax.ShapeDtypeStruct((m, coutp), jnp.float32),   # pre-BN slab
            jax.ShapeDtypeStruct((n, 2, coutp), jnp.float32),  # sum / sum_sq
        ],
        compiler_params=pltpu.CompilerParams(
            dimension_semantics=("parallel", "arbitrary"),
            vmem_limit_bytes=VMEM_LIMIT_BYTES),
    )(xp, w3d, b2d)

    # ---------------- pass 2: BN + activation (+ residual), M-tiled ---------
    inv_count = 1.0 / float(m)
    n_tiles = m // tm
    in_specs = [
        pl.BlockSpec((tm, coutp), lambda i: (i, 0)),
        pl.BlockSpec((n, 2, coutp), lambda i: (0, 0, 0)),
        pl.BlockSpec((1, coutp), lambda i: (0, 0)),
        pl.BlockSpec((1, coutp), lambda i: (0, 0)),
    ]
    inputs = [conv_pre, stats, g2d, be2d]
    if mode == "relu_add_relu":
        in_specs.append(pl.BlockSpec((tm, coutp), lambda i: (i, 0)))
        inputs.append(shortcut)

    out2d = pl.pallas_call(
        _bn_act_kernel(mode, inv_count),
        grid=(n_tiles,),
        in_specs=in_specs,
        out_specs=pl.BlockSpec((tm, coutp), lambda i: (i, 0)),
        out_shape=jax.ShapeDtypeStruct((m, coutp), out_dtype),
        compiler_params=pltpu.CompilerParams(
            dimension_semantics=("parallel",),
            vmem_limit_bytes=VMEM_LIMIT_BYTES),
    )(*inputs)
    return out2d, (hout, wout)


# ----------------------------------------------------------------------------
# ResBlock forward
# ----------------------------------------------------------------------------
def resblock_forward_nhwc(x_nhwc, params, downsample):
    n, h, w, cin = x_nhwc.shape
    cout = params["w1"].shape[0]
    coutp = _round_up(cout, LANE)

    if downsample:
        sc2d, _ = _conv_bn_act(
            x_nhwc, params["w_sc"], params["b_sc"], params["g_sc"],
            params["be_sc"], stride=2, pad=0, mode="linear",
            out_dtype=jnp.bfloat16)
        stride1 = 2
    else:
        assert cin == cout
        sc2d = jnp.pad(x_nhwc, ((0, 0), (0, 0), (0, 0), (0, coutp - cout)))
        sc2d = sc2d.reshape(n * h * w, coutp).astype(jnp.bfloat16)
        stride1 = 1

    h1_2d, (h1, w1) = _conv_bn_act(
        x_nhwc, params["w1"], params["b1"], params["g1"], params["be1"],
        stride=stride1, pad=1, mode="relu", out_dtype=jnp.bfloat16)
    h1_nhwc = h1_2d.reshape(n, h1, w1, coutp)[..., :cout]

    out2d, (h2, w2) = _conv_bn_act(
        h1_nhwc, params["w2"], params["b2"], params["g2"], params["be2"],
        stride=1, pad=1, mode="relu_add_relu", shortcut=sc2d,
        out_dtype=jnp.float32)
    return out2d.reshape(n, h2, w2, coutp)[..., :cout]


@functools.partial(jax.jit, static_argnames=("downsample",))
def resblock_forward(x_nchw, params, downsample):
    # NCHW public API to mirror the PyTorch module; the transposes live at the
    # block boundary only (a block stack should stay NHWC via *_nhwc).
    x = jnp.transpose(x_nchw, (0, 2, 3, 1))
    out = resblock_forward_nhwc(x, params, downsample)
    return jnp.transpose(out, (0, 3, 1, 2))


# ----------------------------------------------------------------------------
# Deterministic synthetic parameters (match the nn.Module shapes)
# ----------------------------------------------------------------------------
def init_params(key, in_channels, out_channels, downsample):
    ks = jax.random.split(key, 12)
    n = lambda k, s: 0.1 * jax.random.normal(k, s, jnp.float32)
    p = {
        "w1": n(ks[0], (out_channels, in_channels, 3, 3)),
        "b1": n(ks[1], (out_channels,)),
        "g1": 1.0 + n(ks[2], (out_channels,)),
        "be1": n(ks[3], (out_channels,)),
        "w2": n(ks[4], (out_channels, out_channels, 3, 3)),
        "b2": n(ks[5], (out_channels,)),
        "g2": 1.0 + n(ks[6], (out_channels,)),
        "be2": n(ks[7], (out_channels,)),
    }
    if downsample:
        p.update({
            "w_sc": n(ks[8], (out_channels, in_channels, 1, 1)),
            "b_sc": n(ks[9], (out_channels,)),
            "g_sc": 1.0 + n(ks[10], (out_channels,)),
            "be_sc": n(ks[11], (out_channels,)),
        })
    return p


# ----------------------------------------------------------------------------
# Pure-JAX f32 reference (correctness check only)
# ----------------------------------------------------------------------------
def _ref_conv(x, w, b, stride, pad):
    y = jax.lax.conv_general_dilated(
        x, w, (stride, stride), [(pad, pad), (pad, pad)],
        dimension_numbers=("NCHW", "OIHW", "NCHW"))
    return y + b.reshape(1, -1, 1, 1)


def _ref_bn(x, gamma, beta):
    mean = x.mean(axis=(0, 2, 3), keepdims=True)
    var = ((x - mean) ** 2).mean(axis=(0, 2, 3), keepdims=True)
    return (x - mean) / jnp.sqrt(var + BN_EPS) * gamma.reshape(1, -1, 1, 1) \
        + beta.reshape(1, -1, 1, 1)


def _ref_resblock(x, p, downsample):
    if downsample:
        sc = _ref_bn(_ref_conv(x, p["w_sc"], p["b_sc"], 2, 0), p["g_sc"], p["be_sc"])
        s1 = 2
    else:
        sc = x
        s1 = 1
    h = jax.nn.relu(_ref_bn(_ref_conv(x, p["w1"], p["b1"], s1, 1), p["g1"], p["be1"]))
    h = jax.nn.relu(_ref_bn(_ref_conv(h, p["w2"], p["b2"], 1, 1), p["g2"], p["be2"]))
    return jax.nn.relu(h + sc)


# ----------------------------------------------------------------------------
if __name__ == "__main__":
    key = jax.random.PRNGKey(0)
    kx1, kx2, kp1, kp2, kp3 = jax.random.split(key, 5)

    # bf16 MXU operands (f32 accumulation) -> loosened tolerance vs f32 ref.
    TOL = dict(atol=5e-2, rtol=5e-2)

    # Case 1: downsample=True (stride-2 3x3 conv, 1x1 stride-2 conv-BN shortcut)
    x1 = jax.random.normal(kx1, (2, 4, 16, 16), jnp.float32)
    p1 = init_params(kp1, 4, 8, downsample=True)
    o1 = jax.block_until_ready(resblock_forward(x1, p1, downsample=True))
    r1 = _ref_resblock(x1, p1, True)
    assert o1.shape == (2, 8, 8, 8), o1.shape
    assert jnp.allclose(o1, r1, **TOL), float(jnp.max(jnp.abs(o1 - r1)))

    # Case 2: downsample=False (identity shortcut)
    p2 = init_params(kp2, 4, 4, downsample=False)
    o2 = jax.block_until_ready(resblock_forward(x1, p2, downsample=False))
    r2 = _ref_resblock(x1, p2, False)
    assert o2.shape == (2, 4, 16, 16), o2.shape
    assert jnp.allclose(o2, r2, **TOL), float(jnp.max(jnp.abs(o2 - r2)))

    # Case 3: larger spatial extent -> multiple H-bands per image (exercises
    # the band-tiled grid and cross-band BN stat accumulation).
    x2 = jax.random.normal(kx2, (2, 8, 32, 32), jnp.float32)
    p3 = init_params(kp3, 8, 8, downsample=False)
    o3 = jax.block_until_ready(resblock_forward(x2, p3, downsample=False))
    r3 = _ref_resblock(x2, p3, False)
    assert o3.shape == (2, 8, 32, 32), o3.shape
    assert jnp.allclose(o3, r3, **TOL), float(jnp.max(jnp.abs(o3 - r3)))

    print("KERNEL_OK")
</pallas_src>

<mosaic_0001>
module attributes {stable_mosaic.version = 11 : i64} {
  func.func @kernel(%arg0: i32, %arg1: i32, %arg2: memref<1x9x9x16xbf16, #tpu.memory_space<vmem>>, %arg3: memref<9x4x128xbf16, #tpu.memory_space<vmem>>, %arg4: memref<1x128xf32, #tpu.memory_space<vmem>>, %arg5: memref<64x128xf32, #tpu.memory_space<vmem>>, %arg6: memref<1x2x128xf32, #tpu.memory_space<vmem>>) attributes {dimension_semantics = [#tpu.dimension_semantics<parallel>, #tpu.dimension_semantics<arbitrary>], iteration_bounds = array<i64: 2, 1>, scalar_prefetch = 0 : i64, scratch_operands = 0 : i64, tpu.core_type = #tpu.core_type<tc>, window_params = [{transform_indices = @transform_0, window_bounds = array<i64: 1, 9, 9, 16>}, {pipeline_mode = #tpu.pipeline_mode<synchronous>, transform_indices = @transform_1, window_bounds = array<i64: 9, 4, 128>}, {pipeline_mode = #tpu.pipeline_mode<synchronous>, transform_indices = @transform_2, window_bounds = array<i64: 1, 128>}, {transform_indices = @transform_3, window_bounds = array<i64: 64, 128>}, {transform_indices = @transform_4, window_bounds = array<i64: 1, 2, 128>}]} {
    %c8_i32 = arith.constant 8 : i32
    %0 = arith.muli %arg1, %c8_i32 : i32
    %c0_i32 = arith.constant 0 : i32
    %1 = arith.addi %0, %c0_i32 : i32
    %c0 = arith.constant 0 : index
    %2 = arith.index_cast %1 : i32 to index
    %c0_0 = arith.constant 0 : index
    %c0_1 = arith.constant 0 : index
    %3 = vector.load %arg2[%c0, %2, %c0_0, %c0_1] : memref<1x9x9x16xbf16, #tpu.memory_space<vmem>>, vector<1x8x8x4xbf16>
    %4 = vector.shape_cast %3 : vector<1x8x8x4xbf16> to vector<8x8x4xbf16>
    %5 = vector.shape_cast %4 : vector<8x8x4xbf16> to vector<64x4xbf16>
    %c0_2 = arith.constant 0 : index
    %c0_3 = arith.constant 0 : index
    %c0_4 = arith.constant 0 : index
    %6 = vector.load %arg3[%c0_2, %c0_3, %c0_4] : memref<9x4x128xbf16, #tpu.memory_space<vmem>>, vector<1x4x128xbf16>
    %7 = vector.shape_cast %6 : vector<1x4x128xbf16> to vector<4x128xbf16>
    %cst = arith.constant dense<0.000000e+00> : vector<64x128xf32>
    %8 = tpu.matmul %5, %7, %cst {dimension_numbers = #tpu.dot_dimension_numbers<[1], [0], [0], [1], [0, 0, 1, 1], [], []>} : vector<64x4xbf16>, vector<4x128xbf16>, vector<64x128xf32> -> vector<64x128xf32>
    %c0_i32_5 = arith.constant 0 : i32
    %9 = arith.addi %0, %c0_i32_5 : i32
    %c0_6 = arith.constant 0 : index
    %10 = arith.index_cast %9 : i32 to index
    %c0_7 = arith.constant 0 : index
    %c4 = arith.constant 4 : index
    %11 = vector.load %arg2[%c0_6, %10, %c0_7, %c4] : memref<1x9x9x16xbf16, #tpu.memory_space<vmem>>, vector<1x8x8x4xbf16>
    %12 = vector.shape_cast %11 : vector<1x8x8x4xbf16> to vector<8x8x4xbf16>
    %13 = vector.shape_cast %12 : vector<8x8x4xbf16> to vector<64x4xbf16>
    %c1 = arith.constant 1 : index
    %c0_8 = arith.constant 0 : index
    %c0_9 = arith.constant 0 : index
    %14 = vector.load %arg3[%c1, %c0_8, %c0_9] : memref<9x4x128xbf16, #tpu.memory_space<vmem>>, vector<1x4x128xbf16>
    %15 = vector.shape_cast %14 : vector<1x4x128xbf16> to vector<4x128xbf16>
    %cst_10 = arith.constant dense<0.000000e+00> : vector<64x128xf32>
    %16 = tpu.matmul %13, %15, %cst_10 {dimension_numbers = #tpu.dot_dimension_numbers<[1], [0], [0], [1], [0, 0, 1, 1], [], []>} : vector<64x4xbf16>, vector<4x128xbf16>, vector<64x128xf32> -> vector<64x128xf32>
    %17 = arith.addf %8, %16 : vector<64x128xf32>
    %c0_i32_11 = arith.constant 0 : i32
    %18 = arith.addi %0, %c0_i32_11 : i32
    %c0_12 = arith.constant 0 : index
    %19 = arith.index_cast %18 : i32 to index
    %c1_13 = arith.constant 1 : index
    %c0_14 = arith.constant 0 : index
    %20 = vector.load %arg2[%c0_12, %19, %c1_13, %c0_14] : memref<1x9x9x16xbf16, #tpu.memory_space<vmem>>, vector<1x8x8x4xbf16>
    %21 = vector.shape_cast %20 : vector<1x8x8x4xbf16> to vector<8x8x4xbf16>
    %22 = vector.shape_cast %21 : vector<8x8x4xbf16> to vector<64x4xbf16>
    %c2 = arith.constant 2 : index
    %c0_15 = arith.constant 0 : index
    %c0_16 = arith.constant 0 : index
    %23 = vector.load %arg3[%c2, %c0_15, %c0_16] : memref<9x4x128xbf16, #tpu.memory_space<vmem>>, vector<1x4x128xbf16>
    %24 = vector.shape_cast %23 : vector<1x4x128xbf16> to vector<4x128xbf16>
    %cst_17 = arith.constant dense<0.000000e+00> : vector<64x128xf32>
    %25 = tpu.matmul %22, %24, %cst_17 {dimension_numbers = #tpu.dot_dimension_numbers<[1], [0], [0], [1], [0, 0, 1, 1], [], []>} : vector<64x4xbf16>, vector<4x128xbf16>, vector<64x128xf32> -> vector<64x128xf32>
    %26 = arith.addf %17, %25 : vector<64x128xf32>
    %c0_i32_18 = arith.constant 0 : i32
    %27 = arith.addi %0, %c0_i32_18 : i32
    %c0_19 = arith.constant 0 : index
    %28 = arith.index_cast %27 : i32 to index
    %c0_20 = arith.constant 0 : index
    %c8 = arith.constant 8 : index
    %29 = vector.load %arg2[%c0_19, %28, %c0_20, %c8] : memref<1x9x9x16xbf16, #tpu.memory_space<vmem>>, vector<1x8x8x4xbf16>
    %30 = vector.shape_cast %29 : vector<1x8x8x4xbf16> to vector<8x8x4xbf16>
    %31 = vector.shape_cast %30 : vector<8x8x4xbf16> to vector<64x4xbf16>
    %c3 = arith.constant 3 : index
    %c0_21 = arith.constant 0 : index
    %c0_22 = arith.constant 0 : index
    %32 = vector.load %arg3[%c3, %c0_21, %c0_22] : memref<9x4x128xbf16, #tpu.memory_space<vmem>>, vector<1x4x128xbf16>
    %33 = vector.shape_cast %32 : vector<1x4x128xbf16> to vector<4x128xbf16>
    %cst_23 = arith.constant dense<0.000000e+00> : vector<64x128xf32>
    %34 = tpu.matmul %31, %33, %cst_23 {dimension_numbers = #tpu.dot_dimension_numbers<[1], [0], [0], [1], [0, 0, 1, 1], [], []>} : vector<64x4xbf16>, vector<4x128xbf16>, vector<64x128xf32> -> vector<64x128xf32>
    %35 = arith.addf %26, %34 : vector<64x128xf32>
    %c0_i32_24 = arith.constant 0 : i32
    %36 = arith.addi %0, %c0_i32_24 : i32
    %c0_25 = arith.constant 0 : index
    %37 = arith.index_cast %36 : i32 to index
    %c0_26 = arith.constant 0 : index
    %c12 = arith.constant 12 : index
    %38 = vector.load %arg2[%c0_25, %37, %c0_26, %c12] : memref<1x9x9x16xbf16, #tpu.memory_space<vmem>>, vector<1x8x8x4xbf16>
    %39 = vector.shape_cast %38 : vector<1x8x8x4xbf16> to vector<8x8x4xbf16>
    %40 = vector.shape_cast %39 : vector<8x8x4xbf16> to vector<64x4xbf16>
    %c4_27 = arith.constant 4 : index
    %c0_28 = arith.constant 0 : index
    %c0_29 = arith.constant 0 : index
    %41 = vector.load %arg3[%c4_27, %c0_28, %c0_29] : memref<9x4x128xbf16, #tpu.memory_space<vmem>>, vector<1x4x128xbf16>
    %42 = vector.shape_cast %41 : vector<1x4x128xbf16> to vector<4x128xbf16>
    %cst_30 = arith.constant dense<0.000000e+00> : vector<64x128xf32>
    %43 = tpu.matmul %40, %42, %cst_30 {dimension_numbers = #tpu.dot_dimension_numbers<[1], [0], [0], [1], [0, 0, 1, 1], [], []>} : vector<64x4xbf16>, vector<4x128xbf16>, vector<64x128xf32> -> vector<64x128xf32>
    %44 = arith.addf %35, %43 : vector<64x128xf32>
    %c0_i32_31 = arith.constant 0 : i32
    %45 = arith.addi %0, %c0_i32_31 : i32
    %c0_32 = arith.constant 0 : index
    %46 = arith.index_cast %45 : i32 to index
    %c1_33 = arith.constant 1 : index
    %c8_34 = arith.constant 8 : index
    %47 = vector.load %arg2[%c0_32, %46, %c1_33, %c8_34] : memref<1x9x9x16xbf16, #tpu.memory_space<vmem>>, vector<1x8x8x4xbf16>
    %48 = vector.shape_cast %47 : vector<1x8x8x4xbf16> to vector<8x8x4xbf16>
    %49 = vector.shape_cast %48 : vector<8x8x4xbf16> to vector<64x4xbf16>
    %c5 = arith.constant 5 : index
    %c0_35 = arith.constant 0 : index
    %c0_36 = arith.constant 0 : index
    %50 = vector.load %arg3[%c5, %c0_35, %c0_36] : memref<9x4x128xbf16, #tpu.memory_space<vmem>>, vector<1x4x128xbf16>
    %51 = vector.shape_cast %50 : vector<1x4x128xbf16> to vector<4x128xbf16>
    %cst_37 = arith.constant dense<0.000000e+00> : vector<64x128xf32>
    %52 = tpu.matmul %49, %51, %cst_37 {dimension_numbers = #tpu.dot_dimension_numbers<[1], [0], [0], [1], [0, 0, 1, 1], [], []>} : vector<64x4xbf16>, vector<4x128xbf16>, vector<64x128xf32> -> vector<64x128xf32>
    %53 = arith.addf %44, %52 : vector<64x128xf32>
    %c1_i32 = arith.constant 1 : i32
    %54 = arith.addi %0, %c1_i32 : i32
    %c0_38 = arith.constant 0 : index
    %55 = arith.index_cast %54 : i32 to index
    %c0_39 = arith.constant 0 : index
    %c0_40 = arith.constant 0 : index
    %56 = vector.load %arg2[%c0_38, %55, %c0_39, %c0_40] : memref<1x9x9x16xbf16, #tpu.memory_space<vmem>>, vector<1x8x8x4xbf16>
    %57 = vector.shape_cast %56 : vector<1x8x8x4xbf16> to vector<8x8x4xbf16>
    %58 = vector.shape_cast %57 : vector<8x8x4xbf16> to vector<64x4xbf16>
    %c6 = arith.constant 6 : index
    %c0_41 = arith.constant 0 : index
    %c0_42 = arith.constant 0 : index
    %59 = vector.load %arg3[%c6, %c0_41, %c0_42] : memref<9x4x128xbf16, #tpu.memory_space<vmem>>, vector<1x4x128xbf16>
    %60 = vector.shape_cast %59 : vector<1x4x128xbf16> to vector<4x128xbf16>
    %cst_43 = arith.constant dense<0.000000e+00> : vector<64x128xf32>
    %61 = tpu.matmul %58, %60, %cst_43 {dimension_numbers = #tpu.dot_dimension_numbers<[1], [0], [0], [1], [0, 0, 1, 1], [], []>} : vector<64x4xbf16>, vector<4x128xbf16>, vector<64x128xf32> -> vector<64x128xf32>
    %62 = arith.addf %53, %61 : vector<64x128xf32>
    %c1_i32_44 = arith.constant 1 : i32
    %63 = arith.addi %0, %c1_i32_44 : i32
    %c0_45 = arith.constant 0 : index
    %64 = arith.index_cast %63 : i32 to index
    %c0_46 = arith.constant 0 : index
    %c4_47 = arith.constant 4 : index
    %65 = vector.load %arg2[%c0_45, %64, %c0_46, %c4_47] : memref<1x9x9x16xbf16, #tpu.memory_space<vmem>>, vector<1x8x8x4xbf16>
    %66 = vector.shape_cast %65 : vector<1x8x8x4xbf16> to vector<8x8x4xbf16>
    %67 = vector.shape_cast %66 : vector<8x8x4xbf16> to vector<64x4xbf16>
    %c7 = arith.constant 7 : index
    %c0_48 = arith.constant 0 : index
    %c0_49 = arith.constant 0 : index
    %68 = vector.load %arg3[%c7, %c0_48, %c0_49] : memref<9x4x128xbf16, #tpu.memory_space<vmem>>, vector<1x4x128xbf16>
    %69 = vector.shape_cast %68 : vector<1x4x128xbf16> to vector<4x128xbf16>
    %cst_50 = arith.constant dense<0.000000e+00> : vector<64x128xf32>
    %70 = tpu.matmul %67, %69, %cst_50 {dimension_numbers = #tpu.dot_dimension_numbers<[1], [0], [0], [1], [0, 0, 1, 1], [], []>} : vector<64x4xbf16>, vector<4x128xbf16>, vector<64x128xf32> -> vector<64x128xf32>
    %71 = arith.addf %62, %70 : vector<64x128xf32>
    %c1_i32_51 = arith.constant 1 : i32
    %72 = arith.addi %0, %c1_i32_51 : i32
    %c0_52 = arith.constant 0 : index
    %73 = arith.index_cast %72 : i32 to index
    %c1_53 = arith.constant 1 : index
    %c0_54 = arith.constant 0 : index
    %74 = vector.load %arg2[%c0_52, %73, %c1_53, %c0_54] : memref<1x9x9x16xbf16, #tpu.memory_space<vmem>>, vector<1x8x8x4xbf16>
    %75 = vector.shape_cast %74 : vector<1x8x8x4xbf16> to vector<8x8x4xbf16>
    %76 = vector.shape_cast %75 : vector<8x8x4xbf16> to vector<64x4xbf16>
    %c8_55 = arith.constant 8 : index
    %c0_56 = arith.constant 0 : index
    %c0_57 = arith.constant 0 : index
    %77 = vector.load %arg3[%c8_55, %c0_56, %c0_57] : memref<9x4x128xbf16, #tpu.memory_space<vmem>>, vector<1x4x128xbf16>
    %78 = vector.shape_cast %77 : vector<1x4x128xbf16> to vector<4x128xbf16>
    %cst_58 = arith.constant dense<0.000000e+00> : vector<64x128xf32>
    %79 = tpu.matmul %76, %78, %cst_58 {dimension_numbers = #tpu.dot_dimension_numbers<[1], [0], [0], [1], [0, 0, 1, 1], [], []>} : vector<64x4xbf16>, vector<4x128xbf16>, vector<64x128xf32> -> vector<64x128xf32>
    %80 = arith.addf %71, %79 : vector<64x128xf32>
    %c0_59 = arith.constant 0 : index
    %c0_60 = arith.constant 0 : index
    %81 = vector.load %arg4[%c0_59, %c0_60] : memref<1x128xf32, #tpu.memory_space<vmem>>, vector<1x128xf32>
    %82 = vector.broadcast %81 : vector<1x128xf32> to vector<64x128xf32>
    %83 = arith.addf %80, %82 : vector<64x128xf32>
    %c0_61 = arith.constant 0 : index
    %c0_62 = arith.constant 0 : index
    %84 = vector.load %arg5[%c0_61, %c0_62] : memref<64x128xf32, #tpu.memory_space<vmem>>, vector<64x128xf32>
    tpu.vector_store %arg5[%c0_61, %c0_62], %83 {strides = array<i32>} : memref<64x128xf32, #tpu.memory_space<vmem>>, vector<64x128xf32>,
    %cst_63 = arith.constant dense<0.000000e+00> : vector<128xf32>
    %85 = vector.multi_reduction <add>, %83, %cst_63 [0] : vector<64x128xf32> to vector<128xf32>
    %86 = vector.shape_cast %85 : vector<128xf32> to vector<1x128xf32>
    %87 = arith.mulf %83, %83 : vector<64x128xf32>
    %cst_64 = arith.constant dense<0.000000e+00> : vector<128xf32>
    %88 = vector.multi_reduction <add>, %87, %cst_64 [0] : vector<64x128xf32> to vector<128xf32>
    %89 = vector.shape_cast %88 : vector<128xf32> to vector<1x128xf32>
    %c0_i32_65 = arith.constant 0 : i32
    %90 = arith.cmpi eq, %arg1, %c0_i32_65 : i32
    %91 = arith.extui %90 : i1 to i32
    %c0_i32_66 = arith.constant 0 : i32
    %92 = arith.cmpi ne, %91, %c0_i32_66 : i32
    scf.if %92 {
      %c0_69 = arith.constant 0 : index
      %c0_70 = arith.constant 0 : index
      %c0_71 = arith.constant 0 : index
      %96 = vector.load %arg6[%c0_69, %c0_70, %c0_71] : memref<1x2x128xf32, #tpu.memory_space<vmem>>, vector<1x1x128xf32>
      %97 = vector.shape_cast %96 : vector<1x1x128xf32> to vector<1x128xf32>
      %98 = vector.shape_cast %86 : vector<1x128xf32> to vector<1x1x128xf32>
      tpu.vector_store %arg6[%c0_69, %c0_70, %c0_71], %98 {strides = array<i32>} : memref<1x2x128xf32, #tpu.memory_space<vmem>>, vector<1x1x128xf32>,
      %c0_72 = arith.constant 0 : index
      %c1_73 = arith.constant 1 : index
      %c0_74 = arith.constant 0 : index
      %99 = vector.load %arg6[%c0_72, %c1_73, %c0_74] : memref<1x2x128xf32, #tpu.memory_space<vmem>>, vector<1x1x128xf32>
      %100 = vector.shape_cast %99 : vector<1x1x128xf32> to vector<1x128xf32>
      %101 = vector.shape_cast %89 : vector<1x128xf32> to vector<1x1x128xf32>
      tpu.vector_store %arg6[%c0_72, %c1_73, %c0_74], %101 {strides = array<i32>} : memref<1x2x128xf32, #tpu.memory_space<vmem>>, vector<1x1x128xf32>,
    } else {
    }
    %c0_i32_67 = arith.constant 0 : i32
    %93 = arith.cmpi ne, %arg1, %c0_i32_67 : i32
    %94 = arith.extui %93 : i1 to i32
    %c0_i32_68 = arith.constant 0 : i32
    %95 = arith.cmpi ne, %94, %c0_i32_68 : i32
    scf.if %95 {
      %c0_69 = arith.constant 0 : index
      %c0_70 = arith.constant 0 : index
      %c0_71 = arith.constant 0 : index
      %96 = vector.load %arg6[%c0_69, %c0_70, %c0_71] : memref<1x2x128xf32, #tpu.memory_space<vmem>>, vector<1x1x128xf32>
      %97 = vector.shape_cast %96 : vector<1x1x128xf32> to vector<1x128xf32>
      %98 = arith.addf %97, %86 : vector<1x128xf32>
      %c0_72 = arith.constant 0 : index
      %c0_73 = arith.constant 0 : index
      %c0_74 = arith.constant 0 : index
      %99 = vector.load %arg6[%c0_72, %c0_73, %c0_74] : memref<1x2x128xf32, #tpu.memory_space<vmem>>, vector<1x1x128xf32>
      %100 = vector.shape_cast %99 : vector<1x1x128xf32> to vector<1x128xf32>
      %101 = vector.shape_cast %98 : vector<1x128xf32> to vector<1x1x128xf32>
      tpu.vector_store %arg6[%c0_72, %c0_73, %c0_74], %101 {strides = array<i32>} : memref<1x2x128xf32, #tpu.memory_space<vmem>>, vector<1x1x128xf32>,
      %c0_75 = arith.constant 0 : index
      %c1_76 = arith.constant 1 : index
      %c0_77 = arith.constant 0 : index
      %102 = vector.load %arg6[%c0_75, %c1_76, %c0_77] : memref<1x2x128xf32, #tpu.memory_space<vmem>>, vector<1x1x128xf32>
      %103 = vector.shape_cast %102 : vector<1x1x128xf32> to vector<1x128xf32>
      %104 = arith.addf %103, %89 : vector<1x128xf32>
      %c0_78 = arith.constant 0 : index
      %c1_79 = arith.constant 1 : index
      %c0_80 = arith.constant 0 : index
      %105 = vector.load %arg6[%c0_78, %c1_79, %c0_80] : memref<1x2x128xf32, #tpu.memory_space<vmem>>, vector<1x1x128xf32>
      %106 = vector.shape_cast %105 : vector<1x1x128xf32> to vector<1x128xf32>
      %107 = vector.shape_cast %104 : vector<1x128xf32> to vector<1x1x128xf32>
      tpu.vector_store %arg6[%c0_78, %c1_79, %c0_80], %107 {strides = array<i32>} : memref<1x2x128xf32, #tpu.memory_space<vmem>>, vector<1x1x128xf32>,
    } else {
    }
    return
  }
  func.func @transform_0(%arg0: i32, %arg1: i32) -> (i32, i32, i32, i32) {
    %c0_i32 = arith.constant 0 : i32
    %c0_i32_0 = arith.constant 0 : i32
    %c0_i32_1 = arith.constant 0 : i32
    %c0_i32_2 = arith.constant 0 : i32
    return %arg0, %c0_i32, %c0_i32_0, %c0_i32_1 : i32, i32, i32, i32
  }
  func.func @transform_1(%arg0: i32, %arg1: i32) -> (i32, i32, i32) {
    %c0_i32 = arith.constant 0 : i32
    %c0_i32_0 = arith.constant 0 : i32
    %c0_i32_1 = arith.constant 0 : i32
    %c0_i32_2 = arith.constant 0 : i32
    return %c0_i32, %c0_i32_0, %c0_i32_1 : i32, i32, i32
  }
  func.func @transform_2(%arg0: i32, %arg1: i32) -> (i32, i32) {
    %c0_i32 = arith.constant 0 : i32
    %c0_i32_0 = arith.constant 0 : i32
    %c0_i32_1 = arith.constant 0 : i32
    return %c0_i32, %c0_i32_0 : i32, i32
  }
  func.func @transform_3(%arg0: i32, %arg1: i32) -> (i32, i32) {
    %c1_i32 = arith.constant 1 : i32
    %0 = arith.muli %arg0, %c1_i32 : i32
    %1 = arith.addi %0, %arg1 : i32
    %c0_i32 = arith.constant 0 : i32
    %c0_i32_0 = arith.constant 0 : i32
    return %1, %c0_i32 : i32, i32
  }
  func.func @transform_4(%arg0: i32, %arg1: i32) -> (i32, i32, i32) {
    %c0_i32 = arith.constant 0 : i32
    %c0_i32_0 = arith.constant 0 : i32
    %c0_i32_1 = arith.constant 0 : i32
    return %arg0, %c0_i32, %c0_i32_0 : i32, i32, i32
  }
}

module attributes {stable_mosaic.version = 11 : i64} {
  func.func @kernel(%arg0: i32, %arg1: memref<64x128xf32, #tpu.memory_space<vmem>>, %arg2: memref<2x2x128xf32, #tpu.memory_space<vmem>>, %arg3: memref<1x128xf32, #tpu.memory_space<vmem>>, %arg4: memref<1x128xf32, #tpu.memory_space<vmem>>, %arg5: memref<64x128xbf16, #tpu.memory_space<vmem>>) attributes {dimension_semantics = [#tpu.dimension_semantics<parallel>], iteration_bounds = array<i64: 2>, scalar_prefetch = 0 : i64, scratch_operands = 0 : i64, tpu.core_type = #tpu.core_type<tc>, window_params = [{transform_indices = @transform_0, window_bounds = array<i64: 64, 128>}, {pipeline_mode = #tpu.pipeline_mode<synchronous>, transform_indices = @transform_1, window_bounds = array<i64: 2, 2, 128>}, {pipeline_mode = #tpu.pipeline_mode<synchronous>, transform_indices = @transform_2, window_bounds = array<i64: 1, 128>}, {pipeline_mode = #tpu.pipeline_mode<synchronous>, transform_indices = @transform_3, window_bounds = array<i64: 1, 128>}, {transform_indices = @transform_4, window_bounds = array<i64: 64, 128>}]} {
    %c0 = arith.constant 0 : index
    %c0_0 = arith.constant 0 : index
    %c0_1 = arith.constant 0 : index
    %0 = vector.load %arg2[%c0, %c0_0, %c0_1] : memref<2x2x128xf32, #tpu.memory_space<vmem>>, vector<2x2x128xf32>
    %cst = arith.constant dense<0.000000e+00> : vector<2x128xf32>
    %1 = vector.multi_reduction <add>, %0, %cst [0] : vector<2x2x128xf32> to vector<2x128xf32>
    %2 = vector.extract_strided_slice %1 {offsets = [0, 0], sizes = [1, 128], strides = [1, 1]} : vector<2x128xf32> to vector<1x128xf32>
    %cst_2 = arith.constant 7.812500e-03 : f32
    %3 = vector.broadcast %cst_2 : f32 to vector<1x128xf32>
    %4 = arith.mulf %2, %3 : vector<1x128xf32>
    %5 = vector.extract_strided_slice %1 {offsets = [1, 0], sizes = [1, 128], strides = [1, 1]} : vector<2x128xf32> to vector<1x128xf32>
    %cst_3 = arith.constant 7.812500e-03 : f32
    %6 = vector.broadcast %cst_3 : f32 to vector<1x128xf32>
    %7 = arith.mulf %5, %6 : vector<1x128xf32>
    %8 = arith.mulf %4, %4 : vector<1x128xf32>
    %9 = arith.subf %7, %8 : vector<1x128xf32>
    %cst_4 = arith.constant 9.99999974E-6 : f32
    %10 = vector.broadcast %cst_4 : f32 to vector<1x128xf32>
    %11 = arith.addf %9, %10 : vector<1x128xf32>
    %12 = math.rsqrt %11 : vector<1x128xf32>
    %c0_5 = arith.constant 0 : index
    %c0_6 = arith.constant 0 : index
    %13 = vector.load %arg3[%c0_5, %c0_6] : memref<1x128xf32, #tpu.memory_space<vmem>>, vector<1x128xf32>
    %14 = arith.mulf %12, %13 : vector<1x128xf32>
    %c0_7 = arith.constant 0 : index
    %c0_8 = arith.constant 0 : index
    %15 = vector.load %arg4[%c0_7, %c0_8] : memref<1x128xf32, #tpu.memory_space<vmem>>, vector<1x128xf32>
    %16 = arith.mulf %4, %14 : vector<1x128xf32>
    %17 = arith.subf %15, %16 : vector<1x128xf32>
    %c0_9 = arith.constant 0 : index
    %c0_10 = arith.constant 0 : index
    %18 = vector.load %arg1[%c0_9, %c0_10] : memref<64x128xf32, #tpu.memory_space<vmem>>, vector<64x128xf32>
    %19 = vector.broadcast %14 : vector<1x128xf32> to vector<64x128xf32>
    %20 = arith.mulf %18, %19 : vector<64x128xf32>
    %21 = vector.broadcast %17 : vector<1x128xf32> to vector<64x128xf32>
    %22 = arith.addf %20, %21 : vector<64x128xf32>
    %cst_11 = arith.constant 0.000000e+00 : f32
    %23 = vector.broadcast %cst_11 : f32 to vector<64x128xf32>
    %24 = arith.maximumf %22, %23 : vector<64x128xf32>
    %25 = arith.truncf %24 : vector<64x128xf32> to vector<64x128xbf16>
    %c0_12 = arith.constant 0 : index
    %c0_13 = arith.constant 0 : index
    %26 = vector.load %arg5[%c0_12, %c0_13] : memref<64x128xbf16, #tpu.memory_space<vmem>>, vector<64x128xbf16>
    tpu.vector_store %arg5[%c0_12, %c0_13], %25 {strides = array<i32>} : memref<64x128xbf16, #tpu.memory_space<vmem>>, vector<64x128xbf16>,
    return
  }
  func.func @transform_0(%arg0: i32) -> (i32, i32) {
    %c0_i32 = arith.constant 0 : i32
    %c0_i32_0 = arith.constant 0 : i32
    return %arg0, %c0_i32 : i32, i32
  }
  func.func @transform_1(%arg0: i32) -> (i32, i32, i32) {
    %c0_i32 = arith.constant 0 : i32
    %c0_i32_0 = arith.constant 0 : i32
    %c0_i32_1 = arith.constant 0 : i32
    %c0_i32_2 = arith.constant 0 : i32
    return %c0_i32, %c0_i32_0, %c0_i32_1 : i32, i32, i32
  }
  func.func @transform_2(%arg0: i32) -> (i32, i32) {
    %c0_i32 = arith.constant 0 : i32
    %c0_i32_0 = arith.constant 0 : i32
    %c0_i32_1 = arith.constant 0 : i32
    return %c0_i32, %c0_i32_0 : i32, i32
  }
  func.func @transform_3(%arg0: i32) -> (i32, i32) {
    %c0_i32 = arith.constant 0 : i32
    %c0_i32_0 = arith.constant 0 : i32
    %c0_i32_1 = arith.constant 0 : i32
    return %c0_i32, %c0_i32_0 : i32, i32
  }
  func.func @transform_4(%arg0: i32) -> (i32, i32) {
    %c0_i32 = arith.constant 0 : i32
    %c0_i32_0 = arith.constant 0 : i32
    return %arg0, %c0_i32 : i32, i32
  }
}

module attributes {stable_mosaic.version = 11 : i64} {
  func.func @kernel(%arg0: i32, %arg1: i32, %arg2: memref<1x10x10x8xbf16, #tpu.memory_space<vmem>>, %arg3: memref<9x8x128xbf16, #tpu.memory_space<vmem>>, %arg4: memref<1x128xf32, #tpu.memory_space<vmem>>, %arg5: memref<64x128xf32, #tpu.memory_space<vmem>>, %arg6: memref<1x2x128xf32, #tpu.memory_space<vmem>>) attributes {dimension_semantics = [#tpu.dimension_semantics<parallel>, #tpu.dimension_semantics<arbitrary>], iteration_bounds = array<i64: 2, 1>, scalar_prefetch = 0 : i64, scratch_operands = 0 : i64, tpu.core_type = #tpu.core_type<tc>, window_params = [{transform_indices = @transform_0, window_bounds = array<i64: 1, 10, 10, 8>}, {pipeline_mode = #tpu.pipeline_mode<synchronous>, transform_indices = @transform_1, window_bounds = array<i64: 9, 8, 128>}, {pipeline_mode = #tpu.pipeline_mode<synchronous>, transform_indices = @transform_2, window_bounds = array<i64: 1, 128>}, {transform_indices = @transform_3, window_bounds = array<i64: 64, 128>}, {transform_indices = @transform_4, window_bounds = array<i64: 1, 2, 128>}]} {
    %c8_i32 = arith.constant 8 : i32
    %0 = arith.muli %arg1, %c8_i32 : i32
    %c0_i32 = arith.constant 0 : i32
    %1 = arith.addi %0, %c0_i32 : i32
    %c0 = arith.constant 0 : index
    %2 = arith.index_cast %1 : i32 to index
    %c0_0 = arith.constant 0 : index
    %c0_1 = arith.constant 0 : index
    %3 = vector.load %arg2[%c0, %2, %c0_0, %c0_1] : memref<1x10x10x8xbf16, #tpu.memory_space<vmem>>, vector<1x8x8x8xbf16>
    %4 = vector.shape_cast %3 : vector<1x8x8x8xbf16> to vector<8x8x8xbf16>
    %5 = vector.shape_cast %4 : vector<8x8x8xbf16> to vector<64x8xbf16>
    %c0_2 = arith.constant 0 : index
    %c0_3 = arith.constant 0 : index
    %c0_4 = arith.constant 0 : index
    %6 = vector.load %arg3[%c0_2, %c0_3, %c0_4] : memref<9x8x128xbf16, #tpu.memory_space<vmem>>, vector<1x8x128xbf16>
    %7 = vector.shape_cast %6 : vector<1x8x128xbf16> to vector<8x128xbf16>
    %cst = arith.constant dense<0.000000e+00> : vector<64x128xf32>
    %8 = tpu.matmul %5, %7, %cst {dimension_numbers = #tpu.dot_dimension_numbers<[1], [0], [0], [1], [0, 0, 1, 1], [], []>} : vector<64x8xbf16>, vector<8x128xbf16>, vector<64x128xf32> -> vector<64x128xf32>
    %c0_i32_5 = arith.constant 0 : i32
    %9 = arith.addi %0, %c0_i32_5 : i32
    %c0_6 = arith.constant 0 : index
    %10 = arith.index_cast %9 : i32 to index
    %c1 = arith.constant 1 : index
    %c0_7 = arith.constant 0 : index
    %11 = vector.load %arg2[%c0_6, %10, %c1, %c0_7] : memref<1x10x10x8xbf16, #tpu.memory_space<vmem>>, vector<1x8x8x8xbf16>
    %12 = vector.shape_cast %11 : vector<1x8x8x8xbf16> to vector<8x8x8xbf16>
    %13 = vector.shape_cast %12 : vector<8x8x8xbf16> to vector<64x8xbf16>
    %c1_8 = arith.constant 1 : index
    %c0_9 = arith.constant 0 : index
    %c0_10 = arith.constant 0 : index
    %14 = vector.load %arg3[%c1_8, %c0_9, %c0_10] : memref<9x8x128xbf16, #tpu.memory_space<vmem>>, vector<1x8x128xbf16>
    %15 = vector.shape_cast %14 : vector<1x8x128xbf16> to vector<8x128xbf16>
    %cst_11 = arith.constant dense<0.000000e+00> : vector<64x128xf32>
    %16 = tpu.matmul %13, %15, %cst_11 {dimension_numbers = #tpu.dot_dimension_numbers<[1], [0], [0], [1], [0, 0, 1, 1], [], []>} : vector<64x8xbf16>, vector<8x128xbf16>, vector<64x128xf32> -> vector<64x128xf32>
    %17 = arith.addf %8, %16 : vector<64x128xf32>
    %c0_i32_12 = arith.constant 0 : i32
    %18 = arith.addi %0, %c0_i32_12 : i32
    %c0_13 = arith.constant 0 : index
    %19 = arith.index_cast %18 : i32 to index
    %c2 = arith.constant 2 : index
    %c0_14 = arith.constant 0 : index
    %20 = vector.load %arg2[%c0_13, %19, %c2, %c0_14] : memref<1x10x10x8xbf16, #tpu.memory_space<vmem>>, vector<1x8x8x8xbf16>
    %21 = vector.shape_cast %20 : vector<1x8x8x8xbf16> to vector<8x8x8xbf16>
    %22 = vector.shape_cast %21 : vector<8x8x8xbf16> to vector<64x8xbf16>
    %c2_15 = arith.constant 2 : index
    %c0_16 = arith.constant 0 : index
    %c0_17 = arith.constant 0 : index
    %23 = vector.load %arg3[%c2_15, %c0_16, %c0_17] : memref<9x8x128xbf16, #tpu.memory_space<vmem>>, vector<1x8x128xbf16>
    %24 = vector.shape_cast %23 : vector<1x8x128xbf16> to vector<8x128xbf16>
    %cst_18 = arith.constant dense<0.000000e+00> : vector<64x128xf32>
    %25 = tpu.matmul %22, %24, %cst_18 {dimension_numbers = #tpu.dot_dimension_numbers<[1], [0], [0], [1], [0, 0, 1, 1], [], []>} : vector<64x8xbf16>, vector<8x128xbf16>, vector<64x128xf32> -> vector<64x128xf32>
    %26 = arith.addf %17, %25 : vector<64x128xf32>
    %c1_i32 = arith.constant 1 : i32
    %27 = arith.addi %0, %c1_i32 : i32
    %c0_19 = arith.constant 0 : index
    %28 = arith.index_cast %27 : i32 to index
    %c0_20 = arith.constant 0 : index
    %c0_21 = arith.constant 0 : index
    %29 = vector.load %arg2[%c0_19, %28, %c0_20, %c0_21] : memref<1x10x10x8xbf16, #tpu.memory_space<vmem>>, vector<1x8x8x8xbf16>
    %30 = vector.shape_cast %29 : vector<1x8x8x8xbf16> to vector<8x8x8xbf16>
    %31 = vector.shape_cast %30 : vector<8x8x8xbf16> to vector<64x8xbf16>
    %c3 = arith.constant 3 : index
    %c0_22 = arith.constant 0 : index
    %c0_23 = arith.constant 0 : index
    %32 = vector.load %arg3[%c3, %c0_22, %c0_23] : memref<9x8x128xbf16, #tpu.memory_space<vmem>>, vector<1x8x128xbf16>
    %33 = vector.shape_cast %32 : vector<1x8x128xbf16> to vector<8x128xbf16>
    %cst_24 = arith.constant dense<0.000000e+00> : vector<64x128xf32>
    %34 = tpu.matmul %31, %33, %cst_24 {dimension_numbers = #tpu.dot_dimension_numbers<[1], [0], [0], [1], [0, 0, 1, 1], [], []>} : vector<64x8xbf16>, vector<8x128xbf16>, vector<64x128xf32> -> vector<64x128xf32>
    %35 = arith.addf %26, %34 : vector<64x128xf32>
    %c1_i32_25 = arith.constant 1 : i32
    %36 = arith.addi %0, %c1_i32_25 : i32
    %c0_26 = arith.constant 0 : index
    %37 = arith.index_cast %36 : i32 to index
    %c1_27 = arith.constant 1 : index
    %c0_28 = arith.constant 0 : index
    %38 = vector.load %arg2[%c0_26, %37, %c1_27, %c0_28] : memref<1x10x10x8xbf16, #tpu.memory_space<vmem>>, vector<1x8x8x8xbf16>
    %39 = vector.shape_cast %38 : vector<1x8x8x8xbf16> to vector<8x8x8xbf16>
    %40 = vector.shape_cast %39 : vector<8x8x8xbf16> to vector<64x8xbf16>
    %c4 = arith.constant 4 : index
    %c0_29 = arith.constant 0 : index
    %c0_30 = arith.constant 0 : index
    %41 = vector.load %arg3[%c4, %c0_29, %c0_30] : memref<9x8x128xbf16, #tpu.memory_space<vmem>>, vector<1x8x128xbf16>
    %42 = vector.shape_cast %41 : vector<1x8x128xbf16> to vector<8x128xbf16>
    %cst_31 = arith.constant dense<0.000000e+00> : vector<64x128xf32>
    %43 = tpu.matmul %40, %42, %cst_31 {dimension_numbers = #tpu.dot_dimension_numbers<[1], [0], [0], [1], [0, 0, 1, 1], [], []>} : vector<64x8xbf16>, vector<8x128xbf16>, vector<64x128xf32> -> vector<64x128xf32>
    %44 = arith.addf %35, %43 : vector<64x128xf32>
    %c1_i32_32 = arith.constant 1 : i32
    %45 = arith.addi %0, %c1_i32_32 : i32
    %c0_33 = arith.constant 0 : index
    %46 = arith.index_cast %45 : i32 to index
    %c2_34 = arith.constant 2 : index
    %c0_35 = arith.constant 0 : index
    %47 = vector.load %arg2[%c0_33, %46, %c2_34, %c0_35] : memref<1x10x10x8xbf16, #tpu.memory_space<vmem>>, vector<1x8x8x8xbf16>
    %48 = vector.shape_cast %47 : vector<1x8x8x8xbf16> to vector<8x8x8xbf16>
    %49 = vector.shape_cast %48 : vector<8x8x8xbf16> to vector<64x8xbf16>
    %c5 = arith.constant 5 : index
    %c0_36 = arith.constant 0 : index
    %c0_37 = arith.constant 0 : index
    %50 = vector.load %arg3[%c5, %c0_36, %c0_37] : memref<9x8x128xbf16, #tpu.memory_space<vmem>>, vector<1x8x128xbf16>
    %51 = vector.shape_cast %50 : vector<1x8x128xbf16> to vector<8x128xbf16>
    %cst_38 = arith.constant dense<0.000000e+00> : vector<64x128xf32>
    %52 = tpu.matmul %49, %51, %cst_38 {dimension_numbers = #tpu.dot_dimension_numbers<[1], [0], [0], [1], [0, 0, 1, 1], [], []>} : vector<64x8xbf16>, vector<8x128xbf16>, vector<64x128xf32> -> vector<64x128xf32>
    %53 = arith.addf %44, %52 : vector<64x128xf32>
    %c2_i32 = arith.constant 2 : i32
    %54 = arith.addi %0, %c2_i32 : i32
    %c0_39 = arith.constant 0 : index
    %55 = arith.index_cast %54 : i32 to index
    %c0_40 = arith.constant 0 : index
    %c0_41 = arith.constant 0 : index
    %56 = vector.load %arg2[%c0_39, %55, %c0_40, %c0_41] : memref<1x10x10x8xbf16, #tpu.memory_space<vmem>>, vector<1x8x8x8xbf16>
    %57 = vector.shape_cast %56 : vector<1x8x8x8xbf16> to vector<8x8x8xbf16>
    %58 = vector.shape_cast %57 : vector<8x8x8xbf16> to vector<64x8xbf16>
    %c6 = arith.constant 6 : index
    %c0_42 = arith.constant 0 : index
    %c0_43 = arith.constant 0 : index
    %59 = vector.load %arg3[%c6, %c0_42, %c0_43] : memref<9x8x128xbf16, #tpu.memory_space<vmem>>, vector<1x8x128xbf16>
    %60 = vector.shape_cast %59 : vector<1x8x128xbf16> to vector<8x128xbf16>
    %cst_44 = arith.constant dense<0.000000e+00> : vector<64x128xf32>
    %61 = tpu.matmul %58, %60, %cst_44 {dimension_numbers = #tpu.dot_dimension_numbers<[1], [0], [0], [1], [0, 0, 1, 1], [], []>} : vector<64x8xbf16>, vector<8x128xbf16>, vector<64x128xf32> -> vector<64x128xf32>
    %62 = arith.addf %53, %61 : vector<64x128xf32>
    %c2_i32_45 = arith.constant 2 : i32
    %63 = arith.addi %0, %c2_i32_45 : i32
    %c0_46 = arith.constant 0 : index
    %64 = arith.index_cast %63 : i32 to index
    %c1_47 = arith.constant 1 : index
    %c0_48 = arith.constant 0 : index
    %65 = vector.load %arg2[%c0_46, %64, %c1_47, %c0_48] : memref<1x10x10x8xbf16, #tpu.memory_space<vmem>>, vector<1x8x8x8xbf16>
    %66 = vector.shape_cast %65 : vector<1x8x8x8xbf16> to vector<8x8x8xbf16>
    %67 = vector.shape_cast %66 : vector<8x8x8xbf16> to vector<64x8xbf16>
    %c7 = arith.constant 7 : index
    %c0_49 = arith.constant 0 : index
    %c0_50 = arith.constant 0 : index
    %68 = vector.load %arg3[%c7, %c0_49, %c0_50] : memref<9x8x128xbf16, #tpu.memory_space<vmem>>, vector<1x8x128xbf16>
    %69 = vector.shape_cast %68 : vector<1x8x128xbf16> to vector<8x128xbf16>
    %cst_51 = arith.constant dense<0.000000e+00> : vector<64x128xf32>
    %70 = tpu.matmul %67, %69, %cst_51 {dimension_numbers = #tpu.dot_dimension_numbers<[1], [0], [0], [1], [0, 0, 1, 1], [], []>} : vector<64x8xbf16>, vector<8x128xbf16>, vector<64x128xf32> -> vector<64x128xf32>
    %71 = arith.addf %62, %70 : vector<64x128xf32>
    %c2_i32_52 = arith.constant 2 : i32
    %72 = arith.addi %0, %c2_i32_52 : i32
    %c0_53 = arith.constant 0 : index
    %73 = arith.index_cast %72 : i32 to index
    %c2_54 = arith.constant 2 : index
    %c0_55 = arith.constant 0 : index
    %74 = vector.load %arg2[%c0_53, %73, %c2_54, %c0_55] : memref<1x10x10x8xbf16, #tpu.memory_space<vmem>>, vector<1x8x8x8xbf16>
    %75 = vector.shape_cast %74 : vector<1x8x8x8xbf16> to vector<8x8x8xbf16>
    %76 = vector.shape_cast %75 : vector<8x8x8xbf16> to vector<64x8xbf16>
    %c8 = arith.constant 8 : index
    %c0_56 = arith.constant 0 : index
    %c0_57 = arith.constant 0 : index
    %77 = vector.load %arg3[%c8, %c0_56, %c0_57] : memref<9x8x128xbf16, #tpu.memory_space<vmem>>, vector<1x8x128xbf16>
    %78 = vector.shape_cast %77 : vector<1x8x128xbf16> to vector<8x128xbf16>
    %cst_58 = arith.constant dense<0.000000e+00> : vector<64x128xf32>
    %79 = tpu.matmul %76, %78, %cst_58 {dimension_numbers = #tpu.dot_dimension_numbers<[1], [0], [0], [1], [0, 0, 1, 1], [], []>} : vector<64x8xbf16>, vector<8x128xbf16>, vector<64x128xf32> -> vector<64x128xf32>
    %80 = arith.addf %71, %79 : vector<64x128xf32>
    %c0_59 = arith.constant 0 : index
    %c0_60 = arith.constant 0 : index
    %81 = vector.load %arg4[%c0_59, %c0_60] : memref<1x128xf32, #tpu.memory_space<vmem>>, vector<1x128xf32>
    %82 = vector.broadcast %81 : vector<1x128xf32> to vector<64x128xf32>
    %83 = arith.addf %80, %82 : vector<64x128xf32>
    %c0_61 = arith.constant 0 : index
    %c0_62 = arith.constant 0 : index
    %84 = vector.load %arg5[%c0_61, %c0_62] : memref<64x128xf32, #tpu.memory_space<vmem>>, vector<64x128xf32>
    tpu.vector_store %arg5[%c0_61, %c0_62], %83 {strides = array<i32>} : memref<64x128xf32, #tpu.memory_space<vmem>>, vector<64x128xf32>,
    %cst_63 = arith.constant dense<0.000000e+00> : vector<128xf32>
    %85 = vector.multi_reduction <add>, %83, %cst_63 [0] : vector<64x128xf32> to vector<128xf32>
    %86 = vector.shape_cast %85 : vector<128xf32> to vector<1x128xf32>
    %87 = arith.mulf %83, %83 : vector<64x128xf32>
    %cst_64 = arith.constant dense<0.000000e+00> : vector<128xf32>
    %88 = vector.multi_reduction <add>, %87, %cst_64 [0] : vector<64x128xf32> to vector<128xf32>
    %89 = vector.shape_cast %88 : vector<128xf32> to vector<1x128xf32>
    %c0_i32_65 = arith.constant 0 : i32
    %90 = arith.cmpi eq, %arg1, %c0_i32_65 : i32
    %91 = arith.extui %90 : i1 to i32
    %c0_i32_66 = arith.constant 0 : i32
    %92 = arith.cmpi ne, %91, %c0_i32_66 : i32
    scf.if %92 {
      %c0_69 = arith.constant 0 : index
      %c0_70 = arith.constant 0 : index
      %c0_71 = arith.constant 0 : index
      %96 = vector.load %arg6[%c0_69, %c0_70, %c0_71] : memref<1x2x128xf32, #tpu.memory_space<vmem>>, vector<1x1x128xf32>
      %97 = vector.shape_cast %96 : vector<1x1x128xf32> to vector<1x128xf32>
      %98 = vector.shape_cast %86 : vector<1x128xf32> to vector<1x1x128xf32>
      tpu.vector_store %arg6[%c0_69, %c0_70, %c0_71], %98 {strides = array<i32>} : memref<1x2x128xf32, #tpu.memory_space<vmem>>, vector<1x1x128xf32>,
      %c0_72 = arith.constant 0 : index
      %c1_73 = arith.constant 1 : index
      %c0_74 = arith.constant 0 : index
      %99 = vector.load %arg6[%c0_72, %c1_73, %c0_74] : memref<1x2x128xf32, #tpu.memory_space<vmem>>, vector<1x1x128xf32>
      %100 = vector.shape_cast %99 : vector<1x1x128xf32> to vector<1x128xf32>
      %101 = vector.shape_cast %89 : vector<1x128xf32> to vector<1x1x128xf32>
      tpu.vector_store %arg6[%c0_72, %c1_73, %c0_74], %101 {strides = array<i32>} : memref<1x2x128xf32, #tpu.memory_space<vmem>>, vector<1x1x128xf32>,
    } else {
    }
    %c0_i32_67 = arith.constant 0 : i32
    %93 = arith.cmpi ne, %arg1, %c0_i32_67 : i32
    %94 = arith.extui %93 : i1 to i32
    %c0_i32_68 = arith.constant 0 : i32
    %95 = arith.cmpi ne, %94, %c0_i32_68 : i32
    scf.if %95 {
      %c0_69 = arith.constant 0 : index
      %c0_70 = arith.constant 0 : index
      %c0_71 = arith.constant 0 : index
      %96 = vector.load %arg6[%c0_69, %c0_70, %c0_71] : memref<1x2x128xf32, #tpu.memory_space<vmem>>, vector<1x1x128xf32>
      %97 = vector.shape_cast %96 : vector<1x1x128xf32> to vector<1x128xf32>
      %98 = arith.addf %97, %86 : vector<1x128xf32>
      %c0_72 = arith.constant 0 : index
      %c0_73 = arith.constant 0 : index
      %c0_74 = arith.constant 0 : index
      %99 = vector.load %arg6[%c0_72, %c0_73, %c0_74] : memref<1x2x128xf32, #tpu.memory_space<vmem>>, vector<1x1x128xf32>
      %100 = vector.shape_cast %99 : vector<1x1x128xf32> to vector<1x128xf32>
      %101 = vector.shape_cast %98 : vector<1x128xf32> to vector<1x1x128xf32>
      tpu.vector_store %arg6[%c0_72, %c0_73, %c0_74], %101 {strides = array<i32>} : memref<1x2x128xf32, #tpu.memory_space<vmem>>, vector<1x1x128xf32>,
      %c0_75 = arith.constant 0 : index
      %c1_76 = arith.constant 1 : index
      %c0_77 = arith.constant 0 : index
      %102 = vector.load %arg6[%c0_75, %c1_76, %c0_77] : memref<1x2x128xf32, #tpu.memory_space<vmem>>, vector<1x1x128xf32>
      %103 = vector.shape_cast %102 : vector<1x1x128xf32> to vector<1x128xf32>
      %104 = arith.addf %103, %89 : vector<1x128xf32>
      %c0_78 = arith.constant 0 : index
      %c1_79 = arith.constant 1 : index
      %c0_80 = arith.constant 0 : index
      %105 = vector.load %arg6[%c0_78, %c1_79, %c0_80] : memref<1x2x128xf32, #tpu.memory_space<vmem>>, vector<1x1x128xf32>
      %106 = vector.shape_cast %105 : vector<1x1x128xf32> to vector<1x128xf32>
      %107 = vector.shape_cast %104 : vector<1x128xf32> to vector<1x1x128xf32>
      tpu.vector_store %arg6[%c0_78, %c1_79, %c0_80], %107 {strides = array<i32>} : memref<1x2x128xf32, #tpu.memory_space<vmem>>, vector<1x1x128xf32>,
    } else {
    }
    return
  }
  func.func @transform_0(%arg0: i32, %arg1: i32) -> (i32, i32, i32, i32) {
    %c0_i32 = arith.constant 0 : i32
    %c0_i32_0 = arith.constant 0 : i32
    %c0_i32_1 = arith.constant 0 : i32
    %c0_i32_2 = arith.constant 0 : i32
    return %arg0, %c0_i32, %c0_i32_0, %c0_i32_1 : i32, i32, i32, i32
  }
  func.func @transform_1(%arg0: i32, %arg1: i32) -> (i32, i32, i32) {
    %c0_i32 = arith.constant 0 : i32
    %c0_i32_0 = arith.constant 0 : i32
    %c0_i32_1 = arith.constant 0 : i32
    %c0_i32_2 = arith.constant 0 : i32
    return %c0_i32, %c0_i32_0, %c0_i32_1 : i32, i32, i32
  }
  func.func @transform_2(%arg0: i32, %arg1: i32) -> (i32, i32) {
    %c0_i32 = arith.constant 0 : i32
    %c0_i32_0 = arith.constant 0 : i32
    %c0_i32_1 = arith.constant 0 : i32
    return %c0_i32, %c0_i32_0 : i32, i32
  }
  func.func @transform_3(%arg0: i32, %arg1: i32) -> (i32, i32) {
    %c1_i32 = arith.constant 1 : i32
    %0 = arith.muli %arg0, %c1_i32 : i32
    %1 = arith.addi %0, %arg1 : i32
    %c0_i32 = arith.constant 0 : i32
    %c0_i32_0 = arith.constant 0 : i32
    return %1, %c0_i32 : i32, i32
  }
  func.func @transform_4(%arg0: i32, %arg1: i32) -> (i32, i32, i32) {
    %c0_i32 = arith.constant 0 : i32
    %c0_i32_0 = arith.constant 0 : i32
    %c0_i32_1 = arith.constant 0 : i32
    return %arg0, %c0_i32, %c0_i32_0 : i32, i32, i32
  }
}

module attributes {stable_mosaic.version = 11 : i64} {
  func.func @kernel(%arg0: i32, %arg1: memref<64x128xf32, #tpu.memory_space<vmem>>, %arg2: memref<2x2x128xf32, #tpu.memory_space<vmem>>, %arg3: memref<1x128xf32, #tpu.memory_space<vmem>>, %arg4: memref<1x128xf32, #tpu.memory_space<vmem>>, %arg5: memref<64x128xbf16, #tpu.memory_space<vmem>>, %arg6: memref<64x128xf32, #tpu.memory_space<vmem>>) attributes {dimension_semantics = [#tpu.dimension_semantics<parallel>], iteration_bounds = array<i64: 2>, scalar_prefetch = 0 : i64, scratch_operands = 0 : i64, tpu.core_type = #tpu.core_type<tc>, window_params = [{transform_indices = @transform_0, window_bounds = array<i64: 64, 128>}, {pipeline_mode = #tpu.pipeline_mode<synchronous>, transform_indices = @transform_1, window_bounds = array<i64: 2, 2, 128>}, {pipeline_mode = #tpu.pipeline_mode<synchronous>, transform_indices = @transform_2, window_bounds = array<i64: 1, 128>}, {pipeline_mode = #tpu.pipeline_mode<synchronous>, transform_indices = @transform_3, window_bounds = array<i64: 1, 128>}, {transform_indices = @transform_4, window_bounds = array<i64: 64, 128>}, {transform_indices = @transform_5, window_bounds = array<i64: 64, 128>}]} {
    %c0 = arith.constant 0 : index
    %c0_0 = arith.constant 0 : index
    %c0_1 = arith.constant 0 : index
    %0 = vector.load %arg2[%c0, %c0_0, %c0_1] : memref<2x2x128xf32, #tpu.memory_space<vmem>>, vector<2x2x128xf32>
    %cst = arith.constant dense<0.000000e+00> : vector<2x128xf32>
    %1 = vector.multi_reduction <add>, %0, %cst [0] : vector<2x2x128xf32> to vector<2x128xf32>
    %2 = vector.extract_strided_slice %1 {offsets = [0, 0], sizes = [1, 128], strides = [1, 1]} : vector<2x128xf32> to vector<1x128xf32>
    %cst_2 = arith.constant 7.812500e-03 : f32
    %3 = vector.broadcast %cst_2 : f32 to vector<1x128xf32>
    %4 = arith.mulf %2, %3 : vector<1x128xf32>
    %5 = vector.extract_strided_slice %1 {offsets = [1, 0], sizes = [1, 128], strides = [1, 1]} : vector<2x128xf32> to vector<1x128xf32>
    %cst_3 = arith.constant 7.812500e-03 : f32
    %6 = vector.broadcast %cst_3 : f32 to vector<1x128xf32>
    %7 = arith.mulf %5, %6 : vector<1x128xf32>
    %8 = arith.mulf %4, %4 : vector<1x128xf32>
    %9 = arith.subf %7, %8 : vector<1x128xf32>
    %cst_4 = arith.constant 9.99999974E-6 : f32
    %10 = vector.broadcast %cst_4 : f32 to vector<1x128xf32>
    %11 = arith.addf %9, %10 : vector<1x128xf32>
    %12 = math.rsqrt %11 : vector<1x128xf32>
    %c0_5 = arith.constant 0 : index
    %c0_6 = arith.constant 0 : index
    %13 = vector.load %arg3[%c0_5, %c0_6] : memref<1x128xf32, #tpu.memory_space<vmem>>, vector<1x128xf32>
    %14 = arith.mulf %12, %13 : vector<1x128xf32>
    %c0_7 = arith.constant 0 : index
    %c0_8 = arith.constant 0 : index
    %15 = vector.load %arg4[%c0_7, %c0_8] : memref<1x128xf32, #tpu.memory_space<vmem>>, vector<1x128xf32>
    %16 = arith.mulf %4, %14 : vector<1x128xf32>
    %17 = arith.subf %15, %16 : vector<1x128xf32>
    %c0_9 = arith.constant 0 : index
    %c0_10 = arith.constant 0 : index
    %18 = vector.load %arg1[%c0_9, %c0_10] : memref<64x128xf32, #tpu.memory_space<vmem>>, vector<64x128xf32>
    %19 = vector.broadcast %14 : vector<1x128xf32> to vector<64x128xf32>
    %20 = arith.mulf %18, %19 : vector<64x128xf32>
    %21 = vector.broadcast %17 : vector<1x128xf32> to vector<64x128xf32>
    %22 = arith.addf %20, %21 : vector<64x128xf32>
    %cst_11 = arith.constant 0.000000e+00 : f32
    %23 = vector.broadcast %cst_11 : f32 to vector<64x128xf32>
    %24 = arith.maximumf %22, %23 : vector<64x128xf32>
    %c0_12 = arith.constant 0 : index
    %c0_13 = arith.constant 0 : index
    %25 = vector.load %arg5[%c0_12, %c0_13] : memref<64x128xbf16, #tpu.memory_space<vmem>>, vector<64x128xbf16>
    %26 = arith.extf %25 : vector<64x128xbf16> to vector<64x128xf32>
    %27 = arith.addf %24, %26 : vector<64x128xf32>
    %cst_14 = arith.constant 0.000000e+00 : f32
    %28 = vector.broadcast %cst_14 : f32 to vector<64x128xf32>
    %29 = arith.maximumf %27, %28 : vector<64x128xf32>
    %c0_15 = arith.constant 0 : index
    %c0_16 = arith.constant 0 : index
    %30 = vector.load %arg6[%c0_15, %c0_16] : memref<64x128xf32, #tpu.memory_space<vmem>>, vector<64x128xf32>
    tpu.vector_store %arg6[%c0_15, %c0_16], %29 {strides = array<i32>} : memref<64x128xf32, #tpu.memory_space<vmem>>, vector<64x128xf32>,
    return
  }
  func.func @transform_0(%arg0: i32) -> (i32, i32) {
    %c0_i32 = arith.constant 0 : i32
    %c0_i32_0 = arith.constant 0 : i32
    return %arg0, %c0_i32 : i32, i32
  }
  func.func @transform_1(%arg0: i32) -> (i32, i32, i32) {
    %c0_i32 = arith.constant 0 : i32
    %c0_i32_0 = arith.constant 0 : i32
    %c0_i32_1 = arith.constant 0 : i32
    %c0_i32_2 = arith.constant 0 : i32
    return %c0_i32, %c0_i32_0, %c0_i32_1 : i32, i32, i32
  }
  func.func @transform_2(%arg0: i32) -> (i32, i32) {
    %c0_i32 = arith.constant 0 : i32
    %c0_i32_0 = arith.constant 0 : i32
    %c0_i32_1 = arith.constant 0 : i32
    return %c0_i32, %c0_i32_0 : i32, i32
  }
  func.func @transform_3(%arg0: i32) -> (i32, i32) {
    %c0_i32 = arith.constant 0 : i32
    %c0_i32_0 = arith.constant 0 : i32
    %c0_i32_1 = arith.constant 0 : i32
    return %c0_i32, %c0_i32_0 : i32, i32
  }
  func.func @transform_4(%arg0: i32) -> (i32, i32) {
    %c0_i32 = arith.constant 0 : i32
    %c0_i32_0 = arith.constant 0 : i32
    return %arg0, %c0_i32 : i32, i32
  }
  func.func @transform_5(%arg0: i32) -> (i32, i32) {
    %c0_i32 = arith.constant 0 : i32
    %c0_i32_0 = arith.constant 0 : i32
    return %arg0, %c0_i32 : i32, i32
  }
}

module attributes {stable_mosaic.version = 11 : i64} {
  func.func @kernel(%arg0: i32, %arg1: memref<64x128xf32, #tpu.memory_space<vmem>>, %arg2: memref<2x2x128xf32, #tpu.memory_space<vmem>>, %arg3: memref<1x128xf32, #tpu.memory_space<vmem>>, %arg4: memref<1x128xf32, #tpu.memory_space<vmem>>, %arg5: memref<64x128xbf16, #tpu.memory_space<vmem>>) attributes {dimension_semantics = [#tpu.dimension_semantics<parallel>], iteration_bounds = array<i64: 2>, scalar_prefetch = 0 : i64, scratch_operands = 0 : i64, tpu.core_type = #tpu.core_type<tc>, window_params = [{transform_indices = @transform_0, window_bounds = array<i64: 64, 128>}, {pipeline_mode = #tpu.pipeline_mode<synchronous>, transform_indices = @transform_1, window_bounds = array<i64: 2, 2, 128>}, {pipeline_mode = #tpu.pipeline_mode<synchronous>, transform_indices = @transform_2, window_bounds = array<i64: 1, 128>}, {pipeline_mode = #tpu.pipeline_mode<synchronous>, transform_indices = @transform_3, window_bounds = array<i64: 1, 128>}, {transform_indices = @transform_4, window_bounds = array<i64: 64, 128>}]} {
    %c0 = arith.constant 0 : index
    %c0_0 = arith.constant 0 : index
    %c0_1 = arith.constant 0 : index
    %0 = vector.load %arg2[%c0, %c0_0, %c0_1] : memref<2x2x128xf32, #tpu.memory_space<vmem>>, vector<2x2x128xf32>
    %cst = arith.constant dense<0.000000e+00> : vector<2x128xf32>
    %1 = vector.multi_reduction <add>, %0, %cst [0] : vector<2x2x128xf32> to vector<2x128xf32>
    %2 = vector.extract_strided_slice %1 {offsets = [0, 0], sizes = [1, 128], strides = [1, 1]} : vector<2x128xf32> to vector<1x128xf32>
    %cst_2 = arith.constant 7.812500e-03 : f32
    %3 = vector.broadcast %cst_2 : f32 to vector<1x128xf32>
    %4 = arith.mulf %2, %3 : vector<1x128xf32>
    %5 = vector.extract_strided_slice %1 {offsets = [1, 0], sizes = [1, 128], strides = [1, 1]} : vector<2x128xf32> to vector<1x128xf32>
    %cst_3 = arith.constant 7.812500e-03 : f32
    %6 = vector.broadcast %cst_3 : f32 to vector<1x128xf32>
    %7 = arith.mulf %5, %6 : vector<1x128xf32>
    %8 = arith.mulf %4, %4 : vector<1x128xf32>
    %9 = arith.subf %7, %8 : vector<1x128xf32>
    %cst_4 = arith.constant 9.99999974E-6 : f32
    %10 = vector.broadcast %cst_4 : f32 to vector<1x128xf32>
    %11 = arith.addf %9, %10 : vector<1x128xf32>
    %12 = math.rsqrt %11 : vector<1x128xf32>
    %c0_5 = arith.constant 0 : index
    %c0_6 = arith.constant 0 : index
    %13 = vector.load %arg3[%c0_5, %c0_6] : memref<1x128xf32, #tpu.memory_space<vmem>>, vector<1x128xf32>
    %14 = arith.mulf %12, %13 : vector<1x128xf32>
    %c0_7 = arith.constant 0 : index
    %c0_8 = arith.constant 0 : index
    %15 = vector.load %arg4[%c0_7, %c0_8] : memref<1x128xf32, #tpu.memory_space<vmem>>, vector<1x128xf32>
    %16 = arith.mulf %4, %14 : vector<1x128xf32>
    %17 = arith.subf %15, %16 : vector<1x128xf32>
    %c0_9 = arith.constant 0 : index
    %c0_10 = arith.constant 0 : index
    %18 = vector.load %arg1[%c0_9, %c0_10] : memref<64x128xf32, #tpu.memory_space<vmem>>, vector<64x128xf32>
    %19 = vector.broadcast %14 : vector<1x128xf32> to vector<64x128xf32>
    %20 = arith.mulf %18, %19 : vector<64x128xf32>
    %21 = vector.broadcast %17 : vector<1x128xf32> to vector<64x128xf32>
    %22 = arith.addf %20, %21 : vector<64x128xf32>
    %23 = arith.truncf %22 : vector<64x128xf32> to vector<64x128xbf16>
    %c0_11 = arith.constant 0 : index
    %c0_12 = arith.constant 0 : index
    %24 = vector.load %arg5[%c0_11, %c0_12] : memref<64x128xbf16, #tpu.memory_space<vmem>>, vector<64x128xbf16>
    tpu.vector_store %arg5[%c0_11, %c0_12], %23 {strides = array<i32>} : memref<64x128xbf16, #tpu.memory_space<vmem>>, vector<64x128xbf16>,
    return
  }
  func.func @transform_0(%arg0: i32) -> (i32, i32) {
    %c0_i32 = arith.constant 0 : i32
    %c0_i32_0 = arith.constant 0 : i32
    return %arg0, %c0_i32 : i32, i32
  }
  func.func @transform_1(%arg0: i32) -> (i32, i32, i32) {
    %c0_i32 = arith.constant 0 : i32
    %c0_i32_0 = arith.constant 0 : i32
    %c0_i32_1 = arith.constant 0 : i32
    %c0_i32_2 = arith.constant 0 : i32
    return %c0_i32, %c0_i32_0, %c0_i32_1 : i32, i32, i32
  }
  func.func @transform_2(%arg0: i32) -> (i32, i32) {
    %c0_i32 = arith.constant 0 : i32
    %c0_i32_0 = arith.constant 0 : i32
    %c0_i32_1 = arith.constant 0 : i32
    return %c0_i32, %c0_i32_0 : i32, i32
  }
  func.func @transform_3(%arg0: i32) -> (i32, i32) {
    %c0_i32 = arith.constant 0 : i32
    %c0_i32_0 = arith.constant 0 : i32
    %c0_i32_1 = arith.constant 0 : i32
    return %c0_i32, %c0_i32_0 : i32, i32
  }
  func.func @transform_4(%arg0: i32) -> (i32, i32) {
    %c0_i32 = arith.constant 0 : i32
    %c0_i32_0 = arith.constant 0 : i32
    return %arg0, %c0_i32 : i32, i32
  }
}

module attributes {stable_mosaic.version = 11 : i64} {
  func.func @kernel(%arg0: i32, %arg1: i32, %arg2: memref<1x8x8x16xbf16, #tpu.memory_space<vmem>>, %arg3: memref<1x4x128xbf16, #tpu.memory_space<vmem>>, %arg4: memref<1x128xf32, #tpu.memory_space<vmem>>, %arg5: memref<64x128xf32, #tpu.memory_space<vmem>>, %arg6: memref<1x2x128xf32, #tpu.memory_space<vmem>>) attributes {dimension_semantics = [#tpu.dimension_semantics<parallel>, #tpu.dimension_semantics<arbitrary>], iteration_bounds = array<i64: 2, 1>, scalar_prefetch = 0 : i64, scratch_operands = 0 : i64, tpu.core_type = #tpu.core_type<tc>, window_params = [{transform_indices = @transform_0, window_bounds = array<i64: 1, 8, 8, 16>}, {pipeline_mode = #tpu.pipeline_mode<synchronous>, transform_indices = @transform_1, window_bounds = array<i64: 1, 4, 128>}, {pipeline_mode = #tpu.pipeline_mode<synchronous>, transform_indices = @transform_2, window_bounds = array<i64: 1, 128>}, {transform_indices = @transform_3, window_bounds = array<i64: 64, 128>}, {transform_indices = @transform_4, window_bounds = array<i64: 1, 2, 128>}]} {
    %c8_i32 = arith.constant 8 : i32
    %0 = arith.muli %arg1, %c8_i32 : i32
    %c0_i32 = arith.constant 0 : i32
    %1 = arith.addi %0, %c0_i32 : i32
    %c0 = arith.constant 0 : index
    %2 = arith.index_cast %1 : i32 to index
    %c0_0 = arith.constant 0 : index
    %c0_1 = arith.constant 0 : index
    %3 = vector.load %arg2[%c0, %2, %c0_0, %c0_1] : memref<1x8x8x16xbf16, #tpu.memory_space<vmem>>, vector<1x8x8x4xbf16>
    %4 = vector.shape_cast %3 : vector<1x8x8x4xbf16> to vector<8x8x4xbf16>
    %5 = vector.shape_cast %4 : vector<8x8x4xbf16> to vector<64x4xbf16>
    %c0_2 = arith.constant 0 : index
    %c0_3 = arith.constant 0 : index
    %c0_4 = arith.constant 0 : index
    %6 = vector.load %arg3[%c0_2, %c0_3, %c0_4] : memref<1x4x128xbf16, #tpu.memory_space<vmem>>, vector<1x4x128xbf16>
    %7 = vector.shape_cast %6 : vector<1x4x128xbf16> to vector<4x128xbf16>
    %cst = arith.constant dense<0.000000e+00> : vector<64x128xf32>
    %8 = tpu.matmul %5, %7, %cst {dimension_numbers = #tpu.dot_dimension_numbers<[1], [0], [0], [1], [0, 0, 1, 1], [], []>} : vector<64x4xbf16>, vector<4x128xbf16>, vector<64x128xf32> -> vector<64x128xf32>
    %c0_5 = arith.constant 0 : index
    %c0_6 = arith.constant 0 : index
    %9 = vector.load %arg4[%c0_5, %c0_6] : memref<1x128xf32, #tpu.memory_space<vmem>>, vector<1x128xf32>
    %10 = vector.broadcast %9 : vector<1x128xf32> to vector<64x128xf32>
    %11 = arith.addf %8, %10 : vector<64x128xf32>
    %c0_7 = arith.constant 0 : index
    %c0_8 = arith.constant 0 : index
    %12 = vector.load %arg5[%c0_7, %c0_8] : memref<64x128xf32, #tpu.memory_space<vmem>>, vector<64x128xf32>
    tpu.vector_store %arg5[%c0_7, %c0_8], %11 {strides = array<i32>} : memref<64x128xf32, #tpu.memory_space<vmem>>, vector<64x128xf32>,
    %cst_9 = arith.constant dense<0.000000e+00> : vector<128xf32>
    %13 = vector.multi_reduction <add>, %11, %cst_9 [0] : vector<64x128xf32> to vector<128xf32>
    %14 = vector.shape_cast %13 : vector<128xf32> to vector<1x128xf32>
    %15 = arith.mulf %11, %11 : vector<64x128xf32>
    %cst_10 = arith.constant dense<0.000000e+00> : vector<128xf32>
    %16 = vector.multi_reduction <add>, %15, %cst_10 [0] : vector<64x128xf32> to vector<128xf32>
    %17 = vector.shape_cast %16 : vector<128xf32> to vector<1x128xf32>
    %c0_i32_11 = arith.constant 0 : i32
    %18 = arith.cmpi eq, %arg1, %c0_i32_11 : i32
    %19 = arith.extui %18 : i1 to i32
    %c0_i32_12 = arith.constant 0 : i32
    %20 = arith.cmpi ne, %19, %c0_i32_12 : i32
    scf.if %20 {
      %c0_15 = arith.constant 0 : index
      %c0_16 = arith.constant 0 : index
      %c0_17 = arith.constant 0 : index
      %24 = vector.load %arg6[%c0_15, %c0_16, %c0_17] : memref<1x2x128xf32, #tpu.memory_space<vmem>>, vector<1x1x128xf32>
      %25 = vector.shape_cast %24 : vector<1x1x128xf32> to vector<1x128xf32>
      %26 = vector.shape_cast %14 : vector<1x128xf32> to vector<1x1x128xf32>
      tpu.vector_store %arg6[%c0_15, %c0_16, %c0_17], %26 {strides = array<i32>} : memref<1x2x128xf32, #tpu.memory_space<vmem>>, vector<1x1x128xf32>,
      %c0_18 = arith.constant 0 : index
      %c1 = arith.constant 1 : index
      %c0_19 = arith.constant 0 : index
      %27 = vector.load %arg6[%c0_18, %c1, %c0_19] : memref<1x2x128xf32, #tpu.memory_space<vmem>>, vector<1x1x128xf32>
      %28 = vector.shape_cast %27 : vector<1x1x128xf32> to vector<1x128xf32>
      %29 = vector.shape_cast %17 : vector<1x128xf32> to vector<1x1x128xf32>
      tpu.vector_store %arg6[%c0_18, %c1, %c0_19], %29 {strides = array<i32>} : memref<1x2x128xf32, #tpu.memory_space<vmem>>, vector<1x1x128xf32>,
    } else {
    }
    %c0_i32_13 = arith.constant 0 : i32
    %21 = arith.cmpi ne, %arg1, %c0_i32_13 : i32
    %22 = arith.extui %21 : i1 to i32
    %c0_i32_14 = arith.constant 0 : i32
    %23 = arith.cmpi ne, %22, %c0_i32_14 : i32
    scf.if %23 {
      %c0_15 = arith.constant 0 : index
      %c0_16 = arith.constant 0 : index
      %c0_17 = arith.constant 0 : index
      %24 = vector.load %arg6[%c0_15, %c0_16, %c0_17] : memref<1x2x128xf32, #tpu.memory_space<vmem>>, vector<1x1x128xf32>
      %25 = vector.shape_cast %24 : vector<1x1x128xf32> to vector<1x128xf32>
      %26 = arith.addf %25, %14 : vector<1x128xf32>
      %c0_18 = arith.constant 0 : index
      %c0_19 = arith.constant 0 : index
      %c0_20 = arith.constant 0 : index
      %27 = vector.load %arg6[%c0_18, %c0_19, %c0_20] : memref<1x2x128xf32, #tpu.memory_space<vmem>>, vector<1x1x128xf32>
      %28 = vector.shape_cast %27 : vector<1x1x128xf32> to vector<1x128xf32>
      %29 = vector.shape_cast %26 : vector<1x128xf32> to vector<1x1x128xf32>
      tpu.vector_store %arg6[%c0_18, %c0_19, %c0_20], %29 {strides = array<i32>} : memref<1x2x128xf32, #tpu.memory_space<vmem>>, vector<1x1x128xf32>,
      %c0_21 = arith.constant 0 : index
      %c1 = arith.constant 1 : index
      %c0_22 = arith.constant 0 : index
      %30 = vector.load %arg6[%c0_21, %c1, %c0_22] : memref<1x2x128xf32, #tpu.memory_space<vmem>>, vector<1x1x128xf32>
      %31 = vector.shape_cast %30 : vector<1x1x128xf32> to vector<1x128xf32>
      %32 = arith.addf %31, %17 : vector<1x128xf32>
      %c0_23 = arith.constant 0 : index
      %c1_24 = arith.constant 1 : index
      %c0_25 = arith.constant 0 : index
      %33 = vector.load %arg6[%c0_23, %c1_24, %c0_25] : memref<1x2x128xf32, #tpu.memory_space<vmem>>, vector<1x1x128xf32>
      %34 = vector.shape_cast %33 : vector<1x1x128xf32> to vector<1x128xf32>
      %35 = vector.shape_cast %32 : vector<1x128xf32> to vector<1x1x128xf32>
      tpu.vector_store %arg6[%c0_23, %c1_24, %c0_25], %35 {strides = array<i32>} : memref<1x2x128xf32, #tpu.memory_space<vmem>>, vector<1x1x128xf32>,
    } else {
    }
    return
  }
  func.func @transform_0(%arg0: i32, %arg1: i32) -> (i32, i32, i32, i32) {
    %c0_i32 = arith.constant 0 : i32
    %c0_i32_0 = arith.constant 0 : i32
    %c0_i32_1 = arith.constant 0 : i32
    %c0_i32_2 = arith.constant 0 : i32
    return %arg0, %c0_i32, %c0_i32_0, %c0_i32_1 : i32, i32, i32, i32
  }
  func.func @transform_1(%arg0: i32, %arg1: i32) -> (i32, i32, i32) {
    %c0_i32 = arith.constant 0 : i32
    %c0_i32_0 = arith.constant 0 : i32
    %c0_i32_1 = arith.constant 0 : i32
    %c0_i32_2 = arith.constant 0 : i32
    return %c0_i32, %c0_i32_0, %c0_i32_1 : i32, i32, i32
  }
  func.func @transform_2(%arg0: i32, %arg1: i32) -> (i32, i32) {
    %c0_i32 = arith.constant 0 : i32
    %c0_i32_0 = arith.constant 0 : i32
    %c0_i32_1 = arith.constant 0 : i32
    return %c0_i32, %c0_i32_0 : i32, i32
  }
  func.func @transform_3(%arg0: i32, %arg1: i32) -> (i32, i32) {
    %c1_i32 = arith.constant 1 : i32
    %0 = arith.muli %arg0, %c1_i32 : i32
    %1 = arith.addi %0, %arg1 : i32
    %c0_i32 = arith.constant 0 : i32
    %c0_i32_0 = arith.constant 0 : i32
    return %1, %c0_i32 : i32, i32
  }
  func.func @transform_4(%arg0: i32, %arg1: i32) -> (i32, i32, i32) {
    %c0_i32 = arith.constant 0 : i32
    %c0_i32_0 = arith.constant 0 : i32
    %c0_i32_1 = arith.constant 0 : i32
    return %arg0, %c0_i32, %c0_i32_0 : i32, i32, i32
  }
}

</mosaic_0001>

<llo_original>
// kernel: resblock_forward.9
$region0: #{resblock_forward.9}
  #allocation0 [shape = 'u32[]', space=smem, size = 0x4, offset = 0x4, fixed_abs, tag = 'smem constant byte address 0x4 - core index']
  #allocation1 [shape = 'u32[144,128]{1,0:T(1,128)}', space=vmem, size = 0x12000, scoped, tag = 'internal scratch']
  %s0 = inlined_call_operand.vmem [shape: f32[128,128], index: 0, kind: input, shape index: {}]
  %s1 = inlined_call_operand.vmem [shape: f32[2,2,128], index: 1, kind: input, shape index: {}]
  %s2 = inlined_call_operand.vmem [shape: f32[1,128], index: 2, kind: input, shape index: {}]
  %s3 = inlined_call_operand.vmem [shape: f32[1,128], index: 3, kind: input, shape index: {}]
  %s4 = inlined_call_operand.vmem [shape: bf16[128,128], index: 4, kind: output, shape index: {}]
  %s5 = sld [smem:[#allocation0]]
  $region49: #{resblock_forward.9} parent=0
    _
  %s7 = ssub.s32 1, %s5
  %s8 = scalar_select 0, %s7, %s5
  loop: start=0, step=1, limit=4
  $region2: #{resblock_forward.9} parent=0 // loop_pre_header
    _
  $region3: #{resblock_forward.9} parent=0 // loop_header
    %s10 = sphi 0, %s14
    %p11 = scmp.ge.s32.totalorder %s10, 4
    %s20 = sphi 0, %s22
    %s23 = sphi 0, %s20
    %s24 = sphi 0, %s23
    %s40 = sphi 0, %s24
    %s44 = sphi 0, %s44
    %s46 = sphi 0, %s44
    %s47 = sphi 0, %s46
    %s61 = sphi 0, %s47
    %s65 = sphi 0, %s65
    %s67 = sphi 0, %s65
    %s68 = sphi 0, %s67
    %s82 = sphi 0, %s68
    %s86 = sphi 0, %s86
    %s88 = sphi 0, %s86
    %s89 = sphi 0, %s88
    %s103 = sphi 0, %s89
    %s109 = sphi 0, %s111
    %s112 = sphi 0, %s109
    %s113 = sphi 0, %s112
    %s129 = sphi 0, %s113
  $region4: #{resblock_forward.9} parent=0 // loop_header_branch
    %13 = sbr.rel (%p11) target = $region8
  $region5: #{resblock_forward.9} parent=0 // loop_body
    %s15 = ssub.s32 %s10, 1
    %s16 = ssub.s32 %s10, 2
    %s17 = sadd.s32 %s10, 1
    %s18 = ssub.s32 %s10, %s17
    %p19 = scmp.eq.s32.totalorder %s18, 0
    %s21 = sadd.s32 %s20, 1
    %s22 = scalar_select %p19, %s20, %s21
    %p25 = pneg %p19
    %p26 = scmp.eq.s32.totalorder %s10, 1
    %p27 = por %p25, %p26
    %p28 = scmp.ne.s32.totalorder %s20, %s23
    %p29 = scmp.eq.s32.totalorder %s10, 0
    %p30 = por %p28, %p29
    %p31 = scmp.ne.s32.totalorder %s20, %s23
    %p32 = scmp.eq.s32.totalorder %s15, 1
    %p33 = por %p31, %p32
    %p34 = scmp.ne.s32.totalorder %s23, %s24
    %p35 = scmp.eq.s32.totalorder %s15, 0
    %p36 = por %p34, %p35
    %p37 = scmp.ne.s32.totalorder %s23, %s24
    %p38 = scmp.eq.s32.totalorder %s16, 1
    %p39 = por %p37, %p38
    %p41 = scmp.ne.s32.totalorder %s24, %s40
    %p42 = scmp.eq.s32.totalorder %s16, 0
    %p43 = por %p41, %p42
    %s45 = sadd.s32 %s44, 1
    %p48 = scmp.eq.s32.totalorder %s10, 1
    %p49 = scmp.ne.s32.totalorder %s44, %s46
    %p50 = scmp.eq.s32.totalorder %s10, 0
    %p51 = por %p49, %p50
    %p52 = scmp.ne.s32.totalorder %s44, %s46
    %p53 = scmp.eq.s32.totalorder %s15, 1
    %p54 = por %p52, %p53
    %p55 = scmp.ne.s32.totalorder %s46, %s47
    %p56 = scmp.eq.s32.totalorder %s15, 0
    %p57 = por %p55, %p56
    %p58 = scmp.ne.s32.totalorder %s46, %s47
    %p59 = scmp.eq.s32.totalorder %s16, 1
    %p60 = por %p58, %p59
    %p62 = scmp.ne.s32.totalorder %s47, %s61
    %p63 = scmp.eq.s32.totalorder %s16, 0
    %p64 = por %p62, %p63
    %s66 = sadd.s32 %s65, 1
    %p69 = scmp.eq.s32.totalorder %s10, 1
    %p70 = scmp.ne.s32.totalorder %s65, %s67
    %p71 = scmp.eq.s32.totalorder %s10, 0
    %p72 = por %p70, %p71
    %p73 = scmp.ne.s32.totalorder %s65, %s67
    %p74 = scmp.eq.s32.totalorder %s15, 1
    %p75 = por %p73, %p74
    %p76 = scmp.ne.s32.totalorder %s67, %s68
    %p77 = scmp.eq.s32.totalorder %s15, 0
    %p78 = por %p76, %p77
    %p79 = scmp.ne.s32.totalorder %s67, %s68
    %p80 = scmp.eq.s32.totalorder %s16, 1
    %p81 = por %p79, %p80
    %p83 = scmp.ne.s32.totalorder %s68, %s82
    %p84 = scmp.eq.s32.totalorder %s16, 0
    %p85 = por %p83, %p84
    %s87 = sadd.s32 %s86, 1
    %p90 = scmp.eq.s32.totalorder %s10, 1
    %p91 = scmp.ne.s32.totalorder %s86, %s88
    %p92 = scmp.eq.s32.totalorder %s10, 0
    %p93 = por %p91, %p92
    %p94 = scmp.ne.s32.totalorder %s86, %s88
    %p95 = scmp.eq.s32.totalorder %s15, 1
    %p96 = por %p94, %p95
    %p97 = scmp.ne.s32.totalorder %s88, %s89
    %p98 = scmp.eq.s32.totalorder %s15, 0
    %p99 = por %p97, %p98
    %p100 = scmp.ne.s32.totalorder %s88, %s89
    %p101 = scmp.eq.s32.totalorder %s16, 1
    %p102 = por %p100, %p101
    %p104 = scmp.ne.s32.totalorder %s89, %s103
    %p105 = scmp.eq.s32.totalorder %s16, 0
    %p106 = por %p104, %p105
    %s107 = ssub.s32 %s10, %s17
    %p108 = scmp.eq.s32.totalorder %s107, 0
    %s110 = sadd.s32 %s109, 1
    %s111 = scalar_select %p108, %s109, %s110
    %p114 = pneg %p108
    %p115 = scmp.eq.s32.totalorder %s10, 1
    %p116 = por %p114, %p115
    %p117 = scmp.ne.s32.totalorder %s109, %s112
    %p118 = scmp.eq.s32.totalorder %s10, 0
    %p119 = por %p117, %p118
    %p120 = scmp.ne.s32.totalorder %s109, %s112
    %p121 = scmp.eq.s32.totalorder %s15, 1
    %p122 = por %p120, %p121
    %p123 = scmp.ne.s32.totalorder %s112, %s113
    %p124 = scmp.eq.s32.totalorder %s15, 0
    %p125 = por %p123, %p124
    %p126 = scmp.ne.s32.totalorder %s112, %s113
    %p127 = scmp.eq.s32.totalorder %s16, 1
    %p128 = por %p126, %p127
    %p130 = scmp.ne.s32.totalorder %s113, %s129
    %p131 = scmp.eq.s32.totalorder %s16, 0
    %p132 = por %p130, %p131
    %p133 = scmp.le.s32.totalorder 1, %s10
    %p134 = scmp.lt.s32.totalorder %s10, 3
    %p135 = pnand %p133, %p134
    %p136 = pneg %p135
    // Predicated region
    $region9: #{resblock_forward.9} parent=5 // pred_check
      _
    $region10: #{resblock_forward.9} parent=5 // pred_check_branch
      %138 = sbr.rel (%p135) target = $region12
    $region11: #{resblock_forward.9} parent=5 // pred_region
      %s139 = ssub.s32 %s10, 1
      // Predicated region
      $region13: #{resblock_forward.9} parent=11 // pred_check
        %p140 = pneg %p57
      $region14: #{resblock_forward.9} parent=11 // pred_check_branch
        %142 = sbr.rel (%p140) target = $region16
      $region15: #{resblock_forward.9} parent=11 // pred_region
        _
      $region16: #{resblock_forward.9} parent=11 // pred_fallthru
        _
      // Predicated region
      $region17: #{resblock_forward.9} parent=11 // pred_check
        %p143 = pneg %p78
      $region18: #{resblock_forward.9} parent=11 // pred_check_branch
        %145 = sbr.rel (%p143) target = $region20
      $region19: #{resblock_forward.9} parent=11 // pred_region
        _
      $region20: #{resblock_forward.9} parent=11 // pred_fallthru
        _
      // Predicated region
      $region21: #{resblock_forward.9} parent=11 // pred_check
        %p146 = pneg %p99
      $region22: #{resblock_forward.9} parent=11 // pred_check_branch
        %148 = sbr.rel (%p146) target = $region24
      $region23: #{resblock_forward.9} parent=11 // pred_region
        _
      $region24: #{resblock_forward.9} parent=11 // pred_fallthru
        _
    $region12: #{resblock_forward.9} parent=5 // pred_fallthru
      _
    %p149 = scmp.lt.s32.totalorder %s10, 2
    // Predicated region
    $region25: #{resblock_forward.9} parent=5 // pred_check
      %p150 = pneg %p149
    $region26: #{resblock_forward.9} parent=5 // pred_check_branch
      %152 = sbr.rel (%p150) target = $region28
    $region27: #{resblock_forward.9} parent=5 // pred_region
      // Predicated region
      $region29: #{resblock_forward.9} parent=27 // pred_check
        %p153 = pneg %p30
      $region30: #{resblock_forward.9} parent=27 // pred_check_branch
        %155 = sbr.rel (%p153) target = $region32
      $region31: #{resblock_forward.9} parent=27 // pred_region
        %s156 = smul.u32 8, %s10
        %p157 = scmp.lt.s32.totalorder %s156, 15
        %s158 = scalar_select %p157, %s156, 15
        %s159 = smul.addr %s158, 8
        %s160 = scalar_lea.vmem %s0, %s159
        %s161 = smul.u32 8, %s10
      $region32: #{resblock_forward.9} parent=27 // pred_fallthru
        _
    $region28: #{resblock_forward.9} parent=5 // pred_fallthru
      _
    %p162 = scmp.le.s32.totalorder 1, %s10
    %p163 = scmp.lt.s32.totalorder %s10, 3
    %p164 = pnand %p162, %p163
    %p165 = pneg %p164
    // Predicated region
    $region33: #{resblock_forward.9} parent=5 // pred_check
      _
    $region34: #{resblock_forward.9} parent=5 // pred_check_branch
      %167 = sbr.rel (%p164) target = $region36
    $region35: #{resblock_forward.9} parent=5 // pred_region
      %s168 = ssub.s32 %s10, 1
      %s169 = smul.u32 8, %s15
      %p170 = scmp.lt.s32.totalorder %s169, 15
      %s171 = scalar_select %p170, %s169, 15
      %s172 = smul.addr %s171, 8
      %s173 = scalar_lea.vmem %s0, %s172
      %p174 = pneg %p36
      %p175 = pneg %p33
      %p176 = pneg %p57
      %p177 = pneg %p54
      %p178 = pneg %p78
      %p179 = pneg %p75
      %p180 = pneg %p99
      %p181 = pneg %p96
      %p182 = pneg %p125
      %p183 = pneg %p122
      %s184 = smul.u32 8, %s15
      %p185 = scmp.lt.s32.totalorder %s184, 15
      %s186 = scalar_select %p185, %s184, 15
      %s187 = smul.addr %s186, 4
      %s188 = scalar_lea.vmem %s4, %s187
      %s189 = smul.u32 8, %s15
      %p190 = scmp.lt.s32.totalorder %s189, 15
      %s191 = scalar_select %p190, %s189, 15
      %s192 = smul.addr %s191, 8
      %s193 = scalar_lea.vmem %s0, %s192
      %s194 = smul.u32 8, %s15
      %s195 = smul.u32 8, %s15
      %p196 = scmp.lt.s32.totalorder %s195, 15
      %s197 = scalar_select %p196, %s195, 15
      %s198 = smul.addr %s197, 4
      %s199 = scalar_lea.vmem %s4, %s198
      %s200 = smul.u32 8, %s15
      %v201 = vld [vmem:[%s1] sm:$0x3]
      %v202 = vld [vmem:[%s1 + $0x2] sm:$0x3]
      %vm203 = vcmask 1041408
      %v204 = vsel %vm203, %v201, 0.0
      %v205 = vsel %vm203, %v202, 0.0
      %v206 = vadd.f32 %v204, %v205
      %v207 = vmul.f32 %v206, 0.0078125
      %v208 = vmul.f32 %v207, %v207
      %v210 = vrot.slane %v208, 7
      %v212 = vsub.f32 %v207, %v210
      %v213 = vadd.f32 %v212, 1e-05
      %v214 = vrsqrt.pop %v213
      %v215 = vld [vmem:[%s2] sm:$0x1]
      %v217 = vlaneseq
      %v218 = vshrl.u32 %v217, 7
      %v219 = vsub.s32 0, %v218
      %v220 = vrot.slane %v215, %v219
      %v222 = vmul.f32 %v214, %v220
      %v223 = vld [vmem:[%s3] sm:$0x1]
      %v225 = vrot.slane %v222, 1
      %v227 = vmul.f32 %v207, %v225
      %v228 = vsub.f32 %v223, %v227
      %v229 = vld [vmem:[%s193] sm:$0xff]
      %v230 = vld [vmem:[%s193 + $0x8] sm:$0xff]
      %v231 = vld [vmem:[%s193 + $0x10] sm:$0xff]
      %v232 = vld [vmem:[%s193 + $0x18] sm:$0xff]
      %v233 = vld [vmem:[%s193 + $0x20] sm:$0xff]
      %v234 = vld [vmem:[%s193 + $0x28] sm:$0xff]
      %v235 = vld [vmem:[%s193 + $0x30] sm:$0xff]
      %v236 = vld [vmem:[%s193 + $0x38] sm:$0xff]
      %v237 = vlaneseq
      %v238 = vshrl.u32 %v237, 7
      %v239 = vsub.s32 1, %v238
      %v240 = vrot.slane %v222, %v239
      %v241 = vmul.f32 %v229, %v240
      %v242 = vmul.f32 %v230, %v240
      %v243 = vmul.f32 %v231, %v240
      %v244 = vmul.f32 %v232, %v240
      %v245 = vmul.f32 %v233, %v240
      %v246 = vmul.f32 %v234, %v240
      %v247 = vmul.f32 %v235, %v240
      %v248 = vmul.f32 %v236, %v240
      %v250 = vlaneseq
      %v251 = vshrl.u32 %v250, 7
      %v252 = vsub.s32 0, %v251
      %v253 = vrot.slane %v228, %v252
      %v255 = vadd.f32 %v241, %v253
      %v256 = vadd.f32 %v242, %v253
      %v257 = vadd.f32 %v243, %v253
      %v258 = vadd.f32 %v244, %v253
      %v259 = vadd.f32 %v245, %v253
      %v260 = vadd.f32 %v246, %v253
      %v261 = vadd.f32 %v247, %v253
      %v262 = vadd.f32 %v248, %v253
      %v263 = vmax.f32 %v255, 0.0
      %v264 = vmax.f32 %v256, 0.0
      %v265 = vmax.f32 %v257, 0.0
      %v266 = vmax.f32 %v258, 0.0
      %v267 = vmax.f32 %v259, 0.0
      %v268 = vmax.f32 %v260, 0.0
      %v269 = vmax.f32 %v261, 0.0
      %v270 = vmax.f32 %v262, 0.0
      %v271 = vpack.c.bf16 %v264, %v263
      %v272 = vpack.c.bf16 %v266, %v265
      %v273 = vpack.c.bf16 %v268, %v267
      %v274 = vpack.c.bf16 %v270, %v269
      %v279 = vunpack.c.l.b16 %v271
      %v280 = vunpack.c.h.b16 %v271
      %v281 = vunpack.c.l.b16 %v272
      %v282 = vunpack.c.h.b16 %v272
      %v283 = vunpack.c.l.b16 %v273
      %v284 = vunpack.c.h.b16 %v273
      %v285 = vunpack.c.l.b16 %v274
      %v286 = vunpack.c.h.b16 %v274
      %v287 = vpack.c.b16 %v279, %v279
      %v288 = vpack.c.b16 %v280, %v280
      %v289 = vpack.c.b16 %v281, %v281
      %v290 = vpack.c.b16 %v282, %v282
      %v291 = vpack.c.b16 %v283, %v283
      %v292 = vpack.c.b16 %v284, %v284
      %v293 = vpack.c.b16 %v285, %v285
      %v294 = vpack.c.b16 %v286, %v286
      %303 = vst [vmem:[%s199] sm:$0xf] %v287
      %304 = vst [vmem:[%s199 + $0x4] sm:$0xf] %v288
      %305 = vst [vmem:[%s199 + $0x8] sm:$0xf] %v289
      %306 = vst [vmem:[%s199 + $0xc] sm:$0xf] %v290
      %307 = vst [vmem:[%s199 + $0x10] sm:$0xf] %v291
      %308 = vst [vmem:[%s199 + $0x14] sm:$0xf] %v292
      %309 = vst [vmem:[%s199 + $0x18] sm:$0xf] %v293
      %310 = vst [vmem:[%s199 + $0x1c] sm:$0xf] %v294
      %s311 = smul.u32 8, %s15
      %p312 = scmp.lt.s32.totalorder %s311, 15
      %s313 = scalar_select %p312, %s311, 15
      %s314 = smul.addr %s313, 4
      %s315 = scalar_lea.vmem %s4, %s314
      // Predicated region
      $region37: #{resblock_forward.9} parent=35 // pred_check
        %p316 = pneg %p122
      $region38: #{resblock_forward.9} parent=35 // pred_check_branch
        %318 = sbr.rel (%p316) target = $region40
      $region39: #{resblock_forward.9} parent=35 // pred_region
        %s319 = smul.u32 8, %s15
      $region40: #{resblock_forward.9} parent=35 // pred_fallthru
        _
    $region36: #{resblock_forward.9} parent=5 // pred_fallthru
      _
    %p320 = scmp.le.s32.totalorder 2, %s10
    // Predicated region
    $region41: #{resblock_forward.9} parent=5 // pred_check
      %p321 = pneg %p320
    $region42: #{resblock_forward.9} parent=5 // pred_check_branch
      %323 = sbr.rel (%p321) target = $region44
    $region43: #{resblock_forward.9} parent=5 // pred_region
      %s324 = ssub.s32 %s10, 2
      // Predicated region
      $region45: #{resblock_forward.9} parent=43 // pred_check
        %p325 = pneg %p128
      $region46: #{resblock_forward.9} parent=43 // pred_check_branch
        %327 = sbr.rel (%p325) target = $region48
      $region47: #{resblock_forward.9} parent=43 // pred_region
        %s328 = smul.u32 8, %s16
        %p329 = scmp.lt.s32.totalorder %s328, 15
        %s330 = scalar_select %p329, %s328, 15
        %s331 = smul.addr %s330, 4
        %s332 = scalar_lea.vmem %s4, %s331
      $region48: #{resblock_forward.9} parent=43 // pred_fallthru
        _
    $region44: #{resblock_forward.9} parent=5 // pred_fallthru
      _
  $region6: #{resblock_forward.9} parent=0 // loop_footer
    %s14 = sadd.s32 1, %s10
  $region7: #{resblock_forward.9} parent=0 // loop_footer_branch
    %9 = sbr.rel target = $region3
  $region8: #{resblock_forward.9} parent=0 // loop_exit
    _

// kernel: resblock_forward.8
$region0: #{resblock_forward.8}
  #allocation0 [shape = 'u32[]', space=smem, size = 0x4, offset = 0x4, fixed_abs, tag = 'smem constant byte address 0x4 - core index']
  #allocation1 [shape = 'u32[144,128]{1,0:T(1,128)}', space=vmem, size = 0x12000, scoped, tag = 'internal scratch']
  %s0 = inlined_call_operand.vmem [shape: bf16[2,9,9,16], index: 0, kind: input, shape index: {}]
  %s1 = inlined_call_operand.vmem [shape: bf16[9,4,128], index: 1, kind: input, shape index: {}]
  %s2 = inlined_call_operand.vmem [shape: f32[1,128], index: 2, kind: input, shape index: {}]
  %s3 = inlined_call_operand.vmem [shape: f32[128,128], index: 3, kind: output, shape index: {0}]
  %s4 = inlined_call_operand.vmem [shape: f32[2,2,128], index: 4, kind: output, shape index: {1}]
  %5 = xla_tuple %s3, %s4
  %s6 = sld [smem:[#allocation0]]
  $region61: #{resblock_forward.8} parent=0
    _
  %s8 = ssub.s32 1, %s6
  %s9 = scalar_select 0, %s8, %s6
  loop: start=0, step=1, limit=4
  $region2: #{resblock_forward.8} parent=0 // loop_pre_header
    _
  $region3: #{resblock_forward.8} parent=0 // loop_header
    %s11 = sphi 0, %s15
    %p12 = scmp.ge.s32.totalorder %s11, 4
    %s18 = sphi 0, %s30
    %s19 = sphi 0, %s26
    %s20 = sphi 0, %s18
    %s21 = sphi 0, %s19
    %s22 = sphi 0, %s20
    %s23 = sphi 0, %s21
    %s33 = sphi 0, %s35
    %s36 = sphi 0, %s33
    %s37 = sphi 0, %s36
    %s53 = sphi 0, %s37
    %s57 = sphi 0, %s57
    %s59 = sphi 0, %s57
    %s60 = sphi 0, %s59
    %s74 = sphi 0, %s60
    %s78 = sphi 0, %s78
    %s80 = sphi 0, %s78
    %s81 = sphi 0, %s80
    %s95 = sphi 0, %s81
    %s103 = sphi 0, %s105
    %s106 = sphi 0, %s103
    %s107 = sphi 0, %s106
    %s123 = sphi 0, %s107
    %s129 = sphi 0, %s131
    %s132 = sphi 0, %s129
    %s133 = sphi 0, %s132
    %s149 = sphi 0, %s133
  $region4: #{resblock_forward.8} parent=0 // loop_header_branch
    %14 = sbr.rel (%p12) target = $region8
  $region5: #{resblock_forward.8} parent=0 // loop_body
    %s16 = ssub.s32 %s11, 1
    %s17 = ssub.s32 %s11, 2
    %s24 = sadd.s32 1, %s19
    %p25 = scmp.ge.s32.totalorder %s24, 1
    %s26 = scalar_select %p25, 0, %s24
    %s27 = sadd.s32 1, %s18
    %s28 = scalar_select %p25, %s27, %s18
    %p29 = scmp.ge.s32.totalorder %s28, 2
    %s30 = scalar_select %p29, 0, %s28
    %s31 = ssub.s32 %s18, %s30
    %p32 = scmp.eq.s32.totalorder %s31, 0
    %s34 = sadd.s32 %s33, 1
    %s35 = scalar_select %p32, %s33, %s34
    %p38 = pneg %p32
    %p39 = scmp.eq.s32.totalorder %s11, 1
    %p40 = por %p38, %p39
    %p41 = scmp.ne.s32.totalorder %s33, %s36
    %p42 = scmp.eq.s32.totalorder %s11, 0
    %p43 = por %p41, %p42
    %p44 = scmp.ne.s32.totalorder %s33, %s36
    %p45 = scmp.eq.s32.totalorder %s16, 1
    %p46 = por %p44, %p45
    %p47 = scmp.ne.s32.totalorder %s36, %s37
    %p48 = scmp.eq.s32.totalorder %s16, 0
    %p49 = por %p47, %p48
    %p50 = scmp.ne.s32.totalorder %s36, %s37
    %p51 = scmp.eq.s32.totalorder %s17, 1
    %p52 = por %p50, %p51
    %p54 = scmp.ne.s32.totalorder %s37, %s53
    %p55 = scmp.eq.s32.totalorder %s17, 0
    %p56 = por %p54, %p55
    %s58 = sadd.s32 %s57, 1
    %p61 = scmp.eq.s32.totalorder %s11, 1
    %p62 = scmp.ne.s32.totalorder %s57, %s59
    %p63 = scmp.eq.s32.totalorder %s11, 0
    %p64 = por %p62, %p63
    %p65 = scmp.ne.s32.totalorder %s57, %s59
    %p66 = scmp.eq.s32.totalorder %s16, 1
    %p67 = por %p65, %p66
    %p68 = scmp.ne.s32.totalorder %s59, %s60
    %p69 = scmp.eq.s32.totalorder %s16, 0
    %p70 = por %p68, %p69
    %p71 = scmp.ne.s32.totalorder %s59, %s60
    %p72 = scmp.eq.s32.totalorder %s17, 1
    %p73 = por %p71, %p72
    %p75 = scmp.ne.s32.totalorder %s60, %s74
    %p76 = scmp.eq.s32.totalorder %s17, 0
    %p77 = por %p75, %p76
    %s79 = sadd.s32 %s78, 1
    %p82 = scmp.eq.s32.totalorder %s11, 1
    %p83 = scmp.ne.s32.totalorder %s78, %s80
    %p84 = scmp.eq.s32.totalorder %s11, 0
    %p85 = por %p83, %p84
    %p86 = scmp.ne.s32.totalorder %s78, %s80
    %p87 = scmp.eq.s32.totalorder %s16, 1
    %p88 = por %p86, %p87
    %p89 = scmp.ne.s32.totalorder %s80, %s81
    %p90 = scmp.eq.s32.totalorder %s16, 0
    %p91 = por %p89, %p90
    %p92 = scmp.ne.s32.totalorder %s80, %s81
    %p93 = scmp.eq.s32.totalorder %s17, 1
    %p94 = por %p92, %p93
    %p96 = scmp.ne.s32.totalorder %s81, %s95
    %p97 = scmp.eq.s32.totalorder %s17, 0
    %p98 = por %p96, %p97
    %s99 = sadd.s32 %s18, %s19
    %s100 = sadd.s32 %s30, %s26
    %s101 = ssub.s32 %s99, %s100
    %p102 = scmp.eq.s32.totalorder %s101, 0
    %s104 = sadd.s32 %s103, 1
    %s105 = scalar_select %p102, %s103, %s104
    %p108 = pneg %p102
    %p109 = scmp.eq.s32.totalorder %s11, 1
    %p110 = por %p108, %p109
    %p111 = scmp.ne.s32.totalorder %s103, %s106
    %p112 = scmp.eq.s32.totalorder %s11, 0
    %p113 = por %p111, %p112
    %p114 = scmp.ne.s32.totalorder %s103, %s106
    %p115 = scmp.eq.s32.totalorder %s16, 1
    %p116 = por %p114, %p115
    %p117 = scmp.ne.s32.totalorder %s106, %s107
    %p118 = scmp.eq.s32.totalorder %s16, 0
    %p119 = por %p117, %p118
    %p120 = scmp.ne.s32.totalorder %s106, %s107
    %p121 = scmp.eq.s32.totalorder %s17, 1
    %p122 = por %p120, %p121
    %p124 = scmp.ne.s32.totalorder %s107, %s123
    %p125 = scmp.eq.s32.totalorder %s17, 0
    %p126 = por %p124, %p125
    %s127 = ssub.s32 %s18, %s30
    %p128 = scmp.eq.s32.totalorder %s127, 0
    %s130 = sadd.s32 %s129, 1
    %s131 = scalar_select %p128, %s129, %s130
    %p134 = pneg %p128
    %p135 = scmp.eq.s32.totalorder %s11, 1
    %p136 = por %p134, %p135
    %p137 = scmp.ne.s32.totalorder %s129, %s132
    %p138 = scmp.eq.s32.totalorder %s11, 0
    %p139 = por %p137, %p138
    %p140 = scmp.ne.s32.totalorder %s129, %s132
    %p141 = scmp.eq.s32.totalorder %s16, 1
    %p142 = por %p140, %p141
    %p143 = scmp.ne.s32.totalorder %s132, %s133
    %p144 = scmp.eq.s32.totalorder %s16, 0
    %p145 = por %p143, %p144
    %p146 = scmp.ne.s32.totalorder %s132, %s133
    %p147 = scmp.eq.s32.totalorder %s17, 1
    %p148 = por %p146, %p147
    %p150 = scmp.ne.s32.totalorder %s133, %s149
    %p151 = scmp.eq.s32.totalorder %s17, 0
    %p152 = por %p150, %p151
    %p153 = scmp.le.s32.totalorder 1, %s11
    %p154 = scmp.lt.s32.totalorder %s11, 3
    %p155 = pnand %p153, %p154
    %p156 = pneg %p155
    // Predicated region
    $region9: #{resblock_forward.8} parent=5 // pred_check
      _
    $region10: #{resblock_forward.8} parent=5 // pred_check_branch
      %158 = sbr.rel (%p155) target = $region12
    $region11: #{resblock_forward.8} parent=5 // pred_region
      %s159 = ssub.s32 %s11, 1
      // Predicated region
      $region13: #{resblock_forward.8} parent=11 // pred_check
        %p160 = pneg %p70
      $region14: #{resblock_forward.8} parent=11 // pred_check_branch
        %162 = sbr.rel (%p160) target = $region16
      $region15: #{resblock_forward.8} parent=11 // pred_region
        _
      $region16: #{resblock_forward.8} parent=11 // pred_fallthru
        _
      // Predicated region
      $region17: #{resblock_forward.8} parent=11 // pred_check
        %p163 = pneg %p91
      $region18: #{resblock_forward.8} parent=11 // pred_check_branch
        %165 = sbr.rel (%p163) target = $region20
      $region19: #{resblock_forward.8} parent=11 // pred_region
        _
      $region20: #{resblock_forward.8} parent=11 // pred_fallthru
        _
    $region12: #{resblock_forward.8} parent=5 // pred_fallthru
      _
    %p166 = scmp.lt.s32.totalorder %s11, 2
    // Predicated region
    $region21: #{resblock_forward.8} parent=5 // pred_check
      %p167 = pneg %p166
    $region22: #{resblock_forward.8} parent=5 // pred_check_branch
      %169 = sbr.rel (%p167) target = $region24
    $region23: #{resblock_forward.8} parent=5 // pred_region
      // Predicated region
      $region25: #{resblock_forward.8} parent=23 // pred_check
        %p170 = pneg %p43
      $region26: #{resblock_forward.8} parent=23 // pred_check_branch
        %172 = sbr.rel (%p170) target = $region28
      $region27: #{resblock_forward.8} parent=23 // pred_region
        %p173 = scmp.lt.s32.totalorder %s18, 1
        %s174 = scalar_select %p173, %s18, 1
        %s175 = smul.addr %s174, 18
        %s176 = smul.addr %s175, 4
        %s177 = scalar_lea.vmem %s0, %s176
      $region28: #{resblock_forward.8} parent=23 // pred_fallthru
        _
    $region24: #{resblock_forward.8} parent=5 // pred_fallthru
      _
    %p178 = scmp.le.s32.totalorder 1, %s11
    %p179 = scmp.lt.s32.totalorder %s11, 3
    %p180 = pnand %p178, %p179
    %p181 = pneg %p180
    // Predicated region
    $region29: #{resblock_forward.8} parent=5 // pred_check
      _
    $region30: #{resblock_forward.8} parent=5 // pred_check_branch
      %183 = sbr.rel (%p180) target = $region32
    $region31: #{resblock_forward.8} parent=5 // pred_region
      %s184 = ssub.s32 %s11, 1
      %p185 = scmp.lt.s32.totalorder %s20, 1
      %s186 = scalar_select %p185, %s20, 1
      %s187 = smul.addr %s186, 18
      %s188 = smul.addr %s187, 4
      %s189 = scalar_lea.vmem %s0, %s188
      %p190 = pneg %p49
      %p191 = pneg %p46
      %p192 = pneg %p70
      %p193 = pneg %p67
      %p194 = pneg %p91
      %p195 = pneg %p88
      %p196 = pneg %p119
      %p197 = pneg %p116
      %s198 = sadd.s32 %s20, %s21
      %s199 = smul.u32 8, %s198
      %p200 = scmp.lt.s32.totalorder %s199, 15
      %s201 = scalar_select %p200, %s199, 15
      %s202 = smul.addr %s201, 8
      %s203 = scalar_lea.vmem %s3, %s202
      %p204 = pneg %p145
      %p205 = pneg %p142
      %p206 = scmp.lt.s32.totalorder %s20, 1
      %s207 = scalar_select %p206, %s20, 1
      %s208 = smul.addr %s207, 2
      %s209 = scalar_lea.vmem %s4, %s208
      %p210 = scmp.lt.s32.totalorder %s20, 1
      %s211 = scalar_select %p210, %s20, 1
      %s212 = smul.addr %s211, 18
      %s213 = smul.addr %s212, 4
      %s214 = scalar_lea.vmem %s0, %s213
      %s215 = sadd.s32 %s20, %s21
      %s216 = smul.u32 8, %s215
      %p217 = scmp.lt.s32.totalorder %s216, 15
      %s218 = scalar_select %p217, %s216, 15
      %s219 = smul.addr %s218, 8
      %s220 = scalar_lea.vmem %s3, %s219
      %s221 = sadd.s32 %s20, %s21
      %s222 = smul.u32 8, %s221
      %p223 = scmp.lt.s32.totalorder %s20, 1
      %s224 = scalar_select %p223, %s20, 1
      %s225 = smul.addr %s224, 2
      %s226 = scalar_lea.vmem %s4, %s225
      %s228 = smul.u32 %s21, 8
      %s229 = smul.u32 %s228, 2
      %s230 = smul.addr %s229, 4
      %s231 = scalar_lea.vmem %s214, %s230
      %v232 = vld [vmem:[%s231] sm:$0xf]
      %v233 = vld [vmem:[%s231 + $0x8] sm:$0xf]
      %v234 = vld [vmem:[%s231 + $0x10] sm:$0xf]
      %v235 = vld [vmem:[%s231 + $0x18] sm:$0xf]
      %v236 = vld [vmem:[%s231 + $0x20] sm:$0xf]
      %v237 = vld [vmem:[%s231 + $0x28] sm:$0xf]
      %v238 = vld [vmem:[%s231 + $0x30] sm:$0xf]
      %v239 = vld [vmem:[%s231 + $0x38] sm:$0xf]
      %v240 = vld [vmem:[%s1] sm:$0x3]
      %s241 = scalar_lea.vmem %s1, 2
      %v242 = vld [vmem:[%s241] sm:$0x3]
      %v251 = vunpack.c.l.b16 %v232
      %v252 = vunpack.c.l.b16 %v233
      %v253 = vunpack.c.l.b16 %v234
      %v254 = vunpack.c.l.b16 %v235
      %v255 = vunpack.c.l.b16 %v236
      %v256 = vunpack.c.l.b16 %v237
      %v257 = vunpack.c.l.b16 %v238
      %v258 = vunpack.c.l.b16 %v239
      %v259 = vpack.c.b16 %v252, %v251
      %v260 = vpack.c.b16 %v254, %v253
      %v261 = vpack.c.b16 %v256, %v255
      %v262 = vpack.c.b16 %v258, %v257
      %263 = vrot.lane.b32.xlu0 %v259, 124
      %v264 = vpop.permute.xlu0 %263
      %265 = vrot.lane.b32.xlu0 %v260, 124
      %v266 = vpop.permute.xlu0 %265
      %267 = vrot.lane.b32.xlu0 %v261, 124
      %v268 = vpop.permute.xlu0 %267
      %269 = vrot.lane.b32.xlu0 %v262, 124
      %v270 = vpop.permute.xlu0 %269
      %vm271 = vcmask 31744
      %v273 = vsel %vm271, %v264, 0
      %v276 = vsel %vm271, %v266, 0
      %v279 = vsel %vm271, %v268, 0
      %v282 = vsel %vm271, %v270, 0
      %vm284 = vcmask 1041408
      %v286 = vsel %vm284, %v242, 0
      %288 = vmatprep.subr.bf16.mxu0 0
      %289 = vmatpush1.bf16.msra.mxu0 0
      %290 = vmatprep.subr.bf16.mxu0 0
      %291 = vmatpush1.bf16.msra.mxu0 0
      %292 = vmatprep.subr.bf16.mxu0 0
      %293 = vmatpush1.bf16.msra.mxu0 0
      %294 = vmatprep.subr.bf16.mxu0 0
      %295 = vmatpush1.bf16.msra.mxu0 0
      %296 = vmatprep.subr.bf16.mxu0 0
      %297 = vmatpush1.bf16.msra.mxu0 0
      %298 = vmatprep.subr.bf16.mxu0 0
      %299 = vmatpush1.bf16.msra.mxu0 0
      %300 = vmatprep.subr.bf16.mxu0 0
      %301 = vmatpush1.bf16.msra.mxu0 0
      %302 = vmatprep.subr.bf16.mxu0 0
      %303 = vmatpush1.bf16.msra.mxu0 %v286
      %304 = vmatprep.subr.bf16.mxu0 0
      %305 = vmatpush2.bf16.msra.mxu0 0
      %306 = vmatprep.subr.bf16.mxu0 0
      %307 = vmatpush2.bf16.msra.mxu0 0
      %308 = vmatprep.subr.bf16.mxu0 0
      %309 = vmatpush2.bf16.msra.mxu0 0
      %310 = vmatprep.subr.bf16.mxu0 0
      %311 = vmatpush2.bf16.msra.mxu0 0
      %312 = vmatprep.subr.bf16.mxu0 0
      %313 = vmatpush2.bf16.msra.mxu0 0
      %314 = vmatprep.subr.bf16.mxu0 0
      %315 = vmatpush2.bf16.msra.mxu0 0
      %316 = vmatprep.subr.bf16.mxu0 0
      %317 = vmatpush2.bf16.msra.mxu0 0
      %318 = vmatprep.subr.bf16.mxu0 0
      %319 = vmatpush2.bf16.msra.mxu0 0
      %320 = vmatprep.mubr.bf16.mxu0 0
      %321 = vmatmul.mubr.bf16.gmra.mxu0 %v273
      %v322 = vpop.f32.mrf.mxu0
      %v323 = vadd.f32 0.0, %v322
      %v324 = vpop.f32.mrf.mxu0
      %v325 = vpop.f32.mrf.mxu0
      %v326 = vadd.f32 0.0, %v325
      %v327 = vpop.f32.mrf.mxu0
      %328 = vmatprep.mubr.bf16.mxu0 0
      %329 = vmatmul.mubr.bf16.gmra.mxu0 %v276
      %v330 = vpop.f32.mrf.mxu0
      %v331 = vadd.f32 0.0, %v330
      %v332 = vpop.f32.mrf.mxu0
      %v333 = vpop.f32.mrf.mxu0
      %v334 = vadd.f32 0.0, %v333
      %v335 = vpop.f32.mrf.mxu0
      %336 = vmatprep.mubr.bf16.mxu0 0
      %337 = vmatmul.mubr.bf16.gmra.mxu0 %v279
      %v338 = vpop.f32.mrf.mxu0
      %v339 = vadd.f32 0.0, %v338
      %v340 = vpop.f32.mrf.mxu0
      %v341 = vpop.f32.mrf.mxu0
      %v342 = vadd.f32 0.0, %v341
      %v343 = vpop.f32.mrf.mxu0
      %344 = vmatprep.mubr.bf16.mxu0 0
      %345 = vmatmul.mubr.bf16.gmra.mxu0 %v282
      %v346 = vpop.f32.mrf.mxu0
      %v347 = vadd.f32 0.0, %v346
      %v348 = vpop.f32.mrf.mxu0
      %v349 = vpop.f32.mrf.mxu0
      %v350 = vadd.f32 0.0, %v349
      %v351 = vpop.f32.mrf.mxu0
      %352 = vdwg.mxu0
      %v354 = vsel %vm271, %v259, 0
      %v357 = vsel %vm271, %v260, 0
      %v360 = vsel %vm271, %v261, 0
      %v363 = vsel %vm271, %v262, 0
      %v366 = vsel %vm284, %v240, 0
      %368 = vmatprep.subr.bf16.mxu0 0
      %369 = vmatpush1.bf16.msra.mxu0 0
      %370 = vmatprep.subr.bf16.mxu0 0
      %371 = vmatpush1.bf16.msra.mxu0 0
      %372 = vmatprep.subr.bf16.mxu0 0
      %373 = vmatpush1.bf16.msra.mxu0 0
      %374 = vmatprep.subr.bf16.mxu0 0
      %375 = vmatpush1.bf16.msra.mxu0 0
      %376 = vmatprep.subr.bf16.mxu0 0
      %377 = vmatpush1.bf16.msra.mxu0 0
      %378 = vmatprep.subr.bf16.mxu0 0
      %379 = vmatpush1.bf16.msra.mxu0 0
      %380 = vmatprep.subr.bf16.mxu0 0
      %381 = vmatpush1.bf16.msra.mxu0 0
      %382 = vmatprep.subr.bf16.mxu0 0
      %383 = vmatpush1.bf16.msra.mxu0 %v366
      %384 = vmatprep.subr.bf16.mxu0 0
      %385 = vmatpush2.bf16.msra.mxu0 0
      %386 = vmatprep.subr.bf16.mxu0 0
      %387 = vmatpush2.bf16.msra.mxu0 0
      %388 = vmatprep.subr.bf16.mxu0 0
      %389 = vmatpush2.bf16.msra.mxu0 0
      %390 = vmatprep.subr.bf16.mxu0 0
      %391 = vmatpush2.bf16.msra.mxu0 0
      %392 = vmatprep.subr.bf16.mxu0 0
      %393 = vmatpush2.bf16.msra.mxu0 0
      %394 = vmatprep.subr.bf16.mxu0 0
      %395 = vmatpush2.bf16.msra.mxu0 0
      %396 = vmatprep.subr.bf16.mxu0 0
      %397 = vmatpush2.bf16.msra.mxu0 0
      %398 = vmatprep.subr.bf16.mxu0 0
      %399 = vmatpush2.bf16.msra.mxu0 0
      %400 = vmatprep.mubr.bf16.mxu0 0
      %401 = vmatmul.mubr.bf16.gmra.mxu0 %v354
      %v402 = vpop.f32.mrf.mxu0
      %v403 = vadd.f32 %v323, %v402
      %v404 = vpop.f32.mrf.mxu0
      %v405 = vpop.f32.mrf.mxu0
      %v406 = vadd.f32 %v326, %v405
      %v407 = vpop.f32.mrf.mxu0
      %408 = vmatprep.mubr.bf16.mxu0 0
      %409 = vmatmul.mubr.bf16.gmra.mxu0 %v357
      %v410 = vpop.f32.mrf.mxu0
      %v411 = vadd.f32 %v331, %v410
      %v412 = vpop.f32.mrf.mxu0
      %v413 = vpop.f32.mrf.mxu0
      %v414 = vadd.f32 %v334, %v413
      %v415 = vpop.f32.mrf.mxu0
      %416 = vmatprep.mubr.bf16.mxu0 0
      %417 = vmatmul.mubr.bf16.gmra.mxu0 %v360
      %v418 = vpop.f32.mrf.mxu0
      %v419 = vadd.f32 %v339, %v418
      %v420 = vpop.f32.mrf.mxu0
      %v421 = vpop.f32.mrf.mxu0
      %v422 = vadd.f32 %v342, %v421
      %v423 = vpop.f32.mrf.mxu0
      %424 = vmatprep.mubr.bf16.mxu0 0
      %425 = vmatmul.mubr.bf16.gmra.mxu0 %v363
      %v426 = vpop.f32.mrf.mxu0
      %v427 = vadd.f32 %v347, %v426
      %v428 = vpop.f32.mrf.mxu0
      %v429 = vpop.f32.mrf.mxu0
      %v430 = vadd.f32 %v350, %v429
      %v431 = vpop.f32.mrf.mxu0
      %432 = vdwg.mxu0
      %v433 = vld [vmem:[%s231] sm:$0xf]
      %v434 = vld [vmem:[%s231 + $0x4] sm:$0x1]
      %v435 = vld [vmem:[%s231 + $0x8] sm:$0xf]
      %v436 = vld [vmem:[%s231 + $0xc] sm:$0x1]
      %v437 = vld [vmem:[%s231 + $0x10] sm:$0xf]
      %v438 = vld [vmem:[%s231 + $0x14] sm:$0x1]
      %v439 = vld [vmem:[%s231 + $0x18] sm:$0xf]
      %v440 = vld [vmem:[%s231 + $0x1c] sm:$0x1]
      %v441 = vld [vmem:[%s231 + $0x20] sm:$0xf]
      %v442 = vld [vmem:[%s231 + $0x24] sm:$0x1]
      %v443 = vld [vmem:[%s231 + $0x28] sm:$0xf]
      %v444 = vld [vmem:[%s231 + $0x2c] sm:$0x1]
      %v445 = vld [vmem:[%s231 + $0x30] sm:$0xf]
      %v446 = vld [vmem:[%s231 + $0x34] sm:$0x1]
      %v447 = vld [vmem:[%s231 + $0x38] sm:$0xf]
      %v448 = vld [vmem:[%s231 + $0x3c] sm:$0x1]
      %vm449 = vsmask.f32 3328
      %vm450 = vsmask.f32 7440
      %vm451 = vmor %vm449, %vm450
      %v453 = vshrl.u32 %v433, 16
      %v455 = vrot.slane %v453, 4
      %v456 = vshll.u32 %v433, 16
      %v458 = vrot.slane %v456, 5
      %v459 = vor.u32 %v455, %v458
      %v460 = vrot.slane %v459, 4
      %v462 = vshll.u32 %v434, 16
      %v464 = vrot.slane %v462, 5
      %v465 = vsel %vm451, %v460, %v464
      %v467 = vshrl.u32 %v435, 16
      %v469 = vrot.slane %v467, 4
      %v470 = vshll.u32 %v435, 16
      %v472 = vrot.slane %v470, 5
      %v473 = vor.u32 %v469, %v472
      %v474 = vrot.slane %v473, 4
      %v476 = vshll.u32 %v436, 16
      %v478 = vrot.slane %v476, 5
      %v479 = vsel %vm451, %v474, %v478
      %v481 = vshrl.u32 %v437, 16
      %v483 = vrot.slane %v481, 4
      %v484 = vshll.u32 %v437, 16
      %v486 = vrot.slane %v484, 5
      %v487 = vor.u32 %v483, %v486
      %v488 = vrot.slane %v487, 4
      %v490 = vshll.u32 %v438, 16
      %v492 = vrot.slane %v490, 5
      %v493 = vsel %vm451, %v488, %v492
      %v495 = vshrl.u32 %v439, 16
      %v497 = vrot.slane %v495, 4
      %v498 = vshll.u32 %v439, 16
      %v500 = vrot.slane %v498, 5
      %v501 = vor.u32 %v497, %v500
      %v502 = vrot.slane %v501, 4
      %v504 = vshll.u32 %v440, 16
      %v506 = vrot.slane %v504, 5
      %v507 = vsel %vm451, %v502, %v506
      %v509 = vshrl.u32 %v441, 16
      %v511 = vrot.slane %v509, 4
      %v512 = vshll.u32 %v441, 16
      %v514 = vrot.slane %v512, 5
      %v515 = vor.u32 %v511, %v514
      %v516 = vrot.slane %v515, 4
      %v518 = vshll.u32 %v442, 16
      %v520 = vrot.slane %v518, 5
      %v521 = vsel %vm451, %v516, %v520
      %v523 = vshrl.u32 %v443, 16
      %v525 = vrot.slane %v523, 4
      %v526 = vshll.u32 %v443, 16
      %v528 = vrot.slane %v526, 5
      %v529 = vor.u32 %v525, %v528
      %v530 = vrot.slane %v529, 4
      %v532 = vshll.u32 %v444, 16
      %v534 = vrot.slane %v532, 5
      %v535 = vsel %vm451, %v530, %v534
      %v537 = vshrl.u32 %v445, 16
      %v539 = vrot.slane %v537, 4
      %v540 = vshll.u32 %v445, 16
      %v542 = vrot.slane %v540, 5
      %v543 = vor.u32 %v539, %v542
      %v544 = vrot.slane %v543, 4
      %v546 = vshll.u32 %v446, 16
      %v548 = vrot.slane %v546, 5
      %v549 = vsel %vm451, %v544, %v548
      %v551 = vshrl.u32 %v447, 16
      %v553 = vrot.slane %v551, 4
      %v554 = vshll.u32 %v447, 16
      %v556 = vrot.slane %v554, 5
      %v557 = vor.u32 %v553, %v556
      %v558 = vrot.slane %v557, 4
      %v560 = vshll.u32 %v448, 16
      %v562 = vrot.slane %v560, 5
      %v563 = vsel %vm451, %v558, %v562
      %s564 = scalar_lea.vmem %s1, 4
      %v565 = vld [vmem:[%s564] sm:$0x3]
      %v566 = vunpack.c.l.b16 %v465
      %v567 = vunpack.c.l.b16 %v479
      %v568 = vunpack.c.l.b16 %v493
      %v569 = vunpack.c.l.b16 %v507
      %v570 = vunpack.c.l.b16 %v521
      %v571 = vunpack.c.l.b16 %v535
      %v572 = vunpack.c.l.b16 %v549
      %v573 = vunpack.c.l.b16 %v563
      %v574 = vpack.c.b16 %v567, %v566
      %v575 = vpack.c.b16 %v569, %v568
      %v576 = vpack.c.b16 %v571, %v570
      %v577 = vpack.c.b16 %v573, %v572
      %v579 = vsel %vm271, %v574, 0
      %v582 = vsel %vm271, %v575, 0
      %v585 = vsel %vm271, %v576, 0
      %v588 = vsel %vm271, %v577, 0
      %v591 = vsel %vm284, %v565, 0
      %593 = vmatprep.subr.bf16.mxu0 0
      %594 = vmatpush1.bf16.msra.mxu0 0
      %595 = vmatprep.subr.bf16.mxu0 0
      %596 = vmatpush1.bf16.msra.mxu0 0
      %597 = vmatprep.subr.bf16.mxu0 0
      %598 = vmatpush1.bf16.msra.mxu0 0
      %599 = vmatprep.subr.bf16.mxu0 0
      %600 = vmatpush1.bf16.msra.mxu0 0
      %601 = vmatprep.subr.bf16.mxu0 0
      %602 = vmatpush1.bf16.msra.mxu0 0
      %603 = vmatprep.subr.bf16.mxu0 0
      %604 = vmatpush1.bf16.msra.mxu0 0
      %605 = vmatprep.subr.bf16.mxu0 0
      %606 = vmatpush1.bf16.msra.mxu0 0
      %607 = vmatprep.subr.bf16.mxu0 0
      %608 = vmatpush1.bf16.msra.mxu0 %v591
      %609 = vmatprep.subr.bf16.mxu0 0
      %610 = vmatpush2.bf16.msra.mxu0 0
      %611 = vmatprep.subr.bf16.mxu0 0
      %612 = vmatpush2.bf16.msra.mxu0 0
      %613 = vmatprep.subr.bf16.mxu0 0
      %614 = vmatpush2.bf16.msra.mxu0 0
      %615 = vmatprep.subr.bf16.mxu0 0
      %616 = vmatpush2.bf16.msra.mxu0 0
      %617 = vmatprep.subr.bf16.mxu0 0
      %618 = vmatpush2.bf16.msra.mxu0 0
      %619 = vmatprep.subr.bf16.mxu0 0
      %620 = vmatpush2.bf16.msra.mxu0 0
      %621 = vmatprep.subr.bf16.mxu0 0
      %622 = vmatpush2.bf16.msra.mxu0 0
      %623 = vmatprep.subr.bf16.mxu0 0
      %624 = vmatpush2.bf16.msra.mxu0 0
      %625 = vmatprep.mubr.bf16.mxu0 0
      %626 = vmatmul.mubr.bf16.gmra.mxu0 %v579
      %v627 = vpop.f32.mrf.mxu0
      %v628 = vadd.f32 0.0, %v627
      %v629 = vpop.f32.mrf.mxu0
      %v630 = vpop.f32.mrf.mxu0
      %v631 = vadd.f32 0.0, %v630
      %v632 = vpop.f32.mrf.mxu0
      %633 = vmatprep.mubr.bf16.mxu0 0
      %634 = vmatmul.mubr.bf16.gmra.mxu0 %v582
      %v635 = vpop.f32.mrf.mxu0
      %v636 = vadd.f32 0.0, %v635
      %v637 = vpop.f32.mrf.mxu0
      %v638 = vpop.f32.mrf.mxu0
      %v639 = vadd.f32 0.0, %v638
      %v640 = vpop.f32.mrf.mxu0
      %641 = vmatprep.mubr.bf16.mxu0 0
      %642 = vmatmul.mubr.bf16.gmra.mxu0 %v585
      %v643 = vpop.f32.mrf.mxu0
      %v644 = vadd.f32 0.0, %v643
      %v645 = vpop.f32.mrf.mxu0
      %v646 = vpop.f32.mrf.mxu0
      %v647 = vadd.f32 0.0, %v646
      %v648 = vpop.f32.mrf.mxu0
      %649 = vmatprep.mubr.bf16.mxu0 0
      %650 = vmatmul.mubr.bf16.gmra.mxu0 %v588
      %v651 = vpop.f32.mrf.mxu0
      %v652 = vadd.f32 0.0, %v651
      %v653 = vpop.f32.mrf.mxu0
      %v654 = vpop.f32.mrf.mxu0
      %v655 = vadd.f32 0.0, %v654
      %v656 = vpop.f32.mrf.mxu0
      %657 = vdwg.mxu0
      %v658 = vadd.f32 %v403, %v628
      %v659 = vadd.f32 %v406, %v631
      %v660 = vadd.f32 %v411, %v636
      %v661 = vadd.f32 %v414, %v639
      %v662 = vadd.f32 %v419, %v644
      %v663 = vadd.f32 %v422, %v647
      %v664 = vadd.f32 %v427, %v652
      %v665 = vadd.f32 %v430, %v655
      %s666 = scalar_lea.vmem %s1, 6
      %v667 = vld [vmem:[%s666] sm:$0x3]
      %668 = vrot.lane.b32.xlu0 %v259, 120
      %v669 = vpop.permute.xlu0 %668
      %670 = vrot.lane.b32.xlu0 %v260, 120
      %v671 = vpop.permute.xlu0 %670
      %672 = vrot.lane.b32.xlu0 %v261, 120
      %v673 = vpop.permute.xlu0 %672
      %674 = vrot.lane.b32.xlu0 %v262, 120
      %v675 = vpop.permute.xlu0 %674
      %v677 = vsel %vm271, %v669, 0
      %v680 = vsel %vm271, %v671, 0
      %v683 = vsel %vm271, %v673, 0
      %v686 = vsel %vm271, %v675, 0
      %v689 = vsel %vm284, %v667, 0
      %691 = vmatprep.subr.bf16.mxu0 0
      %692 = vmatpush1.bf16.msra.mxu0 0
      %693 = vmatprep.subr.bf16.mxu0 0
      %694 = vmatpush1.bf16.msra.mxu0 0
      %695 = vmatprep.subr.bf16.mxu0 0
      %696 = vmatpush1.bf16.msra.mxu0 0
      %697 = vmatprep.subr.bf16.mxu0 0
      %698 = vmatpush1.bf16.msra.mxu0 0
      %699 = vmatprep.subr.bf16.mxu0 0
      %700 = vmatpush1.bf16.msra.mxu0 0
      %701 = vmatprep.subr.bf16.mxu0 0
      %702 = vmatpush1.bf16.msra.mxu0 0
      %703 = vmatprep.subr.bf16.mxu0 0
      %704 = vmatpush1.bf16.msra.mxu0 0
      %705 = vmatprep.subr.bf16.mxu0 0
      %706 = vmatpush1.bf16.msra.mxu0 %v689
      %707 = vmatprep.subr.bf16.mxu0 0
      %708 = vmatpush2.bf16.msra.mxu0 0
      %709 = vmatprep.subr.bf16.mxu0 0
      %710 = vmatpush2.bf16.msra.mxu0 0
      %711 = vmatprep.subr.bf16.mxu0 0
      %712 = vmatpush2.bf16.msra.mxu0 0
      %713 = vmatprep.subr.bf16.mxu0 0
      %714 = vmatpush2.bf16.msra.mxu0 0
      %715 = vmatprep.subr.bf16.mxu0 0
      %716 = vmatpush2.bf16.msra.mxu0 0
      %717 = vmatprep.subr.bf16.mxu0 0
      %718 = vmatpush2.bf16.msra.mxu0 0
      %719 = vmatprep.subr.bf16.mxu0 0
      %720 = vmatpush2.bf16.msra.mxu0 0
      %721 = vmatprep.subr.bf16.mxu0 0
      %722 = vmatpush2.bf16.msra.mxu0 0
      %723 = vmatprep.mubr.bf16.mxu0 0
      %724 = vmatmul.mubr.bf16.gmra.mxu0 %v677
      %v725 = vpop.f32.mrf.mxu0
      %v726 = vadd.f32 0.0, %v725
      %v727 = vpop.f32.mrf.mxu0
      %v728 = vpop.f32.mrf.mxu0
      %v729 = vadd.f32 0.0, %v728
      %v730 = vpop.f32.mrf.mxu0
      %731 = vmatprep.mubr.bf16.mxu0 0
      %732 = vmatmul.mubr.bf16.gmra.mxu0 %v680
      %v733 = vpop.f32.mrf.mxu0
      %v734 = vadd.f32 0.0, %v733
      %v735 = vpop.f32.mrf.mxu0
      %v736 = vpop.f32.mrf.mxu0
      %v737 = vadd.f32 0.0, %v736
      %v738 = vpop.f32.mrf.mxu0
      %739 = vmatprep.mubr.bf16.mxu0 0
      %740 = vmatmul.mubr.bf16.gmra.mxu0 %v683
      %v741 = vpop.f32.mrf.mxu0
      %v742 = vadd.f32 0.0, %v741
      %v743 = vpop.f32.mrf.mxu0
      %v744 = vpop.f32.mrf.mxu0
      %v745 = vadd.f32 0.0, %v744
      %v746 = vpop.f32.mrf.mxu0
      %747 = vmatprep.mubr.bf16.mxu0 0
      %748 = vmatmul.mubr.bf16.gmra.mxu0 %v686
      %v749 = vpop.f32.mrf.mxu0
      %v750 = vadd.f32 0.0, %v749
      %v751 = vpop.f32.mrf.mxu0
      %v752 = vpop.f32.mrf.mxu0
      %v753 = vadd.f32 0.0, %v752
      %v754 = vpop.f32.mrf.mxu0
      %755 = vdwg.mxu0
      %v756 = vadd.f32 %v658, %v726
      %v757 = vadd.f32 %v659, %v729
      %v758 = vadd.f32 %v660, %v734
      %v759 = vadd.f32 %v661, %v737
      %v760 = vadd.f32 %v662, %v742
      %v761 = vadd.f32 %v663, %v745
      %v762 = vadd.f32 %v664, %v750
      %v763 = vadd.f32 %v665, %v753
      %s764 = scalar_lea.vmem %s1, 8
      %v765 = vld [vmem:[%s764] sm:$0x3]
      %766 = vrot.lane.b32.xlu0 %v259, 116
      %v767 = vpop.permute.xlu0 %766
      %768 = vrot.lane.b32.xlu0 %v260, 116
      %v769 = vpop.permute.xlu0 %768
      %770 = vrot.lane.b32.xlu0 %v261, 116
      %v771 = vpop.permute.xlu0 %770
      %772 = vrot.lane.b32.xlu0 %v262, 116
      %v773 = vpop.permute.xlu0 %772
      %v775 = vsel %vm271, %v767, 0
      %v778 = vsel %vm271, %v769, 0
      %v781 = vsel %vm271, %v771, 0
      %v784 = vsel %vm271, %v773, 0
      %v787 = vsel %vm284, %v765, 0
      %789 = vmatprep.subr.bf16.mxu0 0
      %790 = vmatpush1.bf16.msra.mxu0 0
      %791 = vmatprep.subr.bf16.mxu0 0
      %792 = vmatpush1.bf16.msra.mxu0 0
      %793 = vmatprep.subr.bf16.mxu0 0
      %794 = vmatpush1.bf16.msra.mxu0 0
      %795 = vmatprep.subr.bf16.mxu0 0
      %796 = vmatpush1.bf16.msra.mxu0 0
      %797 = vmatprep.subr.bf16.mxu0 0
      %798 = vmatpush1.bf16.msra.mxu0 0
      %799 = vmatprep.subr.bf16.mxu0 0
      %800 = vmatpush1.bf16.msra.mxu0 0
      %801 = vmatprep.subr.bf16.mxu0 0
      %802 = vmatpush1.bf16.msra.mxu0 0
      %803 = vmatprep.subr.bf16.mxu0 0
      %804 = vmatpush1.bf16.msra.mxu0 %v787
      %805 = vmatprep.subr.bf16.mxu0 0
      %806 = vmatpush2.bf16.msra.mxu0 0
      %807 = vmatprep.subr.bf16.mxu0 0
      %808 = vmatpush2.bf16.msra.mxu0 0
      %809 = vmatprep.subr.bf16.mxu0 0
      %810 = vmatpush2.bf16.msra.mxu0 0
      %811 = vmatprep.subr.bf16.mxu0 0
      %812 = vmatpush2.bf16.msra.mxu0 0
      %813 = vmatprep.subr.bf16.mxu0 0
      %814 = vmatpush2.bf16.msra.mxu0 0
      %815 = vmatprep.subr.bf16.mxu0 0
      %816 = vmatpush2.bf16.msra.mxu0 0
      %817 = vmatprep.subr.bf16.mxu0 0
      %818 = vmatpush2.bf16.msra.mxu0 0
      %819 = vmatprep.subr.bf16.mxu0 0
      %820 = vmatpush2.bf16.msra.mxu0 0
      %821 = vmatprep.mubr.bf16.mxu0 0
      %822 = vmatmul.mubr.bf16.gmra.mxu0 %v775
      %v823 = vpop.f32.mrf.mxu0
      %v824 = vadd.f32 0.0, %v823
      %v825 = vpop.f32.mrf.mxu0
      %v826 = vpop.f32.mrf.mxu0
      %v827 = vadd.f32 0.0, %v826
      %v828 = vpop.f32.mrf.mxu0
      %829 = vmatprep.mubr.bf16.mxu0 0
      %830 = vmatmul.mubr.bf16.gmra.mxu0 %v778
      %v831 = vpop.f32.mrf.mxu0
      %v832 = vadd.f32 0.0, %v831
      %v833 = vpop.f32.mrf.mxu0
      %v834 = vpop.f32.mrf.mxu0
      %v835 = vadd.f32 0.0, %v834
      %v836 = vpop.f32.mrf.mxu0
      %837 = vmatprep.mubr.bf16.mxu0 0
      %838 = vmatmul.mubr.bf16.gmra.mxu0 %v781
      %v839 = vpop.f32.mrf.mxu0
      %v840 = vadd.f32 0.0, %v839
      %v841 = vpop.f32.mrf.mxu0
      %v842 = vpop.f32.mrf.mxu0
      %v843 = vadd.f32 0.0, %v842
      %v844 = vpop.f32.mrf.mxu0
      %845 = vmatprep.mubr.bf16.mxu0 0
      %846 = vmatmul.mubr.bf16.gmra.mxu0 %v784
      %v847 = vpop.f32.mrf.mxu0
      %v848 = vadd.f32 0.0, %v847
      %v849 = vpop.f32.mrf.mxu0
      %v850 = vpop.f32.mrf.mxu0
      %v851 = vadd.f32 0.0, %v850
      %v852 = vpop.f32.mrf.mxu0
      %853 = vdwg.mxu0
      %v854 = vadd.f32 %v756, %v824
      %v855 = vadd.f32 %v757, %v827
      %v856 = vadd.f32 %v758, %v832
      %v857 = vadd.f32 %v759, %v835
      %v858 = vadd.f32 %v760, %v840
      %v859 = vadd.f32 %v761, %v843
      %v860 = vadd.f32 %v762, %v848
      %v861 = vadd.f32 %v763, %v851
      %s862 = scalar_lea.vmem %s1, 10
      %v863 = vld [vmem:[%s862] sm:$0x3]
      %864 = vrot.lane.b32.xlu0 %v574, 120
      %v865 = vpop.permute.xlu0 %864
      %866 = vrot.lane.b32.xlu0 %v575, 120
      %v867 = vpop.permute.xlu0 %866
      %868 = vrot.lane.b32.xlu0 %v576, 120
      %v869 = vpop.permute.xlu0 %868
      %870 = vrot.lane.b32.xlu0 %v577, 120
      %v871 = vpop.permute.xlu0 %870
      %v873 = vsel %vm271, %v865, 0
      %v876 = vsel %vm271, %v867, 0
      %v879 = vsel %vm271, %v869, 0
      %v882 = vsel %vm271, %v871, 0
      %v885 = vsel %vm284, %v863, 0
      %887 = vmatprep.subr.bf16.mxu0 0
      %888 = vmatpush1.bf16.msra.mxu0 0
      %889 = vmatprep.subr.bf16.mxu0 0
      %890 = vmatpush1.bf16.msra.mxu0 0
      %891 = vmatprep.subr.bf16.mxu0 0
      %892 = vmatpush1.bf16.msra.mxu0 0
      %893 = vmatprep.subr.bf16.mxu0 0
      %894 = vmatpush1.bf16.msra.mxu0 0
      %895 = vmatprep.subr.bf16.mxu0 0
      %896 = vmatpush1.bf16.msra.mxu0 0
      %897 = vmatprep.subr.bf16.mxu0 0
      %898 = vmatpush1.bf16.msra.mxu0 0
      %899 = vmatprep.subr.bf16.mxu0 0
      %900 = vmatpush1.bf16.msra.mxu0 0
      %901 = vmatprep.subr.bf16.mxu0 0
      %902 = vmatpush1.bf16.msra.mxu0 %v885
      %903 = vmatprep.subr.bf16.mxu0 0
      %904 = vmatpush2.bf16.msra.mxu0 0
      %905 = vmatprep.subr.bf16.mxu0 0
      %906 = vmatpush2.bf16.msra.mxu0 0
      %907 = vmatprep.subr.bf16.mxu0 0
      %908 = vmatpush2.bf16.msra.mxu0 0
      %909 = vmatprep.subr.bf16.mxu0 0
      %910 = vmatpush2.bf16.msra.mxu0 0
      %911 = vmatprep.subr.bf16.mxu0 0
      %912 = vmatpush2.bf16.msra.mxu0 0
      %913 = vmatprep.subr.bf16.mxu0 0
      %914 = vmatpush2.bf16.msra.mxu0 0
      %915 = vmatprep.subr.bf16.mxu0 0
      %916 = vmatpush2.bf16.msra.mxu0 0
      %917 = vmatprep.subr.bf16.mxu0 0
      %918 = vmatpush2.bf16.msra.mxu0 0
      %919 = vmatprep.mubr.bf16.mxu0 0
      %920 = vmatmul.mubr.bf16.gmra.mxu0 %v873
      %v921 = vpop.f32.mrf.mxu0
      %v922 = vadd.f32 0.0, %v921
      %v923 = vpop.f32.mrf.mxu0
      %v924 = vpop.f32.mrf.mxu0
      %v925 = vadd.f32 0.0, %v924
      %v926 = vpop.f32.mrf.mxu0
      %927 = vmatprep.mubr.bf16.mxu0 0
      %928 = vmatmul.mubr.bf16.gmra.mxu0 %v876
      %v929 = vpop.f32.mrf.mxu0
      %v930 = vadd.f32 0.0, %v929
      %v931 = vpop.f32.mrf.mxu0
      %v932 = vpop.f32.mrf.mxu0
      %v933 = vadd.f32 0.0, %v932
      %v934 = vpop.f32.mrf.mxu0
      %935 = vmatprep.mubr.bf16.mxu0 0
      %936 = vmatmul.mubr.bf16.gmra.mxu0 %v879
      %v937 = vpop.f32.mrf.mxu0
      %v938 = vadd.f32 0.0, %v937
      %v939 = vpop.f32.mrf.mxu0
      %v940 = vpop.f32.mrf.mxu0
      %v941 = vadd.f32 0.0, %v940
      %v942 = vpop.f32.mrf.mxu0
      %943 = vmatprep.mubr.bf16.mxu0 0
      %944 = vmatmul.mubr.bf16.gmra.mxu0 %v882
      %v945 = vpop.f32.mrf.mxu0
      %v946 = vadd.f32 0.0, %v945
      %v947 = vpop.f32.mrf.mxu0
      %v948 = vpop.f32.mrf.mxu0
      %v949 = vadd.f32 0.0, %v948
      %v950 = vpop.f32.mrf.mxu0
      %951 = vdwg.mxu0
      %v952 = vadd.f32 %v854, %v922
      %v953 = vadd.f32 %v855, %v925
      %v954 = vadd.f32 %v856, %v930
      %v955 = vadd.f32 %v857, %v933
      %v956 = vadd.f32 %v858, %v938
      %v957 = vadd.f32 %v859, %v941
      %v958 = vadd.f32 %v860, %v946
      %v959 = vadd.f32 %v861, %v949
      %s960 = sadd.s32 %s228, 1
      %s961 = smul.u32 %s960, 2
      %s962 = smul.addr %s961, 4
      %s963 = scalar_lea.vmem %s214, %s962
      %v964 = vld [vmem:[%s963] sm:$0xf]
      %v965 = vld [vmem:[%s963 + $0x8] sm:$0xf]
      %v966 = vld [vmem:[%s963 + $0x10] sm:$0xf]
      %v967 = vld [vmem:[%s963 + $0x18] sm:$0xf]
      %v968 = vld [vmem:[%s963 + $0x20] sm:$0xf]
      %v969 = vld [vmem:[%s963 + $0x28] sm:$0xf]
      %v970 = vld [vmem:[%s963 + $0x30] sm:$0xf]
      %v971 = vld [vmem:[%s963 + $0x38] sm:$0xf]
      %s972 = scalar_lea.vmem %s1, 12
      %v973 = vld [vmem:[%s972] sm:$0x3]
      %v982 = vunpack.c.l.b16 %v964
      %v983 = vunpack.c.l.b16 %v965
      %v984 = vunpack.c.l.b16 %v966
      %v985 = vunpack.c.l.b16 %v967
      %v986 = vunpack.c.l.b16 %v968
      %v987 = vunpack.c.l.b16 %v969
      %v988 = vunpack.c.l.b16 %v970
      %v989 = vunpack.c.l.b16 %v971
      %v990 = vpack.c.b16 %v983, %v982
      %v991 = vpack.c.b16 %v985, %v984
      %v992 = vpack.c.b16 %v987, %v986
      %v993 = vpack.c.b16 %v989, %v988
      %v995 = vsel %vm271, %v990, 0
      %v998 = vsel %vm271, %v991, 0
      %v1001 = vsel %vm271, %v992, 0
      %v1004 = vsel %vm271, %v993, 0
      %v1007 = vsel %vm284, %v973, 0
      %1009 = vmatprep.subr.bf16.mxu0 0
      %1010 = vmatpush1.bf16.msra.mxu0 0
      %1011 = vmatprep.subr.bf16.mxu0 0
      %1012 = vmatpush1.bf16.msra.mxu0 0
      %1013 = vmatprep.subr.bf16.mxu0 0
      %1014 = vmatpush1.bf16.msra.mxu0 0
      %1015 = vmatprep.subr.bf16.mxu0 0
      %1016 = vmatpush1.bf16.msra.mxu0 0
      %1017 = vmatprep.subr.bf16.mxu0 0
      %1018 = vmatpush1.bf16.msra.mxu0 0
      %1019 = vmatprep.subr.bf16.mxu0 0
      %1020 = vmatpush1.bf16.msra.mxu0 0
      %1021 = vmatprep.subr.bf16.mxu0 0
      %1022 = vmatpush1.bf16.msra.mxu0 0
      %1023 = vmatprep.subr.bf16.mxu0 0
      %1024 = vmatpush1.bf16.msra.mxu0 %v1007
      %1025 = vmatprep.subr.bf16.mxu0 0
      %1026 = vmatpush2.bf16.msra.mxu0 0
      %1027 = vmatprep.subr.bf16.mxu0 0
      %1028 = vmatpush2.bf16.msra.mxu0 0
      %1029 = vmatprep.subr.bf16.mxu0 0
      %1030 = vmatpush2.bf16.msra.mxu0 0
      %1031 = vmatprep.subr.bf16.mxu0 0
      %1032 = vmatpush2.bf16.msra.mxu0 0
      %1033 = vmatprep.subr.bf16.mxu0 0
      %1034 = vmatpush2.bf16.msra.mxu0 0
      %1035 = vmatprep.subr.bf16.mxu0 0
      %1036 = vmatpush2.bf16.msra.mxu0 0
      %1037 = vmatprep.subr.bf16.mxu0 0
      %1038 = vmatpush2.bf16.msra.mxu0 0
      %1039 = vmatprep.subr.bf16.mxu0 0
      %1040 = vmatpush2.bf16.msra.mxu0 0
      %1041 = vmatprep.mubr.bf16.mxu0 0
      %1042 = vmatmul.mubr.bf16.gmra.mxu0 %v995
      %v1043 = vpop.f32.mrf.mxu0
      %v1044 = vadd.f32 0.0, %v1043
      %v1045 = vpop.f32.mrf.mxu0
      %v1046 = vpop.f32.mrf.mxu0
      %v1047 = vadd.f32 0.0, %v1046
      %v1048 = vpop.f32.mrf.mxu0
      %1049 = vmatprep.mubr.bf16.mxu0 0
      %1050 = vmatmul.mubr.bf16.gmra.mxu0 %v998
      %v1051 = vpop.f32.mrf.mxu0
      %v1052 = vadd.f32 0.0, %v1051
      %v1053 = vpop.f32.mrf.mxu0
      %v1054 = vpop.f32.mrf.mxu0
      %v1055 = vadd.f32 0.0, %v1054
      %v1056 = vpop.f32.mrf.mxu0
      %1057 = vmatprep.mubr.bf16.mxu0 0
      %1058 = vmatmul.mubr.bf16.gmra.mxu0 %v1001
      %v1059 = vpop.f32.mrf.mxu0
      %v1060 = vadd.f32 0.0, %v1059
      %v1061 = vpop.f32.mrf.mxu0
      %v1062 = vpop.f32.mrf.mxu0
      %v1063 = vadd.f32 0.0, %v1062
      %v1064 = vpop.f32.mrf.mxu0
      %1065 = vmatprep.mubr.bf16.mxu0 0
      %1066 = vmatmul.mubr.bf16.gmra.mxu0 %v1004
      %v1067 = vpop.f32.mrf.mxu0
      %v1068 = vadd.f32 0.0, %v1067
      %v1069 = vpop.f32.mrf.mxu0
      %v1070 = vpop.f32.mrf.mxu0
      %v1071 = vadd.f32 0.0, %v1070
      %v1072 = vpop.f32.mrf.mxu0
      %1073 = vdwg.mxu0
      %v1074 = vadd.f32 %v952, %v1044
      %v1075 = vadd.f32 %v953, %v1047
      %v1076 = vadd.f32 %v954, %v1052
      %v1077 = vadd.f32 %v955, %v1055
      %v1078 = vadd.f32 %v956, %v1060
      %v1079 = vadd.f32 %v957, %v1063
      %v1080 = vadd.f32 %v958, %v1068
      %v1081 = vadd.f32 %v959, %v1071
      %s1082 = scalar_lea.vmem %s1, 14
      %v1083 = vld [vmem:[%s1082] sm:$0x3]
      %1084 = vrot.lane.b32.xlu0 %v990, 124
      %v1085 = vpop.permute.xlu0 %1084
      %1086 = vrot.lane.b32.xlu0 %v991, 124
      %v1087 = vpop.permute.xlu0 %1086
      %1088 = vrot.lane.b32.xlu0 %v992, 124
      %v1089 = vpop.permute.xlu0 %1088
      %1090 = vrot.lane.b32.xlu0 %v993, 124
      %v1091 = vpop.permute.xlu0 %1090
      %v1093 = vsel %vm271, %v1085, 0
      %v1096 = vsel %vm271, %v1087, 0
      %v1099 = vsel %vm271, %v1089, 0
      %v1102 = vsel %vm271, %v1091, 0
      %v1105 = vsel %vm284, %v1083, 0
      %1107 = vmatprep.subr.bf16.mxu0 0
      %1108 = vmatpush1.bf16.msra.mxu0 0
      %1109 = vmatprep.subr.bf16.mxu0 0
      %1110 = vmatpush1.bf16.msra.mxu0 0
      %1111 = vmatprep.subr.bf16.mxu0 0
      %1112 = vmatpush1.bf16.msra.mxu0 0
      %1113 = vmatprep.subr.bf16.mxu0 0
      %1114 = vmatpush1.bf16.msra.mxu0 0
      %1115 = vmatprep.subr.bf16.mxu0 0
      %1116 = vmatpush1.bf16.msra.mxu0 0
      %1117 = vmatprep.subr.bf16.mxu0 0
      %1118 = vmatpush1.bf16.msra.mxu0 0
      %1119 = vmatprep.subr.bf16.mxu0 0
      %1120 = vmatpush1.bf16.msra.mxu0 0
      %1121 = vmatprep.subr.bf16.mxu0 0
      %1122 = vmatpush1.bf16.msra.mxu0 %v1105
      %1123 = vmatprep.subr.bf16.mxu0 0
      %1124 = vmatpush2.bf16.msra.mxu0 0
      %1125 = vmatprep.subr.bf16.mxu0 0
      %1126 = vmatpush2.bf16.msra.mxu0 0
      %1127 = vmatprep.subr.bf16.mxu0 0
      %1128 = vmatpush2.bf16.msra.mxu0 0
      %1129 = vmatprep.subr.bf16.mxu0 0
      %1130 = vmatpush2.bf16.msra.mxu0 0
      %1131 = vmatprep.subr.bf16.mxu0 0
      %1132 = vmatpush2.bf16.msra.mxu0 0
      %1133 = vmatprep.subr.bf16.mxu0 0
      %1134 = vmatpush2.bf16.msra.mxu0 0
      %1135 = vmatprep.subr.bf16.mxu0 0
      %1136 = vmatpush2.bf16.msra.mxu0 0
      %1137 = vmatprep.subr.bf16.mxu0 0
      %1138 = vmatpush2.bf16.msra.mxu0 0
      %1139 = vmatprep.mubr.bf16.mxu0 0
      %1140 = vmatmul.mubr.bf16.gmra.mxu0 %v1093
      %v1141 = vpop.f32.mrf.mxu0
      %v1142 = vadd.f32 0.0, %v1141
      %v1143 = vpop.f32.mrf.mxu0
      %v1144 = vpop.f32.mrf.mxu0
      %v1145 = vadd.f32 0.0, %v1144
      %v1146 = vpop.f32.mrf.mxu0
      %1147 = vmatprep.mubr.bf16.mxu0 0
      %1148 = vmatmul.mubr.bf16.gmra.mxu0 %v1096
      %v1149 = vpop.f32.mrf.mxu0
      %v1150 = vadd.f32 0.0, %v1149
      %v1151 = vpop.f32.mrf.mxu0
      %v1152 = vpop.f32.mrf.mxu0
      %v1153 = vadd.f32 0.0, %v1152
      %v1154 = vpop.f32.mrf.mxu0
      %1155 = vmatprep.mubr.bf16.mxu0 0
      %1156 = vmatmul.mubr.bf16.gmra.mxu0 %v1099
      %v1157 = vpop.f32.mrf.mxu0
      %v1158 = vadd.f32 0.0, %v1157
      %v1159 = vpop.f32.mrf.mxu0
      %v1160 = vpop.f32.mrf.mxu0
      %v1161 = vadd.f32 0.0, %v1160
      %v1162 = vpop.f32.mrf.mxu0
      %1163 = vmatprep.mubr.bf16.mxu0 0
      %1164 = vmatmul.mubr.bf16.gmra.mxu0 %v1102
      %v1165 = vpop.f32.mrf.mxu0
      %v1166 = vadd.f32 0.0, %v1165
      %v1167 = vpop.f32.mrf.mxu0
      %v1168 = vpop.f32.mrf.mxu0
      %v1169 = vadd.f32 0.0, %v1168
      %v1170 = vpop.f32.mrf.mxu0
      %1171 = vdwg.mxu0
      %v1172 = vadd.f32 %v1074, %v1142
      %v1173 = vadd.f32 %v1075, %v1145
      %v1174 = vadd.f32 %v1076, %v1150
      %v1175 = vadd.f32 %v1077, %v1153
      %v1176 = vadd.f32 %v1078, %v1158
      %v1177 = vadd.f32 %v1079, %v1161
      %v1178 = vadd.f32 %v1080, %v1166
      %v1179 = vadd.f32 %v1081, %v1169
      %v1180 = vld [vmem:[%s963] sm:$0xf]
      %v1181 = vld [vmem:[%s963 + $0x4] sm:$0x1]
      %v1182 = vld [vmem:[%s963 + $0x8] sm:$0xf]
      %v1183 = vld [vmem:[%s963 + $0xc] sm:$0x1]
      %v1184 = vld [vmem:[%s963 + $0x10] sm:$0xf]
      %v1185 = vld [vmem:[%s963 + $0x14] sm:$0x1]
      %v1186 = vld [vmem:[%s963 + $0x18] sm:$0xf]
      %v1187 = vld [vmem:[%s963 + $0x1c] sm:$0x1]
      %v1188 = vld [vmem:[%s963 + $0x20] sm:$0xf]
      %v1189 = vld [vmem:[%s963 + $0x24] sm:$0x1]
      %v1190 = vld [vmem:[%s963 + $0x28] sm:$0xf]
      %v1191 = vld [vmem:[%s963 + $0x2c] sm:$0x1]
      %v1192 = vld [vmem:[%s963 + $0x30] sm:$0xf]
      %v1193 = vld [vmem:[%s963 + $0x34] sm:$0x1]
      %v1194 = vld [vmem:[%s963 + $0x38] sm:$0xf]
      %v1195 = vld [vmem:[%s963 + $0x3c] sm:$0x1]
      %v1197 = vshrl.u32 %v1180, 16
      %v1199 = vrot.slane %v1197, 4
      %v1200 = vshll.u32 %v1180, 16
      %v1202 = vrot.slane %v1200, 5
      %v1203 = vor.u32 %v1199, %v1202
      %v1204 = vrot.slane %v1203, 4
      %v1206 = vshll.u32 %v1181, 16
      %v1208 = vrot.slane %v1206, 5
      %v1209 = vsel %vm451, %v1204, %v1208
      %v1211 = vshrl.u32 %v1182, 16
      %v1213 = vrot.slane %v1211, 4
      %v1214 = vshll.u32 %v1182, 16
      %v1216 = vrot.slane %v1214, 5
      %v1217 = vor.u32 %v1213, %v1216
      %v1218 = vrot.slane %v1217, 4
      %v1220 = vshll.u32 %v1183, 16
      %v1222 = vrot.slane %v1220, 5
      %v1223 = vsel %vm451, %v1218, %v1222
      %v1225 = vshrl.u32 %v1184, 16
      %v1227 = vrot.slane %v1225, 4
      %v1228 = vshll.u32 %v1184, 16
      %v1230 = vrot.slane %v1228, 5
      %v1231 = vor.u32 %v1227, %v1230
      %v1232 = vrot.slane %v1231, 4
      %v1234 = vshll.u32 %v1185, 16
      %v1236 = vrot.slane %v1234, 5
      %v1237 = vsel %vm451, %v1232, %v1236
      %v1239 = vshrl.u32 %v1186, 16
      %v1241 = vrot.slane %v1239, 4
      %v1242 = vshll.u32 %v1186, 16
      %v1244 = vrot.slane %v1242, 5
      %v1245 = vor.u32 %v1241, %v1244
      %v1246 = vrot.slane %v1245, 4
      %v1248 = vshll.u32 %v1187, 16
      %v1250 = vrot.slane %v1248, 5
      %v1251 = vsel %vm451, %v1246, %v1250
      %v1253 = vshrl.u32 %v1188, 16
      %v1255 = vrot.slane %v1253, 4
      %v1256 = vshll.u32 %v1188, 16
      %v1258 = vrot.slane %v1256, 5
      %v1259 = vor.u32 %v1255, %v1258
      %v1260 = vrot.slane %v1259, 4
      %v1262 = vshll.u32 %v1189, 16
      %v1264 = vrot.slane %v1262, 5
      %v1265 = vsel %vm451, %v1260, %v1264
      %v1267 = vshrl.u32 %v1190, 16
      %v1269 = vrot.slane %v1267, 4
      %v1270 = vshll.u32 %v1190, 16
      %v1272 = vrot.slane %v1270, 5
      %v1273 = vor.u32 %v1269, %v1272
      %v1274 = vrot.slane %v1273, 4
      %v1276 = vshll.u32 %v1191, 16
      %v1278 = vrot.slane %v1276, 5
      %v1279 = vsel %vm451, %v1274, %v1278
      %v1281 = vshrl.u32 %v1192, 16
      %v1283 = vrot.slane %v1281, 4
      %v1284 = vshll.u32 %v1192, 16
      %v1286 = vrot.slane %v1284, 5
      %v1287 = vor.u32 %v1283, %v1286
      %v1288 = vrot.slane %v1287, 4
      %v1290 = vshll.u32 %v1193, 16
      %v1292 = vrot.slane %v1290, 5
      %v1293 = vsel %vm451, %v1288, %v1292
      %v1295 = vshrl.u32 %v1194, 16
      %v1297 = vrot.slane %v1295, 4
      %v1298 = vshll.u32 %v1194, 16
      %v1300 = vrot.slane %v1298, 5
      %v1301 = vor.u32 %v1297, %v1300
      %v1302 = vrot.slane %v1301, 4
      %v1304 = vshll.u32 %v1195, 16
      %v1306 = vrot.slane %v1304, 5
      %v1307 = vsel %vm451, %v1302, %v1306
      %s1308 = scalar_lea.vmem %s1, 16
      %v1309 = vld [vmem:[%s1308] sm:$0x3]
      %v1310 = vunpack.c.l.b16 %v1209
      %v1311 = vunpack.c.l.b16 %v1223
      %v1312 = vunpack.c.l.b16 %v1237
      %v1313 = vunpack.c.l.b16 %v1251
      %v1314 = vunpack.c.l.b16 %v1265
      %v1315 = vunpack.c.l.b16 %v1279
      %v1316 = vunpack.c.l.b16 %v1293
      %v1317 = vunpack.c.l.b16 %v1307
      %v1318 = vpack.c.b16 %v1311, %v1310
      %v1319 = vpack.c.b16 %v1313, %v1312
      %v1320 = vpack.c.b16 %v1315, %v1314
      %v1321 = vpack.c.b16 %v1317, %v1316
      %v1323 = vsel %vm271, %v1318, 0
      %v1326 = vsel %vm271, %v1319, 0
      %v1329 = vsel %vm271, %v1320, 0
      %v1332 = vsel %vm271, %v1321, 0
      %v1335 = vsel %vm284, %v1309, 0
      %1337 = vmatprep.subr.bf16.mxu0 0
      %1338 = vmatpush1.bf16.msra.mxu0 0
      %1339 = vmatprep.subr.bf16.mxu0 0
      %1340 = vmatpush1.bf16.msra.mxu0 0
      %1341 = vmatprep.subr.bf16.mxu0 0
      %1342 = vmatpush1.bf16.msra.mxu0 0
      %1343 = vmatprep.subr.bf16.mxu0 0
      %1344 = vmatpush1.bf16.msra.mxu0 0
      %1345 = vmatprep.subr.bf16.mxu0 0
      %1346 = vmatpush1.bf16.msra.mxu0 0
      %1347 = vmatprep.subr.bf16.mxu0 0
      %1348 = vmatpush1.bf16.msra.mxu0 0
      %1349 = vmatprep.subr.bf16.mxu0 0
      %1350 = vmatpush1.bf16.msra.mxu0 0
      %1351 = vmatprep.subr.bf16.mxu0 0
      %1352 = vmatpush1.bf16.msra.mxu0 %v1335
      %1353 = vmatprep.subr.bf16.mxu0 0
      %1354 = vmatpush2.bf16.msra.mxu0 0
      %1355 = vmatprep.subr.bf16.mxu0 0
      %1356 = vmatpush2.bf16.msra.mxu0 0
      %1357 = vmatprep.subr.bf16.mxu0 0
      %1358 = vmatpush2.bf16.msra.mxu0 0
      %1359 = vmatprep.subr.bf16.mxu0 0
      %1360 = vmatpush2.bf16.msra.mxu0 0
      %1361 = vmatprep.subr.bf16.mxu0 0
      %1362 = vmatpush2.bf16.msra.mxu0 0
      %1363 = vmatprep.subr.bf16.mxu0 0
      %1364 = vmatpush2.bf16.msra.mxu0 0
      %1365 = vmatprep.subr.bf16.mxu0 0
      %1366 = vmatpush2.bf16.msra.mxu0 0
      %1367 = vmatprep.subr.bf16.mxu0 0
      %1368 = vmatpush2.bf16.msra.mxu0 0
      %1369 = vmatprep.mubr.bf16.mxu0 0
      %1370 = vmatmul.mubr.bf16.gmra.mxu0 %v1323
      %v1371 = vpop.f32.mrf.mxu0
      %v1372 = vadd.f32 0.0, %v1371
      %v1373 = vpop.f32.mrf.mxu0
      %v1374 = vpop.f32.mrf.mxu0
      %v1375 = vadd.f32 0.0, %v1374
      %v1376 = vpop.f32.mrf.mxu0
      %1377 = vmatprep.mubr.bf16.mxu0 0
      %1378 = vmatmul.mubr.bf16.gmra.mxu0 %v1326
      %v1379 = vpop.f32.mrf.mxu0
      %v1380 = vadd.f32 0.0, %v1379
      %v1381 = vpop.f32.mrf.mxu0
      %v1382 = vpop.f32.mrf.mxu0
      %v1383 = vadd.f32 0.0, %v1382
      %v1384 = vpop.f32.mrf.mxu0
      %1385 = vmatprep.mubr.bf16.mxu0 0
      %1386 = vmatmul.mubr.bf16.gmra.mxu0 %v1329
      %v1387 = vpop.f32.mrf.mxu0
      %v1388 = vadd.f32 0.0, %v1387
      %v1389 = vpop.f32.mrf.mxu0
      %v1390 = vpop.f32.mrf.mxu0
      %v1391 = vadd.f32 0.0, %v1390
      %v1392 = vpop.f32.mrf.mxu0
      %1393 = vmatprep.mubr.bf16.mxu0 0
      %1394 = vmatmul.mubr.bf16.gmra.mxu0 %v1332
      %v1395 = vpop.f32.mrf.mxu0
      %v1396 = vadd.f32 0.0, %v1395
      %v1397 = vpop.f32.mrf.mxu0
      %v1398 = vpop.f32.mrf.mxu0
      %v1399 = vadd.f32 0.0, %v1398
      %v1400 = vpop.f32.mrf.mxu0
      %1401 = vdwg.mxu0
      %v1402 = vadd.f32 %v1172, %v1372
      %v1403 = vadd.f32 %v1173, %v1375
      %v1404 = vadd.f32 %v1174, %v1380
      %v1405 = vadd.f32 %v1175, %v1383
      %v1406 = vadd.f32 %v1176, %v1388
      %v1407 = vadd.f32 %v1177, %v1391
      %v1408 = vadd.f32 %v1178, %v1396
      %v1409 = vadd.f32 %v1179, %v1399
      %v1410 = vld [vmem:[%s2] sm:$0x1]
      %v1412 = vlaneseq
      %v1413 = vshrl.u32 %v1412, 7
      %v1414 = vsub.s32 0, %v1413
      %v1415 = vrot.slane %v1410, %v1414
      %v1417 = vadd.f32 %v1402, %v1415
      %v1418 = vadd.f32 %v1403, %v1415
      %v1419 = vadd.f32 %v1404, %v1415
      %v1420 = vadd.f32 %v1405, %v1415
      %v1421 = vadd.f32 %v1406, %v1415
      %v1422 = vadd.f32 %v1407, %v1415
      %v1423 = vadd.f32 %v1408, %v1415
      %v1424 = vadd.f32 %v1409, %v1415
      %1425 = vst [vmem:[%s220] sm:$0xff] %v1417
      %1426 = vst [vmem:[%s220 + $0x8] sm:$0xff] %v1418
      %1427 = vst [vmem:[%s220 + $0x10] sm:$0xff] %v1419
      %1428 = vst [vmem:[%s220 + $0x18] sm:$0xff] %v1420
      %1429 = vst [vmem:[%s220 + $0x20] sm:$0xff] %v1421
      %1430 = vst [vmem:[%s220 + $0x28] sm:$0xff] %v1422
      %1431 = vst [vmem:[%s220 + $0x30] sm:$0xff] %v1423
      %1432 = vst [vmem:[%s220 + $0x38] sm:$0xff] %v1424
      %v1433 = vadd.f32 %v1417, %v1418
      %v1434 = vadd.f32 %v1433, %v1419
      %v1435 = vadd.f32 %v1434, %v1420
      %v1436 = vadd.f32 %v1435, %v1421
      %v1437 = vadd.f32 %v1436, %v1422
      %v1438 = vadd.f32 %v1437, %v1423
      %v1439 = vadd.f32 %v1438, %v1424
      %v1440 = vrot.slane %v1439, 4
      %v1441 = vadd.f32 %v1439, %v1440
      %v1442 = vrot.slane %v1441, 2
      %v1443 = vadd.f32 %v1441, %v1442
      %v1444 = vrot.slane %v1443, 1
      %v1445 = vadd.f32 %v1443, %v1444
      %v1446 = vmul.f32 %v1417, %v1417
      %v1447 = vmul.f32 %v1418, %v1418
      %v1448 = vmul.f32 %v1419, %v1419
      %v1449 = vmul.f32 %v1420, %v1420
      %v1450 = vmul.f32 %v1421, %v1421
      %v1451 = vmul.f32 %v1422, %v1422
      %v1452 = vmul.f32 %v1423, %v1423
      %v1453 = vmul.f32 %v1424, %v1424
      %v1454 = vadd.f32 %v1446, %v1447
      %v1455 = vadd.f32 %v1454, %v1448
      %v1456 = vadd.f32 %v1455, %v1449
      %v1457 = vadd.f32 %v1456, %v1450
      %v1458 = vadd.f32 %v1457, %v1451
      %v1459 = vadd.f32 %v1458, %v1452
      %v1460 = vadd.f32 %v1459, %v1453
      %v1461 = vrot.slane %v1460, 4
      %v1462 = vadd.f32 %v1460, %v1461
      %v1463 = vrot.slane %v1462, 2
      %v1464 = vadd.f32 %v1462, %v1463
      %v1465 = vrot.slane %v1464, 1
      %v1466 = vadd.f32 %v1464, %v1465
      %p1467 = scmp.eq.s32.totalorder %s21, 0
      // Predicated region
      $region33: #{resblock_forward.8} parent=31 // pred_check
        %p1468 = pneg %p1467
      $region34: #{resblock_forward.8} parent=31 // pred_check_branch
        %1470 = sbr.rel (%p1468) target = $region36
      $region35: #{resblock_forward.8} parent=31 // pred_region
        %1471 = vst [vmem:[%s226] sm:$0x1] %v1445
        %1472 = vst [vmem:[%s226 + $0x1] sm:$0x1] %v1466
      $region36: #{resblock_forward.8} parent=31 // pred_fallthru
        _
      %p1473 = scmp.ne.s32.totalorder %s21, 0
      // Predicated region
      $region37: #{resblock_forward.8} parent=31 // pred_check
        %p1474 = pneg %p1473
      $region38: #{resblock_forward.8} parent=31 // pred_check_branch
        %1476 = sbr.rel (%p1474) target = $region40
      $region39: #{resblock_forward.8} parent=31 // pred_region
        %v1477 = vld [vmem:[%s226] sm:$0x1]
        %v1478 = vadd.f32 %v1477, %v1445
        %1479 = vst [vmem:[%s226] sm:$0x1] %v1478
        %v1480 = vld [vmem:[%s226 + $0x1] sm:$0x1]
        %v1481 = vadd.f32 %v1480, %v1466
        %1482 = vst [vmem:[%s226 + $0x1] sm:$0x1] %v1481
      $region40: #{resblock_forward.8} parent=31 // pred_fallthru
        _
      %s1483 = sadd.s32 %s20, %s21
      %s1484 = smul.u32 8, %s1483
      %p1485 = scmp.lt.s32.totalorder %s1484, 15
      %s1486 = scalar_select %p1485, %s1484, 15
      %s1487 = smul.addr %s1486, 8
      %s1488 = scalar_lea.vmem %s3, %s1487
      %p1489 = scmp.lt.s32.totalorder %s20, 1
      %s1490 = scalar_select %p1489, %s20, 1
      %s1491 = smul.addr %s1490, 2
      %s1492 = scalar_lea.vmem %s4, %s1491
      // Predicated region
      $region41: #{resblock_forward.8} parent=31 // pred_check
        %p1493 = pneg %p116
      $region42: #{resblock_forward.8} parent=31 // pred_check_branch
        %1495 = sbr.rel (%p1493) target = $region44
      $region43: #{resblock_forward.8} parent=31 // pred_region
        %s1496 = sadd.s32 %s20, %s21
        %s1497 = smul.u32 8, %s1496
      $region44: #{resblock_forward.8} parent=31 // pred_fallthru
        _
      // Predicated region
      $region45: #{resblock_forward.8} parent=31 // pred_check
        %p1498 = pneg %p142
      $region46: #{resblock_forward.8} parent=31 // pred_check_branch
        %1500 = sbr.rel (%p1498) target = $region48
      $region47: #{resblock_forward.8} parent=31 // pred_region
        _
      $region48: #{resblock_forward.8} parent=31 // pred_fallthru
        _
    $region32: #{resblock_forward.8} parent=5 // pred_fallthru
      _
    %p1501 = scmp.le.s32.totalorder 2, %s11
    // Predicated region
    $region49: #{resblock_forward.8} parent=5 // pred_check
      %p1502 = pneg %p1501
    $region50: #{resblock_forward.8} parent=5 // pred_check_branch
      %1504 = sbr.rel (%p1502) target = $region52
    $region51: #{resblock_forward.8} parent=5 // pred_region
      %s1505 = ssub.s32 %s11, 2
      // Predicated region
      $region53: #{resblock_forward.8} parent=51 // pred_check
        %p1506 = pneg %p122
      $region54: #{resblock_forward.8} parent=51 // pred_check_branch
        %1508 = sbr.rel (%p1506) target = $region56
      $region55: #{resblock_forward.8} parent=51 // pred_region
        %s1509 = sadd.s32 %s22, %s23
        %s1510 = smul.u32 8, %s1509
        %p1511 = scmp.lt.s32.totalorder %s1510, 15
        %s1512 = scalar_select %p1511, %s1510, 15
        %s1513 = smul.addr %s1512, 8
        %s1514 = scalar_lea.vmem %s3, %s1513
      $region56: #{resblock_forward.8} parent=51 // pred_fallthru
        _
      // Predicated region
      $region57: #{resblock_forward.8} parent=51 // pred_check
        %p1515 = pneg %p148
      $region58: #{resblock_forward.8} parent=51 // pred_check_branch
        %1517 = sbr.rel (%p1515) target = $region60
      $region59: #{resblock_forward.8} parent=51 // pred_region
        %p1518 = scmp.lt.s32.totalorder %s22, 1
        %s1519 = scalar_select %p1518, %s22, 1
        %s1520 = smul.addr %s1519, 2
        %s1521 = scalar_lea.vmem %s4, %s1520
      $region60: #{resblock_forward.8} parent=51 // pred_fallthru
        _
    $region52: #{resblock_forward.8} parent=5 // pred_fallthru
      _
  $region6: #{resblock_forward.8} parent=0 // loop_footer
    %s15 = sadd.s32 1, %s11
  $region7: #{resblock_forward.8} parent=0 // loop_footer_branch
    %10 = sbr.rel target = $region3
  $region8: #{resblock_forward.8} parent=0 // loop_exit
    _

// kernel: resblock_forward.11
$region0: #{resblock_forward.11}
  #allocation0 [shape = 'u32[]', space=smem, size = 0x4, offset = 0x4, fixed_abs, tag = 'smem constant byte address 0x4 - core index']
  #allocation1 [shape = 'u32[144,128]{1,0:T(1,128)}', space=vmem, size = 0x12000, scoped, tag = 'internal scratch']
  %s0 = inlined_call_operand.vmem [shape: f32[128,128], index: 0, kind: input, shape index: {}]
  %s1 = inlined_call_operand.vmem [shape: f32[2,2,128], index: 1, kind: input, shape index: {}]
  %s2 = inlined_call_operand.vmem [shape: f32[1,128], index: 2, kind: input, shape index: {}]
  %s3 = inlined_call_operand.vmem [shape: f32[1,128], index: 3, kind: input, shape index: {}]
  %s4 = inlined_call_operand.vmem [shape: bf16[128,128], index: 4, kind: input, shape index: {}]
  %s5 = inlined_call_operand.vmem [shape: f32[128,128], index: 5, kind: output, shape index: {}]
  %s6 = sld [smem:[#allocation0]]
  $region53: #{resblock_forward.11} parent=0
    _
  %s8 = ssub.s32 1, %s6
  %s9 = scalar_select 0, %s8, %s6
  loop: start=0, step=1, limit=4
  $region2: #{resblock_forward.11} parent=0 // loop_pre_header
    _
  $region3: #{resblock_forward.11} parent=0 // loop_header
    %s11 = sphi 0, %s15
    %p12 = scmp.ge.s32.totalorder %s11, 4
    %s21 = sphi 0, %s23
    %s24 = sphi 0, %s21
    %s25 = sphi 0, %s24
    %s41 = sphi 0, %s25
    %s45 = sphi 0, %s45
    %s47 = sphi 0, %s45
    %s48 = sphi 0, %s47
    %s62 = sphi 0, %s48
    %s66 = sphi 0, %s66
    %s68 = sphi 0, %s66
    %s69 = sphi 0, %s68
    %s83 = sphi 0, %s69
    %s87 = sphi 0, %s87
    %s89 = sphi 0, %s87
    %s90 = sphi 0, %s89
    %s104 = sphi 0, %s90
    %s110 = sphi 0, %s112
    %s113 = sphi 0, %s110
    %s114 = sphi 0, %s113
    %s130 = sphi 0, %s114
    %s136 = sphi 0, %s138
    %s139 = sphi 0, %s136
    %s140 = sphi 0, %s139
    %s156 = sphi 0, %s140
  $region4: #{resblock_forward.11} parent=0 // loop_header_branch
    %14 = sbr.rel (%p12) target = $region8
  $region5: #{resblock_forward.11} parent=0 // loop_body
    %s16 = ssub.s32 %s11, 1
    %s17 = ssub.s32 %s11, 2
    %s18 = sadd.s32 %s11, 1
    %s19 = ssub.s32 %s11, %s18
    %p20 = scmp.eq.s32.totalorder %s19, 0
    %s22 = sadd.s32 %s21, 1
    %s23 = scalar_select %p20, %s21, %s22
    %p26 = pneg %p20
    %p27 = scmp.eq.s32.totalorder %s11, 1
    %p28 = por %p26, %p27
    %p29 = scmp.ne.s32.totalorder %s21, %s24
    %p30 = scmp.eq.s32.totalorder %s11, 0
    %p31 = por %p29, %p30
    %p32 = scmp.ne.s32.totalorder %s21, %s24
    %p33 = scmp.eq.s32.totalorder %s16, 1
    %p34 = por %p32, %p33
    %p35 = scmp.ne.s32.totalorder %s24, %s25
    %p36 = scmp.eq.s32.totalorder %s16, 0
    %p37 = por %p35, %p36
    %p38 = scmp.ne.s32.totalorder %s24, %s25
    %p39 = scmp.eq.s32.totalorder %s17, 1
    %p40 = por %p38, %p39
    %p42 = scmp.ne.s32.totalorder %s25, %s41
    %p43 = scmp.eq.s32.totalorder %s17, 0
    %p44 = por %p42, %p43
    %s46 = sadd.s32 %s45, 1
    %p49 = scmp.eq.s32.totalorder %s11, 1
    %p50 = scmp.ne.s32.totalorder %s45, %s47
    %p51 = scmp.eq.s32.totalorder %s11, 0
    %p52 = por %p50, %p51
    %p53 = scmp.ne.s32.totalorder %s45, %s47
    %p54 = scmp.eq.s32.totalorder %s16, 1
    %p55 = por %p53, %p54
    %p56 = scmp.ne.s32.totalorder %s47, %s48
    %p57 = scmp.eq.s32.totalorder %s16, 0
    %p58 = por %p56, %p57
    %p59 = scmp.ne.s32.totalorder %s47, %s48
    %p60 = scmp.eq.s32.totalorder %s17, 1
    %p61 = por %p59, %p60
    %p63 = scmp.ne.s32.totalorder %s48, %s62
    %p64 = scmp.eq.s32.totalorder %s17, 0
    %p65 = por %p63, %p64
    %s67 = sadd.s32 %s66, 1
    %p70 = scmp.eq.s32.totalorder %s11, 1
    %p71 = scmp.ne.s32.totalorder %s66, %s68
    %p72 = scmp.eq.s32.totalorder %s11, 0
    %p73 = por %p71, %p72
    %p74 = scmp.ne.s32.totalorder %s66, %s68
    %p75 = scmp.eq.s32.totalorder %s16, 1
    %p76 = por %p74, %p75
    %p77 = scmp.ne.s32.totalorder %s68, %s69
    %p78 = scmp.eq.s32.totalorder %s16, 0
    %p79 = por %p77, %p78
    %p80 = scmp.ne.s32.totalorder %s68, %s69
    %p81 = scmp.eq.s32.totalorder %s17, 1
    %p82 = por %p80, %p81
    %p84 = scmp.ne.s32.totalorder %s69, %s83
    %p85 = scmp.eq.s32.totalorder %s17, 0
    %p86 = por %p84, %p85
    %s88 = sadd.s32 %s87, 1
    %p91 = scmp.eq.s32.totalorder %s11, 1
    %p92 = scmp.ne.s32.totalorder %s87, %s89
    %p93 = scmp.eq.s32.totalorder %s11, 0
    %p94 = por %p92, %p93
    %p95 = scmp.ne.s32.totalorder %s87, %s89
    %p96 = scmp.eq.s32.totalorder %s16, 1
    %p97 = por %p95, %p96
    %p98 = scmp.ne.s32.totalorder %s89, %s90
    %p99 = scmp.eq.s32.totalorder %s16, 0
    %p100 = por %p98, %p99
    %p101 = scmp.ne.s32.totalorder %s89, %s90
    %p102 = scmp.eq.s32.totalorder %s17, 1
    %p103 = por %p101, %p102
    %p105 = scmp.ne.s32.totalorder %s90, %s104
    %p106 = scmp.eq.s32.totalorder %s17, 0
    %p107 = por %p105, %p106
    %s108 = ssub.s32 %s11, %s18
    %p109 = scmp.eq.s32.totalorder %s108, 0
    %s111 = sadd.s32 %s110, 1
    %s112 = scalar_select %p109, %s110, %s111
    %p115 = pneg %p109
    %p116 = scmp.eq.s32.totalorder %s11, 1
    %p117 = por %p115, %p116
    %p118 = scmp.ne.s32.totalorder %s110, %s113
    %p119 = scmp.eq.s32.totalorder %s11, 0
    %p120 = por %p118, %p119
    %p121 = scmp.ne.s32.totalorder %s110, %s113
    %p122 = scmp.eq.s32.totalorder %s16, 1
    %p123 = por %p121, %p122
    %p124 = scmp.ne.s32.totalorder %s113, %s114
    %p125 = scmp.eq.s32.totalorder %s16, 0
    %p126 = por %p124, %p125
    %p127 = scmp.ne.s32.totalorder %s113, %s114
    %p128 = scmp.eq.s32.totalorder %s17, 1
    %p129 = por %p127, %p128
    %p131 = scmp.ne.s32.totalorder %s114, %s130
    %p132 = scmp.eq.s32.totalorder %s17, 0
    %p133 = por %p131, %p132
    %s134 = ssub.s32 %s11, %s18
    %p135 = scmp.eq.s32.totalorder %s134, 0
    %s137 = sadd.s32 %s136, 1
    %s138 = scalar_select %p135, %s136, %s137
    %p141 = pneg %p135
    %p142 = scmp.eq.s32.totalorder %s11, 1
    %p143 = por %p141, %p142
    %p144 = scmp.ne.s32.totalorder %s136, %s139
    %p145 = scmp.eq.s32.totalorder %s11, 0
    %p146 = por %p144, %p145
    %p147 = scmp.ne.s32.totalorder %s136, %s139
    %p148 = scmp.eq.s32.totalorder %s16, 1
    %p149 = por %p147, %p148
    %p150 = scmp.ne.s32.totalorder %s139, %s140
    %p151 = scmp.eq.s32.totalorder %s16, 0
    %p152 = por %p150, %p151
    %p153 = scmp.ne.s32.totalorder %s139, %s140
    %p154 = scmp.eq.s32.totalorder %s17, 1
    %p155 = por %p153, %p154
    %p157 = scmp.ne.s32.totalorder %s140, %s156
    %p158 = scmp.eq.s32.totalorder %s17, 0
    %p159 = por %p157, %p158
    %p160 = scmp.le.s32.totalorder 1, %s11
    %p161 = scmp.lt.s32.totalorder %s11, 3
    %p162 = pnand %p160, %p161
    %p163 = pneg %p162
    // Predicated region
    $region9: #{resblock_forward.11} parent=5 // pred_check
      _
    $region10: #{resblock_forward.11} parent=5 // pred_check_branch
      %165 = sbr.rel (%p162) target = $region12
    $region11: #{resblock_forward.11} parent=5 // pred_region
      %s166 = ssub.s32 %s11, 1
      // Predicated region
      $region13: #{resblock_forward.11} parent=11 // pred_check
        %p167 = pneg %p58
      $region14: #{resblock_forward.11} parent=11 // pred_check_branch
        %169 = sbr.rel (%p167) target = $region16
      $region15: #{resblock_forward.11} parent=11 // pred_region
        _
      $region16: #{resblock_forward.11} parent=11 // pred_fallthru
        _
      // Predicated region
      $region17: #{resblock_forward.11} parent=11 // pred_check
        %p170 = pneg %p79
      $region18: #{resblock_forward.11} parent=11 // pred_check_branch
        %172 = sbr.rel (%p170) target = $region20
      $region19: #{resblock_forward.11} parent=11 // pred_region
        _
      $region20: #{resblock_forward.11} parent=11 // pred_fallthru
        _
      // Predicated region
      $region21: #{resblock_forward.11} parent=11 // pred_check
        %p173 = pneg %p100
      $region22: #{resblock_forward.11} parent=11 // pred_check_branch
        %175 = sbr.rel (%p173) target = $region24
      $region23: #{resblock_forward.11} parent=11 // pred_region
        _
      $region24: #{resblock_forward.11} parent=11 // pred_fallthru
        _
    $region12: #{resblock_forward.11} parent=5 // pred_fallthru
      _
    %p176 = scmp.lt.s32.totalorder %s11, 2
    // Predicated region
    $region25: #{resblock_forward.11} parent=5 // pred_check
      %p177 = pneg %p176
    $region26: #{resblock_forward.11} parent=5 // pred_check_branch
      %179 = sbr.rel (%p177) target = $region28
    $region27: #{resblock_forward.11} parent=5 // pred_region
      // Predicated region
      $region29: #{resblock_forward.11} parent=27 // pred_check
        %p180 = pneg %p31
      $region30: #{resblock_forward.11} parent=27 // pred_check_branch
        %182 = sbr.rel (%p180) target = $region32
      $region31: #{resblock_forward.11} parent=27 // pred_region
        %s183 = smul.u32 8, %s11
        %p184 = scmp.lt.s32.totalorder %s183, 15
        %s185 = scalar_select %p184, %s183, 15
        %s186 = smul.addr %s185, 8
        %s187 = scalar_lea.vmem %s0, %s186
        %s188 = smul.u32 8, %s11
      $region32: #{resblock_forward.11} parent=27 // pred_fallthru
        _
      // Predicated region
      $region33: #{resblock_forward.11} parent=27 // pred_check
        %p189 = pneg %p120
      $region34: #{resblock_forward.11} parent=27 // pred_check_branch
        %191 = sbr.rel (%p189) target = $region36
      $region35: #{resblock_forward.11} parent=27 // pred_region
        %s192 = smul.u32 8, %s11
        %p193 = scmp.lt.s32.totalorder %s192, 15
        %s194 = scalar_select %p193, %s192, 15
        %s195 = smul.addr %s194, 4
        %s196 = scalar_lea.vmem %s4, %s195
        %s197 = smul.u32 8, %s11
      $region36: #{resblock_forward.11} parent=27 // pred_fallthru
        _
    $region28: #{resblock_forward.11} parent=5 // pred_fallthru
      _
    %p198 = scmp.le.s32.totalorder 1, %s11
    %p199 = scmp.lt.s32.totalorder %s11, 3
    %p200 = pnand %p198, %p199
    %p201 = pneg %p200
    // Predicated region
    $region37: #{resblock_forward.11} parent=5 // pred_check
      _
    $region38: #{resblock_forward.11} parent=5 // pred_check_branch
      %203 = sbr.rel (%p200) target = $region40
    $region39: #{resblock_forward.11} parent=5 // pred_region
      %s204 = ssub.s32 %s11, 1
      %s205 = smul.u32 8, %s16
      %p206 = scmp.lt.s32.totalorder %s205, 15
      %s207 = scalar_select %p206, %s205, 15
      %s208 = smul.addr %s207, 8
      %s209 = scalar_lea.vmem %s0, %s208
      %p210 = pneg %p37
      %p211 = pneg %p34
      %p212 = pneg %p58
      %p213 = pneg %p55
      %p214 = pneg %p79
      %p215 = pneg %p76
      %p216 = pneg %p100
      %p217 = pneg %p97
      %s218 = smul.u32 8, %s16
      %p219 = scmp.lt.s32.totalorder %s218, 15
      %s220 = scalar_select %p219, %s218, 15
      %s221 = smul.addr %s220, 4
      %s222 = scalar_lea.vmem %s4, %s221
      %p223 = pneg %p126
      %p224 = pneg %p123
      %p225 = pneg %p152
      %p226 = pneg %p149
      %s227 = smul.u32 8, %s16
      %p228 = scmp.lt.s32.totalorder %s227, 15
      %s229 = scalar_select %p228, %s227, 15
      %s230 = smul.addr %s229, 8
      %s231 = scalar_lea.vmem %s5, %s230
      %s232 = smul.u32 8, %s16
      %p233 = scmp.lt.s32.totalorder %s232, 15
      %s234 = scalar_select %p233, %s232, 15
      %s235 = smul.addr %s234, 8
      %s236 = scalar_lea.vmem %s0, %s235
      %s237 = smul.u32 8, %s16
      %s238 = smul.u32 8, %s16
      %p239 = scmp.lt.s32.totalorder %s238, 15
      %s240 = scalar_select %p239, %s238, 15
      %s241 = smul.addr %s240, 4
      %s242 = scalar_lea.vmem %s4, %s241
      %s243 = smul.u32 8, %s16
      %s244 = smul.u32 8, %s16
      %p245 = scmp.lt.s32.totalorder %s244, 15
      %s246 = scalar_select %p245, %s244, 15
      %s247 = smul.addr %s246, 8
      %s248 = scalar_lea.vmem %s5, %s247
      %s249 = smul.u32 8, %s16
      %v250 = vld [vmem:[%s1] sm:$0x3]
      %v251 = vld [vmem:[%s1 + $0x2] sm:$0x3]
      %vm252 = vcmask 1041408
      %v253 = vsel %vm252, %v250, 0.0
      %v254 = vsel %vm252, %v251, 0.0
      %v255 = vadd.f32 %v253, %v254
      %v256 = vmul.f32 %v255, 0.0078125
      %v257 = vmul.f32 %v256, %v256
      %v259 = vrot.slane %v257, 7
      %v261 = vsub.f32 %v256, %v259
      %v262 = vadd.f32 %v261, 1e-05
      %v263 = vrsqrt.pop %v262
      %v264 = vld [vmem:[%s2] sm:$0x1]
      %v266 = vlaneseq
      %v267 = vshrl.u32 %v266, 7
      %v268 = vsub.s32 0, %v267
      %v269 = vrot.slane %v264, %v268
      %v271 = vmul.f32 %v263, %v269
      %v272 = vld [vmem:[%s3] sm:$0x1]
      %v274 = vrot.slane %v271, 1
      %v276 = vmul.f32 %v256, %v274
      %v277 = vsub.f32 %v272, %v276
      %v278 = vld [vmem:[%s236] sm:$0xff]
      %v279 = vld [vmem:[%s236 + $0x8] sm:$0xff]
      %v280 = vld [vmem:[%s236 + $0x10] sm:$0xff]
      %v281 = vld [vmem:[%s236 + $0x18] sm:$0xff]
      %v282 = vld [vmem:[%s236 + $0x20] sm:$0xff]
      %v283 = vld [vmem:[%s236 + $0x28] sm:$0xff]
      %v284 = vld [vmem:[%s236 + $0x30] sm:$0xff]
      %v285 = vld [vmem:[%s236 + $0x38] sm:$0xff]
      %v286 = vlaneseq
      %v287 = vshrl.u32 %v286, 7
      %v288 = vsub.s32 1, %v287
      %v289 = vrot.slane %v271, %v288
      %v290 = vmul.f32 %v278, %v289
      %v291 = vmul.f32 %v279, %v289
      %v292 = vmul.f32 %v280, %v289
      %v293 = vmul.f32 %v281, %v289
      %v294 = vmul.f32 %v282, %v289
      %v295 = vmul.f32 %v283, %v289
      %v296 = vmul.f32 %v284, %v289
      %v297 = vmul.f32 %v285, %v289
      %v299 = vlaneseq
      %v300 = vshrl.u32 %v299, 7
      %v301 = vsub.s32 0, %v300
      %v302 = vrot.slane %v277, %v301
      %v304 = vadd.f32 %v290, %v302
      %v305 = vadd.f32 %v291, %v302
      %v306 = vadd.f32 %v292, %v302
      %v307 = vadd.f32 %v293, %v302
      %v308 = vadd.f32 %v294, %v302
      %v309 = vadd.f32 %v295, %v302
      %v310 = vadd.f32 %v296, %v302
      %v311 = vadd.f32 %v297, %v302
      %v312 = vmax.f32 %v304, 0.0
      %v313 = vmax.f32 %v305, 0.0
      %v314 = vmax.f32 %v306, 0.0
      %v315 = vmax.f32 %v307, 0.0
      %v316 = vmax.f32 %v308, 0.0
      %v317 = vmax.f32 %v309, 0.0
      %v318 = vmax.f32 %v310, 0.0
      %v319 = vmax.f32 %v311, 0.0
      %v320 = vld [vmem:[%s242] sm:$0xf]
      %v321 = vld [vmem:[%s242 + $0x4] sm:$0xf]
      %v322 = vld [vmem:[%s242 + $0x8] sm:$0xf]
      %v323 = vld [vmem:[%s242 + $0xc] sm:$0xf]
      %v324 = vld [vmem:[%s242 + $0x10] sm:$0xf]
      %v325 = vld [vmem:[%s242 + $0x14] sm:$0xf]
      %v326 = vld [vmem:[%s242 + $0x18] sm:$0xf]
      %v327 = vld [vmem:[%s242 + $0x1c] sm:$0xf]
      %v328 = vunpack.c.l.bf16 %v320
      %v329 = vunpack.c.l.bf16 %v321
      %v330 = vunpack.c.l.bf16 %v322
      %v331 = vunpack.c.l.bf16 %v323
      %v332 = vunpack.c.l.bf16 %v324
      %v333 = vunpack.c.l.bf16 %v325
      %v334 = vunpack.c.l.bf16 %v326
      %v335 = vunpack.c.l.bf16 %v327
      %v336 = vadd.f32 %v312, %v328
      %v337 = vadd.f32 %v313, %v329
      %v338 = vadd.f32 %v314, %v330
      %v339 = vadd.f32 %v315, %v331
      %v340 = vadd.f32 %v316, %v332
      %v341 = vadd.f32 %v317, %v333
      %v342 = vadd.f32 %v318, %v334
      %v343 = vadd.f32 %v319, %v335
      %v344 = vmax.f32 %v336, 0.0
      %v345 = vmax.f32 %v337, 0.0
      %v346 = vmax.f32 %v338, 0.0
      %v347 = vmax.f32 %v339, 0.0
      %v348 = vmax.f32 %v340, 0.0
      %v349 = vmax.f32 %v341, 0.0
      %v350 = vmax.f32 %v342, 0.0
      %v351 = vmax.f32 %v343, 0.0
      %352 = vst [vmem:[%s248] sm:$0xff] %v344
      %353 = vst [vmem:[%s248 + $0x8] sm:$0xff] %v345
      %354 = vst [vmem:[%s248 + $0x10] sm:$0xff] %v346
      %355 = vst [vmem:[%s248 + $0x18] sm:$0xff] %v347
      %356 = vst [vmem:[%s248 + $0x20] sm:$0xff] %v348
      %357 = vst [vmem:[%s248 + $0x28] sm:$0xff] %v349
      %358 = vst [vmem:[%s248 + $0x30] sm:$0xff] %v350
      %359 = vst [vmem:[%s248 + $0x38] sm:$0xff] %v351
      %s360 = smul.u32 8, %s16
      %p361 = scmp.lt.s32.totalorder %s360, 15
      %s362 = scalar_select %p361, %s360, 15
      %s363 = smul.addr %s362, 8
      %s364 = scalar_lea.vmem %s5, %s363
      // Predicated region
      $region41: #{resblock_forward.11} parent=39 // pred_check
        %p365 = pneg %p149
      $region42: #{resblock_forward.11} parent=39 // pred_check_branch
        %367 = sbr.rel (%p365) target = $region44
      $region43: #{resblock_forward.11} parent=39 // pred_region
        %s368 = smul.u32 8, %s16
      $region44: #{resblock_forward.11} parent=39 // pred_fallthru
        _
    $region40: #{resblock_forward.11} parent=5 // pred_fallthru
      _
    %p369 = scmp.le.s32.totalorder 2, %s11
    // Predicated region
    $region45: #{resblock_forward.11} parent=5 // pred_check
      %p370 = pneg %p369
    $region46: #{resblock_forward.11} parent=5 // pred_check_branch
      %372 = sbr.rel (%p370) target = $region48
    $region47: #{resblock_forward.11} parent=5 // pred_region
      %s373 = ssub.s32 %s11, 2
      // Predicated region
      $region49: #{resblock_forward.11} parent=47 // pred_check
        %p374 = pneg %p155
      $region50: #{resblock_forward.11} parent=47 // pred_check_branch
        %376 = sbr.rel (%p374) target = $region52
      $region51: #{resblock_forward.11} parent=47 // pred_region
        %s377 = smul.u32 8, %s17
        %p378 = scmp.lt.s32.totalorder %s377, 15
        %s379 = scalar_select %p378, %s377, 15
        %s380 = smul.addr %s379, 8
        %s381 = scalar_lea.vmem %s5, %s380
      $region52: #{resblock_forward.11} parent=47 // pred_fallthru
        _
    $region48: #{resblock_forward.11} parent=5 // pred_fallthru
      _
  $region6: #{resblock_forward.11} parent=0 // loop_footer
    %s15 = sadd.s32 1, %s11
  $region7: #{resblock_forward.11} parent=0 // loop_footer_branch
    %10 = sbr.rel target = $region3
  $region8: #{resblock_forward.11} parent=0 // loop_exit
    _

// kernel: resblock_forward.7
$region0: #{resblock_forward.7}
  #allocation0 [shape = 'u32[]', space=smem, size = 0x4, offset = 0x4, fixed_abs, tag = 'smem constant byte address 0x4 - core index']
  #allocation1 [shape = 'u32[144,128]{1,0:T(1,128)}', space=vmem, size = 0x12000, scoped, tag = 'internal scratch']
  %s0 = inlined_call_operand.vmem [shape: f32[128,128], index: 0, kind: input, shape index: {}]
  %s1 = inlined_call_operand.vmem [shape: f32[2,2,128], index: 1, kind: input, shape index: {}]
  %s2 = inlined_call_operand.vmem [shape: f32[1,128], index: 2, kind: input, shape index: {}]
  %s3 = inlined_call_operand.vmem [shape: f32[1,128], index: 3, kind: input, shape index: {}]
  %s4 = inlined_call_operand.vmem [shape: bf16[128,128], index: 4, kind: output, shape index: {}]
  %s5 = sld [smem:[#allocation0]]
  $region49: #{resblock_forward.7} parent=0
    _
  %s7 = ssub.s32 1, %s5
  %s8 = scalar_select 0, %s7, %s5
  loop: start=0, step=1, limit=4
  $region2: #{resblock_forward.7} parent=0 // loop_pre_header
    _
  $region3: #{resblock_forward.7} parent=0 // loop_header
    %s10 = sphi 0, %s14
    %p11 = scmp.ge.s32.totalorder %s10, 4
    %s20 = sphi 0, %s22
    %s23 = sphi 0, %s20
    %s24 = sphi 0, %s23
    %s40 = sphi 0, %s24
    %s44 = sphi 0, %s44
    %s46 = sphi 0, %s44
    %s47 = sphi 0, %s46
    %s61 = sphi 0, %s47
    %s65 = sphi 0, %s65
    %s67 = sphi 0, %s65
    %s68 = sphi 0, %s67
    %s82 = sphi 0, %s68
    %s86 = sphi 0, %s86
    %s88 = sphi 0, %s86
    %s89 = sphi 0, %s88
    %s103 = sphi 0, %s89
    %s109 = sphi 0, %s111
    %s112 = sphi 0, %s109
    %s113 = sphi 0, %s112
    %s129 = sphi 0, %s113
  $region4: #{resblock_forward.7} parent=0 // loop_header_branch
    %13 = sbr.rel (%p11) target = $region8
  $region5: #{resblock_forward.7} parent=0 // loop_body
    %s15 = ssub.s32 %s10, 1
    %s16 = ssub.s32 %s10, 2
    %s17 = sadd.s32 %s10, 1
    %s18 = ssub.s32 %s10, %s17
    %p19 = scmp.eq.s32.totalorder %s18, 0
    %s21 = sadd.s32 %s20, 1
    %s22 = scalar_select %p19, %s20, %s21
    %p25 = pneg %p19
    %p26 = scmp.eq.s32.totalorder %s10, 1
    %p27 = por %p25, %p26
    %p28 = scmp.ne.s32.totalorder %s20, %s23
    %p29 = scmp.eq.s32.totalorder %s10, 0
    %p30 = por %p28, %p29
    %p31 = scmp.ne.s32.totalorder %s20, %s23
    %p32 = scmp.eq.s32.totalorder %s15, 1
    %p33 = por %p31, %p32
    %p34 = scmp.ne.s32.totalorder %s23, %s24
    %p35 = scmp.eq.s32.totalorder %s15, 0
    %p36 = por %p34, %p35
    %p37 = scmp.ne.s32.totalorder %s23, %s24
    %p38 = scmp.eq.s32.totalorder %s16, 1
    %p39 = por %p37, %p38
    %p41 = scmp.ne.s32.totalorder %s24, %s40
    %p42 = scmp.eq.s32.totalorder %s16, 0
    %p43 = por %p41, %p42
    %s45 = sadd.s32 %s44, 1
    %p48 = scmp.eq.s32.totalorder %s10, 1
    %p49 = scmp.ne.s32.totalorder %s44, %s46
    %p50 = scmp.eq.s32.totalorder %s10, 0
    %p51 = por %p49, %p50
    %p52 = scmp.ne.s32.totalorder %s44, %s46
    %p53 = scmp.eq.s32.totalorder %s15, 1
    %p54 = por %p52, %p53
    %p55 = scmp.ne.s32.totalorder %s46, %s47
    %p56 = scmp.eq.s32.totalorder %s15, 0
    %p57 = por %p55, %p56
    %p58 = scmp.ne.s32.totalorder %s46, %s47
    %p59 = scmp.eq.s32.totalorder %s16, 1
    %p60 = por %p58, %p59
    %p62 = scmp.ne.s32.totalorder %s47, %s61
    %p63 = scmp.eq.s32.totalorder %s16, 0
    %p64 = por %p62, %p63
    %s66 = sadd.s32 %s65, 1
    %p69 = scmp.eq.s32.totalorder %s10, 1
    %p70 = scmp.ne.s32.totalorder %s65, %s67
    %p71 = scmp.eq.s32.totalorder %s10, 0
    %p72 = por %p70, %p71
    %p73 = scmp.ne.s32.totalorder %s65, %s67
    %p74 = scmp.eq.s32.totalorder %s15, 1
    %p75 = por %p73, %p74
    %p76 = scmp.ne.s32.totalorder %s67, %s68
    %p77 = scmp.eq.s32.totalorder %s15, 0
    %p78 = por %p76, %p77
    %p79 = scmp.ne.s32.totalorder %s67, %s68
    %p80 = scmp.eq.s32.totalorder %s16, 1
    %p81 = por %p79, %p80
    %p83 = scmp.ne.s32.totalorder %s68, %s82
    %p84 = scmp.eq.s32.totalorder %s16, 0
    %p85 = por %p83, %p84
    %s87 = sadd.s32 %s86, 1
    %p90 = scmp.eq.s32.totalorder %s10, 1
    %p91 = scmp.ne.s32.totalorder %s86, %s88
    %p92 = scmp.eq.s32.totalorder %s10, 0
    %p93 = por %p91, %p92
    %p94 = scmp.ne.s32.totalorder %s86, %s88
    %p95 = scmp.eq.s32.totalorder %s15, 1
    %p96 = por %p94, %p95
    %p97 = scmp.ne.s32.totalorder %s88, %s89
    %p98 = scmp.eq.s32.totalorder %s15, 0
    %p99 = por %p97, %p98
    %p100 = scmp.ne.s32.totalorder %s88, %s89
    %p101 = scmp.eq.s32.totalorder %s16, 1
    %p102 = por %p100, %p101
    %p104 = scmp.ne.s32.totalorder %s89, %s103
    %p105 = scmp.eq.s32.totalorder %s16, 0
    %p106 = por %p104, %p105
    %s107 = ssub.s32 %s10, %s17
    %p108 = scmp.eq.s32.totalorder %s107, 0
    %s110 = sadd.s32 %s109, 1
    %s111 = scalar_select %p108, %s109, %s110
    %p114 = pneg %p108
    %p115 = scmp.eq.s32.totalorder %s10, 1
    %p116 = por %p114, %p115
    %p117 = scmp.ne.s32.totalorder %s109, %s112
    %p118 = scmp.eq.s32.totalorder %s10, 0
    %p119 = por %p117, %p118
    %p120 = scmp.ne.s32.totalorder %s109, %s112
    %p121 = scmp.eq.s32.totalorder %s15, 1
    %p122 = por %p120, %p121
    %p123 = scmp.ne.s32.totalorder %s112, %s113
    %p124 = scmp.eq.s32.totalorder %s15, 0
    %p125 = por %p123, %p124
    %p126 = scmp.ne.s32.totalorder %s112, %s113
    %p127 = scmp.eq.s32.totalorder %s16, 1
    %p128 = por %p126, %p127
    %p130 = scmp.ne.s32.totalorder %s113, %s129
    %p131 = scmp.eq.s32.totalorder %s16, 0
    %p132 = por %p130, %p131
    %p133 = scmp.le.s32.totalorder 1, %s10
    %p134 = scmp.lt.s32.totalorder %s10, 3
    %p135 = pnand %p133, %p134
    %p136 = pneg %p135
    // Predicated region
    $region9: #{resblock_forward.7} parent=5 // pred_check
      _
    $region10: #{resblock_forward.7} parent=5 // pred_check_branch
      %138 = sbr.rel (%p135) target = $region12
    $region11: #{resblock_forward.7} parent=5 // pred_region
      %s139 = ssub.s32 %s10, 1
      // Predicated region
      $region13: #{resblock_forward.7} parent=11 // pred_check
        %p140 = pneg %p57
      $region14: #{resblock_forward.7} parent=11 // pred_check_branch
        %142 = sbr.rel (%p140) target = $region16
      $region15: #{resblock_forward.7} parent=11 // pred_region
        _
      $region16: #{resblock_forward.7} parent=11 // pred_fallthru
        _
      // Predicated region
      $region17: #{resblock_forward.7} parent=11 // pred_check
        %p143 = pneg %p78
      $region18: #{resblock_forward.7} parent=11 // pred_check_branch
        %145 = sbr.rel (%p143) target = $region20
      $region19: #{resblock_forward.7} parent=11 // pred_region
        _
      $region20: #{resblock_forward.7} parent=11 // pred_fallthru
        _
      // Predicated region
      $region21: #{resblock_forward.7} parent=11 // pred_check
        %p146 = pneg %p99
      $region22: #{resblock_forward.7} parent=11 // pred_check_branch
        %148 = sbr.rel (%p146) target = $region24
      $region23: #{resblock_forward.7} parent=11 // pred_region
        _
      $region24: #{resblock_forward.7} parent=11 // pred_fallthru
        _
    $region12: #{resblock_forward.7} parent=5 // pred_fallthru
      _
    %p149 = scmp.lt.s32.totalorder %s10, 2
    // Predicated region
    $region25: #{resblock_forward.7} parent=5 // pred_check
      %p150 = pneg %p149
    $region26: #{resblock_forward.7} parent=5 // pred_check_branch
      %152 = sbr.rel (%p150) target = $region28
    $region27: #{resblock_forward.7} parent=5 // pred_region
      // Predicated region
      $region29: #{resblock_forward.7} parent=27 // pred_check
        %p153 = pneg %p30
      $region30: #{resblock_forward.7} parent=27 // pred_check_branch
        %155 = sbr.rel (%p153) target = $region32
      $region31: #{resblock_forward.7} parent=27 // pred_region
        %s156 = smul.u32 8, %s10
        %p157 = scmp.lt.s32.totalorder %s156, 15
        %s158 = scalar_select %p157, %s156, 15
        %s159 = smul.addr %s158, 8
        %s160 = scalar_lea.vmem %s0, %s159
        %s161 = smul.u32 8, %s10
      $region32: #{resblock_forward.7} parent=27 // pred_fallthru
        _
    $region28: #{resblock_forward.7} parent=5 // pred_fallthru
      _
    %p162 = scmp.le.s32.totalorder 1, %s10
    %p163 = scmp.lt.s32.totalorder %s10, 3
    %p164 = pnand %p162, %p163
    %p165 = pneg %p164
    // Predicated region
    $region33: #{resblock_forward.7} parent=5 // pred_check
      _
    $region34: #{resblock_forward.7} parent=5 // pred_check_branch
      %167 = sbr.rel (%p164) target = $region36
    $region35: #{resblock_forward.7} parent=5 // pred_region
      %s168 = ssub.s32 %s10, 1
      %s169 = smul.u32 8, %s15
      %p170 = scmp.lt.s32.totalorder %s169, 15
      %s171 = scalar_select %p170, %s169, 15
      %s172 = smul.addr %s171, 8
      %s173 = scalar_lea.vmem %s0, %s172
      %p174 = pneg %p36
      %p175 = pneg %p33
      %p176 = pneg %p57
      %p177 = pneg %p54
      %p178 = pneg %p78
      %p179 = pneg %p75
      %p180 = pneg %p99
      %p181 = pneg %p96
      %p182 = pneg %p125
      %p183 = pneg %p122
      %s184 = smul.u32 8, %s15
      %p185 = scmp.lt.s32.totalorder %s184, 15
      %s186 = scalar_select %p185, %s184, 15
      %s187 = smul.addr %s186, 4
      %s188 = scalar_lea.vmem %s4, %s187
      %s189 = smul.u32 8, %s15
      %p190 = scmp.lt.s32.totalorder %s189, 15
      %s191 = scalar_select %p190, %s189, 15
      %s192 = smul.addr %s191, 8
      %s193 = scalar_lea.vmem %s0, %s192
      %s194 = smul.u32 8, %s15
      %s195 = smul.u32 8, %s15
      %p196 = scmp.lt.s32.totalorder %s195, 15
      %s197 = scalar_select %p196, %s195, 15
      %s198 = smul.addr %s197, 4
      %s199 = scalar_lea.vmem %s4, %s198
      %s200 = smul.u32 8, %s15
      %v201 = vld [vmem:[%s1] sm:$0x3]
      %v202 = vld [vmem:[%s1 + $0x2] sm:$0x3]
      %vm203 = vcmask 1041408
      %v204 = vsel %vm203, %v201, 0.0
      %v205 = vsel %vm203, %v202, 0.0
      %v206 = vadd.f32 %v204, %v205
      %v207 = vmul.f32 %v206, 0.0078125
      %v208 = vmul.f32 %v207, %v207
      %v210 = vrot.slane %v208, 7
      %v212 = vsub.f32 %v207, %v210
      %v213 = vadd.f32 %v212, 1e-05
      %v214 = vrsqrt.pop %v213
      %v215 = vld [vmem:[%s2] sm:$0x1]
      %v217 = vlaneseq
      %v218 = vshrl.u32 %v217, 7
      %v219 = vsub.s32 0, %v218
      %v220 = vrot.slane %v215, %v219
      %v222 = vmul.f32 %v214, %v220
      %v223 = vld [vmem:[%s3] sm:$0x1]
      %v225 = vrot.slane %v222, 1
      %v227 = vmul.f32 %v207, %v225
      %v228 = vsub.f32 %v223, %v227
      %v229 = vld [vmem:[%s193] sm:$0xff]
      %v230 = vld [vmem:[%s193 + $0x8] sm:$0xff]
      %v231 = vld [vmem:[%s193 + $0x10] sm:$0xff]
      %v232 = vld [vmem:[%s193 + $0x18] sm:$0xff]
      %v233 = vld [vmem:[%s193 + $0x20] sm:$0xff]
      %v234 = vld [vmem:[%s193 + $0x28] sm:$0xff]
      %v235 = vld [vmem:[%s193 + $0x30] sm:$0xff]
      %v236 = vld [vmem:[%s193 + $0x38] sm:$0xff]
      %v237 = vlaneseq
      %v238 = vshrl.u32 %v237, 7
      %v239 = vsub.s32 1, %v238
      %v240 = vrot.slane %v222, %v239
      %v241 = vmul.f32 %v229, %v240
      %v242 = vmul.f32 %v230, %v240
      %v243 = vmul.f32 %v231, %v240
      %v244 = vmul.f32 %v232, %v240
      %v245 = vmul.f32 %v233, %v240
      %v246 = vmul.f32 %v234, %v240
      %v247 = vmul.f32 %v235, %v240
      %v248 = vmul.f32 %v236, %v240
      %v250 = vlaneseq
      %v251 = vshrl.u32 %v250, 7
      %v252 = vsub.s32 0, %v251
      %v253 = vrot.slane %v228, %v252
      %v255 = vadd.f32 %v241, %v253
      %v256 = vadd.f32 %v242, %v253
      %v257 = vadd.f32 %v243, %v253
      %v258 = vadd.f32 %v244, %v253
      %v259 = vadd.f32 %v245, %v253
      %v260 = vadd.f32 %v246, %v253
      %v261 = vadd.f32 %v247, %v253
      %v262 = vadd.f32 %v248, %v253
      %v263 = vpack.c.bf16 %v256, %v255
      %v264 = vpack.c.bf16 %v258, %v257
      %v265 = vpack.c.bf16 %v260, %v259
      %v266 = vpack.c.bf16 %v262, %v261
      %v271 = vunpack.c.l.b16 %v263
      %v272 = vunpack.c.h.b16 %v263
      %v273 = vunpack.c.l.b16 %v264
      %v274 = vunpack.c.h.b16 %v264
      %v275 = vunpack.c.l.b16 %v265
      %v276 = vunpack.c.h.b16 %v265
      %v277 = vunpack.c.l.b16 %v266
      %v278 = vunpack.c.h.b16 %v266
      %v279 = vpack.c.b16 %v271, %v271
      %v280 = vpack.c.b16 %v272, %v272
      %v281 = vpack.c.b16 %v273, %v273
      %v282 = vpack.c.b16 %v274, %v274
      %v283 = vpack.c.b16 %v275, %v275
      %v284 = vpack.c.b16 %v276, %v276
      %v285 = vpack.c.b16 %v277, %v277
      %v286 = vpack.c.b16 %v278, %v278
      %295 = vst [vmem:[%s199] sm:$0xf] %v279
      %296 = vst [vmem:[%s199 + $0x4] sm:$0xf] %v280
      %297 = vst [vmem:[%s199 + $0x8] sm:$0xf] %v281
      %298 = vst [vmem:[%s199 + $0xc] sm:$0xf] %v282
      %299 = vst [vmem:[%s199 + $0x10] sm:$0xf] %v283
      %300 = vst [vmem:[%s199 + $0x14] sm:$0xf] %v284
      %301 = vst [vmem:[%s199 + $0x18] sm:$0xf] %v285
      %302 = vst [vmem:[%s199 + $0x1c] sm:$0xf] %v286
      %s303 = smul.u32 8, %s15
      %p304 = scmp.lt.s32.totalorder %s303, 15
      %s305 = scalar_select %p304, %s303, 15
      %s306 = smul.addr %s305, 4
      %s307 = scalar_lea.vmem %s4, %s306
      // Predicated region
      $region37: #{resblock_forward.7} parent=35 // pred_check
        %p308 = pneg %p122
      $region38: #{resblock_forward.7} parent=35 // pred_check_branch
        %310 = sbr.rel (%p308) target = $region40
      $region39: #{resblock_forward.7} parent=35 // pred_region
        %s311 = smul.u32 8, %s15
      $region40: #{resblock_forward.7} parent=35 // pred_fallthru
        _
    $region36: #{resblock_forward.7} parent=5 // pred_fallthru
      _
    %p312 = scmp.le.s32.totalorder 2, %s10
    // Predicated region
    $region41: #{resblock_forward.7} parent=5 // pred_check
      %p313 = pneg %p312
    $region42: #{resblock_forward.7} parent=5 // pred_check_branch
      %315 = sbr.rel (%p313) target = $region44
    $region43: #{resblock_forward.7} parent=5 // pred_region
      %s316 = ssub.s32 %s10, 2
      // Predicated region
      $region45: #{resblock_forward.7} parent=43 // pred_check
        %p317 = pneg %p128
      $region46: #{resblock_forward.7} parent=43 // pred_check_branch
        %319 = sbr.rel (%p317) target = $region48
      $region47: #{resblock_forward.7} parent=43 // pred_region
        %s320 = smul.u32 8, %s16
        %p321 = scmp.lt.s32.totalorder %s320, 15
        %s322 = scalar_select %p321, %s320, 15
        %s323 = smul.addr %s322, 4
        %s324 = scalar_lea.vmem %s4, %s323
      $region48: #{resblock_forward.7} parent=43 // pred_fallthru
        _
    $region44: #{resblock_forward.7} parent=5 // pred_fallthru
      _
  $region6: #{resblock_forward.7} parent=0 // loop_footer
    %s14 = sadd.s32 1, %s10
  $region7: #{resblock_forward.7} parent=0 // loop_footer_branch
    %9 = sbr.rel target = $region3
  $region8: #{resblock_forward.7} parent=0 // loop_exit
    _

// kernel: resblock_forward.10
$region0: #{resblock_forward.10}
  #allocation0 [shape = 'u32[]', space=smem, size = 0x4, offset = 0x4, fixed_abs, tag = 'smem constant byte address 0x4 - core index']
  #allocation1 [shape = 'u32[144,128]{1,0:T(1,128)}', space=vmem, size = 0x12000, scoped, tag = 'internal scratch']
  %s0 = inlined_call_operand.vmem [shape: bf16[2,10,10,8], index: 0, kind: input, shape index: {}]
  %s1 = inlined_call_operand.vmem [shape: bf16[9,8,128], index: 1, kind: input, shape index: {}]
  %s2 = inlined_call_operand.vmem [shape: f32[1,128], index: 2, kind: input, shape index: {}]
  %s3 = inlined_call_operand.vmem [shape: f32[128,128], index: 3, kind: output, shape index: {0}]
  %s4 = inlined_call_operand.vmem [shape: f32[2,2,128], index: 4, kind: output, shape index: {1}]
  %5 = xla_tuple %s3, %s4
  %s6 = sld [smem:[#allocation0]]
  $region61: #{resblock_forward.10} parent=0
    _
  %s8 = ssub.s32 1, %s6
  %s9 = scalar_select 0, %s8, %s6
  loop: start=0, step=1, limit=4
  $region2: #{resblock_forward.10} parent=0 // loop_pre_header
    _
  $region3: #{resblock_forward.10} parent=0 // loop_header
    %s11 = sphi 0, %s15
    %p12 = scmp.ge.s32.totalorder %s11, 4
    %s18 = sphi 0, %s30
    %s19 = sphi 0, %s26
    %s20 = sphi 0, %s18
    %s21 = sphi 0, %s19
    %s22 = sphi 0, %s20
    %s23 = sphi 0, %s21
    %s33 = sphi 0, %s35
    %s36 = sphi 0, %s33
    %s37 = sphi 0, %s36
    %s53 = sphi 0, %s37
    %s57 = sphi 0, %s57
    %s59 = sphi 0, %s57
    %s60 = sphi 0, %s59
    %s74 = sphi 0, %s60
    %s78 = sphi 0, %s78
    %s80 = sphi 0, %s78
    %s81 = sphi 0, %s80
    %s95 = sphi 0, %s81
    %s103 = sphi 0, %s105
    %s106 = sphi 0, %s103
    %s107 = sphi 0, %s106
    %s123 = sphi 0, %s107
    %s129 = sphi 0, %s131
    %s132 = sphi 0, %s129
    %s133 = sphi 0, %s132
    %s149 = sphi 0, %s133
  $region4: #{resblock_forward.10} parent=0 // loop_header_branch
    %14 = sbr.rel (%p12) target = $region8
  $region5: #{resblock_forward.10} parent=0 // loop_body
    %s16 = ssub.s32 %s11, 1
    %s17 = ssub.s32 %s11, 2
    %s24 = sadd.s32 1, %s19
    %p25 = scmp.ge.s32.totalorder %s24, 1
    %s26 = scalar_select %p25, 0, %s24
    %s27 = sadd.s32 1, %s18
    %s28 = scalar_select %p25, %s27, %s18
    %p29 = scmp.ge.s32.totalorder %s28, 2
    %s30 = scalar_select %p29, 0, %s28
    %s31 = ssub.s32 %s18, %s30
    %p32 = scmp.eq.s32.totalorder %s31, 0
    %s34 = sadd.s32 %s33, 1
    %s35 = scalar_select %p32, %s33, %s34
    %p38 = pneg %p32
    %p39 = scmp.eq.s32.totalorder %s11, 1
    %p40 = por %p38, %p39
    %p41 = scmp.ne.s32.totalorder %s33, %s36
    %p42 = scmp.eq.s32.totalorder %s11, 0
    %p43 = por %p41, %p42
    %p44 = scmp.ne.s32.totalorder %s33, %s36
    %p45 = scmp.eq.s32.totalorder %s16, 1
    %p46 = por %p44, %p45
    %p47 = scmp.ne.s32.totalorder %s36, %s37
    %p48 = scmp.eq.s32.totalorder %s16, 0
    %p49 = por %p47, %p48
    %p50 = scmp.ne.s32.totalorder %s36, %s37
    %p51 = scmp.eq.s32.totalorder %s17, 1
    %p52 = por %p50, %p51
    %p54 = scmp.ne.s32.totalorder %s37, %s53
    %p55 = scmp.eq.s32.totalorder %s17, 0
    %p56 = por %p54, %p55
    %s58 = sadd.s32 %s57, 1
    %p61 = scmp.eq.s32.totalorder %s11, 1
    %p62 = scmp.ne.s32.totalorder %s57, %s59
    %p63 = scmp.eq.s32.totalorder %s11, 0
    %p64 = por %p62, %p63
    %p65 = scmp.ne.s32.totalorder %s57, %s59
    %p66 = scmp.eq.s32.totalorder %s16, 1
    %p67 = por %p65, %p66
    %p68 = scmp.ne.s32.totalorder %s59, %s60
    %p69 = scmp.eq.s32.totalorder %s16, 0
    %p70 = por %p68, %p69
    %p71 = scmp.ne.s32.totalorder %s59, %s60
    %p72 = scmp.eq.s32.totalorder %s17, 1
    %p73 = por %p71, %p72
    %p75 = scmp.ne.s32.totalorder %s60, %s74
    %p76 = scmp.eq.s32.totalorder %s17, 0
    %p77 = por %p75, %p76
    %s79 = sadd.s32 %s78, 1
    %p82 = scmp.eq.s32.totalorder %s11, 1
    %p83 = scmp.ne.s32.totalorder %s78, %s80
    %p84 = scmp.eq.s32.totalorder %s11, 0
    %p85 = por %p83, %p84
    %p86 = scmp.ne.s32.totalorder %s78, %s80
    %p87 = scmp.eq.s32.totalorder %s16, 1
    %p88 = por %p86, %p87
    %p89 = scmp.ne.s32.totalorder %s80, %s81
    %p90 = scmp.eq.s32.totalorder %s16, 0
    %p91 = por %p89, %p90
    %p92 = scmp.ne.s32.totalorder %s80, %s81
    %p93 = scmp.eq.s32.totalorder %s17, 1
    %p94 = por %p92, %p93
    %p96 = scmp.ne.s32.totalorder %s81, %s95
    %p97 = scmp.eq.s32.totalorder %s17, 0
    %p98 = por %p96, %p97
    %s99 = sadd.s32 %s18, %s19
    %s100 = sadd.s32 %s30, %s26
    %s101 = ssub.s32 %s99, %s100
    %p102 = scmp.eq.s32.totalorder %s101, 0
    %s104 = sadd.s32 %s103, 1
    %s105 = scalar_select %p102, %s103, %s104
    %p108 = pneg %p102
    %p109 = scmp.eq.s32.totalorder %s11, 1
    %p110 = por %p108, %p109
    %p111 = scmp.ne.s32.totalorder %s103, %s106
    %p112 = scmp.eq.s32.totalorder %s11, 0
    %p113 = por %p111, %p112
    %p114 = scmp.ne.s32.totalorder %s103, %s106
    %p115 = scmp.eq.s32.totalorder %s16, 1
    %p116 = por %p114, %p115
    %p117 = scmp.ne.s32.totalorder %s106, %s107
    %p118 = scmp.eq.s32.totalorder %s16, 0
    %p119 = por %p117, %p118
    %p120 = scmp.ne.s32.totalorder %s106, %s107
    %p121 = scmp.eq.s32.totalorder %s17, 1
    %p122 = por %p120, %p121
    %p124 = scmp.ne.s32.totalorder %s107, %s123
    %p125 = scmp.eq.s32.totalorder %s17, 0
    %p126 = por %p124, %p125
    %s127 = ssub.s32 %s18, %s30
    %p128 = scmp.eq.s32.totalorder %s127, 0
    %s130 = sadd.s32 %s129, 1
    %s131 = scalar_select %p128, %s129, %s130
    %p134 = pneg %p128
    %p135 = scmp.eq.s32.totalorder %s11, 1
    %p136 = por %p134, %p135
    %p137 = scmp.ne.s32.totalorder %s129, %s132
    %p138 = scmp.eq.s32.totalorder %s11, 0
    %p139 = por %p137, %p138
    %p140 = scmp.ne.s32.totalorder %s129, %s132
    %p141 = scmp.eq.s32.totalorder %s16, 1
    %p142 = por %p140, %p141
    %p143 = scmp.ne.s32.totalorder %s132, %s133
    %p144 = scmp.eq.s32.totalorder %s16, 0
    %p145 = por %p143, %p144
    %p146 = scmp.ne.s32.totalorder %s132, %s133
    %p147 = scmp.eq.s32.totalorder %s17, 1
    %p148 = por %p146, %p147
    %p150 = scmp.ne.s32.totalorder %s133, %s149
    %p151 = scmp.eq.s32.totalorder %s17, 0
    %p152 = por %p150, %p151
    %p153 = scmp.le.s32.totalorder 1, %s11
    %p154 = scmp.lt.s32.totalorder %s11, 3
    %p155 = pnand %p153, %p154
    %p156 = pneg %p155
    // Predicated region
    $region9: #{resblock_forward.10} parent=5 // pred_check
      _
    $region10: #{resblock_forward.10} parent=5 // pred_check_branch
      %158 = sbr.rel (%p155) target = $region12
    $region11: #{resblock_forward.10} parent=5 // pred_region
      %s159 = ssub.s32 %s11, 1
      // Predicated region
      $region13: #{resblock_forward.10} parent=11 // pred_check
        %p160 = pneg %p70
      $region14: #{resblock_forward.10} parent=11 // pred_check_branch
        %162 = sbr.rel (%p160) target = $region16
      $region15: #{resblock_forward.10} parent=11 // pred_region
        _
      $region16: #{resblock_forward.10} parent=11 // pred_fallthru
        _
      // Predicated region
      $region17: #{resblock_forward.10} parent=11 // pred_check
        %p163 = pneg %p91
      $region18: #{resblock_forward.10} parent=11 // pred_check_branch
        %165 = sbr.rel (%p163) target = $region20
      $region19: #{resblock_forward.10} parent=11 // pred_region
        _
      $region20: #{resblock_forward.10} parent=11 // pred_fallthru
        _
    $region12: #{resblock_forward.10} parent=5 // pred_fallthru
      _
    %p166 = scmp.lt.s32.totalorder %s11, 2
    // Predicated region
    $region21: #{resblock_forward.10} parent=5 // pred_check
      %p167 = pneg %p166
    $region22: #{resblock_forward.10} parent=5 // pred_check_branch
      %169 = sbr.rel (%p167) target = $region24
    $region23: #{resblock_forward.10} parent=5 // pred_region
      // Predicated region
      $region25: #{resblock_forward.10} parent=23 // pred_check
        %p170 = pneg %p43
      $region26: #{resblock_forward.10} parent=23 // pred_check_branch
        %172 = sbr.rel (%p170) target = $region28
      $region27: #{resblock_forward.10} parent=23 // pred_region
        %p173 = scmp.lt.s32.totalorder %s18, 1
        %s174 = scalar_select %p173, %s18, 1
        %s175 = smul.addr %s174, 20
        %s176 = smul.addr %s175, 4
        %s177 = scalar_lea.vmem %s0, %s176
      $region28: #{resblock_forward.10} parent=23 // pred_fallthru
        _
    $region24: #{resblock_forward.10} parent=5 // pred_fallthru
      _
    %p178 = scmp.le.s32.totalorder 1, %s11
    %p179 = scmp.lt.s32.totalorder %s11, 3
    %p180 = pnand %p178, %p179
    %p181 = pneg %p180
    // Predicated region
    $region29: #{resblock_forward.10} parent=5 // pred_check
      _
    $region30: #{resblock_forward.10} parent=5 // pred_check_branch
      %183 = sbr.rel (%p180) target = $region32
    $region31: #{resblock_forward.10} parent=5 // pred_region
      %s184 = ssub.s32 %s11, 1
      %p185 = scmp.lt.s32.totalorder %s20, 1
      %s186 = scalar_select %p185, %s20, 1
      %s187 = smul.addr %s186, 20
      %s188 = smul.addr %s187, 4
      %s189 = scalar_lea.vmem %s0, %s188
      %p190 = pneg %p49
      %p191 = pneg %p46
      %p192 = pneg %p70
      %p193 = pneg %p67
      %p194 = pneg %p91
      %p195 = pneg %p88
      %p196 = pneg %p119
      %p197 = pneg %p116
      %s198 = sadd.s32 %s20, %s21
      %s199 = smul.u32 8, %s198
      %p200 = scmp.lt.s32.totalorder %s199, 15
      %s201 = scalar_select %p200, %s199, 15
      %s202 = smul.addr %s201, 8
      %s203 = scalar_lea.vmem %s3, %s202
      %p204 = pneg %p145
      %p205 = pneg %p142
      %p206 = scmp.lt.s32.totalorder %s20, 1
      %s207 = scalar_select %p206, %s20, 1
      %s208 = smul.addr %s207, 2
      %s209 = scalar_lea.vmem %s4, %s208
      %p210 = scmp.lt.s32.totalorder %s20, 1
      %s211 = scalar_select %p210, %s20, 1
      %s212 = smul.addr %s211, 20
      %s213 = smul.addr %s212, 4
      %s214 = scalar_lea.vmem %s0, %s213
      %s215 = sadd.s32 %s20, %s21
      %s216 = smul.u32 8, %s215
      %p217 = scmp.lt.s32.totalorder %s216, 15
      %s218 = scalar_select %p217, %s216, 15
      %s219 = smul.addr %s218, 8
      %s220 = scalar_lea.vmem %s3, %s219
      %s221 = sadd.s32 %s20, %s21
      %s222 = smul.u32 8, %s221
      %p223 = scmp.lt.s32.totalorder %s20, 1
      %s224 = scalar_select %p223, %s20, 1
      %s225 = smul.addr %s224, 2
      %s226 = scalar_lea.vmem %s4, %s225
      %s228 = smul.u32 %s21, 8
      %s229 = smul.u32 %s228, 2
      %s230 = smul.addr %s229, 4
      %s231 = scalar_lea.vmem %s214, %s230
      %v232 = vld [vmem:[%s231] sm:$0xf]
      %v233 = vld [vmem:[%s231 + $0x8] sm:$0xf]
      %v234 = vld [vmem:[%s231 + $0x10] sm:$0xf]
      %v235 = vld [vmem:[%s231 + $0x18] sm:$0xf]
      %v236 = vld [vmem:[%s231 + $0x20] sm:$0xf]
      %v237 = vld [vmem:[%s231 + $0x28] sm:$0xf]
      %v238 = vld [vmem:[%s231 + $0x30] sm:$0xf]
      %v239 = vld [vmem:[%s231 + $0x38] sm:$0xf]
      %v240 = vld [vmem:[%s1] sm:$0xf]
      %v241 = vld [vmem:[%s231 + $0x4] sm:$0x1]
      %v242 = vld [vmem:[%s231 + $0xc] sm:$0x1]
      %v243 = vld [vmem:[%s231 + $0x14] sm:$0x1]
      %v244 = vld [vmem:[%s231 + $0x1c] sm:$0x1]
      %v245 = vld [vmem:[%s231 + $0x24] sm:$0x1]
      %v246 = vld [vmem:[%s231 + $0x2c] sm:$0x1]
      %v247 = vld [vmem:[%s231 + $0x34] sm:$0x1]
      %v248 = vld [vmem:[%s231 + $0x3c] sm:$0x1]
      %vm249 = vsmask.f32 3328
      %vm250 = vsmask.f32 7440
      %vm251 = vmor %vm249, %vm250
      %v253 = vshrl.u32 %v232, 16
      %v255 = vrot.slane %v253, 4
      %v256 = vshll.u32 %v232, 16
      %v258 = vrot.slane %v256, 5
      %v259 = vor.u32 %v255, %v258
      %v260 = vrot.slane %v259, 4
      %v262 = vshll.u32 %v241, 16
      %v264 = vrot.slane %v262, 5
      %v265 = vsel %vm251, %v260, %v264
      %v267 = vshrl.u32 %v233, 16
      %v269 = vrot.slane %v267, 4
      %v270 = vshll.u32 %v233, 16
      %v272 = vrot.slane %v270, 5
      %v273 = vor.u32 %v269, %v272
      %v274 = vrot.slane %v273, 4
      %v276 = vshll.u32 %v242, 16
      %v278 = vrot.slane %v276, 5
      %v279 = vsel %vm251, %v274, %v278
      %v281 = vshrl.u32 %v234, 16
      %v283 = vrot.slane %v281, 4
      %v284 = vshll.u32 %v234, 16
      %v286 = vrot.slane %v284, 5
      %v287 = vor.u32 %v283, %v286
      %v288 = vrot.slane %v287, 4
      %v290 = vshll.u32 %v243, 16
      %v292 = vrot.slane %v290, 5
      %v293 = vsel %vm251, %v288, %v292
      %v295 = vshrl.u32 %v235, 16
      %v297 = vrot.slane %v295, 4
      %v298 = vshll.u32 %v235, 16
      %v300 = vrot.slane %v298, 5
      %v301 = vor.u32 %v297, %v300
      %v302 = vrot.slane %v301, 4
      %v304 = vshll.u32 %v244, 16
      %v306 = vrot.slane %v304, 5
      %v307 = vsel %vm251, %v302, %v306
      %v309 = vshrl.u32 %v236, 16
      %v311 = vrot.slane %v309, 4
      %v312 = vshll.u32 %v236, 16
      %v314 = vrot.slane %v312, 5
      %v315 = vor.u32 %v311, %v314
      %v316 = vrot.slane %v315, 4
      %v318 = vshll.u32 %v245, 16
      %v320 = vrot.slane %v318, 5
      %v321 = vsel %vm251, %v316, %v320
      %v323 = vshrl.u32 %v237, 16
      %v325 = vrot.slane %v323, 4
      %v326 = vshll.u32 %v237, 16
      %v328 = vrot.slane %v326, 5
      %v329 = vor.u32 %v325, %v328
      %v330 = vrot.slane %v329, 4
      %v332 = vshll.u32 %v246, 16
      %v334 = vrot.slane %v332, 5
      %v335 = vsel %vm251, %v330, %v334
      %v337 = vshrl.u32 %v238, 16
      %v339 = vrot.slane %v337, 4
      %v340 = vshll.u32 %v238, 16
      %v342 = vrot.slane %v340, 5
      %v343 = vor.u32 %v339, %v342
      %v344 = vrot.slane %v343, 4
      %v346 = vshll.u32 %v247, 16
      %v348 = vrot.slane %v346, 5
      %v349 = vsel %vm251, %v344, %v348
      %v351 = vshrl.u32 %v239, 16
      %v353 = vrot.slane %v351, 4
      %v354 = vshll.u32 %v239, 16
      %v356 = vrot.slane %v354, 5
      %v357 = vor.u32 %v353, %v356
      %v358 = vrot.slane %v357, 4
      %v360 = vshll.u32 %v248, 16
      %v362 = vrot.slane %v360, 5
      %v363 = vsel %vm251, %v358, %v362
      %s364 = scalar_lea.vmem %s1, 4
      %v365 = vld [vmem:[%s364] sm:$0xf]
      %v366 = vunpack.c.l.b16 %v265
      %v367 = vunpack.c.l.b16 %v279
      %v368 = vunpack.c.l.b16 %v293
      %v369 = vunpack.c.l.b16 %v307
      %v370 = vunpack.c.l.b16 %v321
      %v371 = vunpack.c.l.b16 %v335
      %v372 = vunpack.c.l.b16 %v349
      %v373 = vunpack.c.l.b16 %v363
      %v374 = vpack.c.b16 %v367, %v366
      %v375 = vpack.c.b16 %v369, %v368
      %v376 = vpack.c.b16 %v371, %v370
      %v377 = vpack.c.b16 %v373, %v372
      %vm378 = vcmask 64512
      %v380 = vsel %vm378, %v374, 0
      %v383 = vsel %vm378, %v375, 0
      %v386 = vsel %vm378, %v376, 0
      %v389 = vsel %vm378, %v377, 0
      %vm391 = vcmask 1043456
      %v393 = vsel %vm391, %v365, 0
      %395 = vmatprep.subr.bf16.mxu0 0
      %396 = vmatpush1.bf16.msra.mxu0 0
      %397 = vmatprep.subr.bf16.mxu0 0
      %398 = vmatpush1.bf16.msra.mxu0 0
      %399 = vmatprep.subr.bf16.mxu0 0
      %400 = vmatpush1.bf16.msra.mxu0 0
      %401 = vmatprep.subr.bf16.mxu0 0
      %402 = vmatpush1.bf16.msra.mxu0 0
      %403 = vmatprep.subr.bf16.mxu0 0
      %404 = vmatpush1.bf16.msra.mxu0 0
      %405 = vmatprep.subr.bf16.mxu0 0
      %406 = vmatpush1.bf16.msra.mxu0 0
      %407 = vmatprep.subr.bf16.mxu0 0
      %408 = vmatpush1.bf16.msra.mxu0 0
      %409 = vmatprep.subr.bf16.mxu0 0
      %410 = vmatpush1.bf16.msra.mxu0 %v393
      %411 = vmatprep.subr.bf16.mxu0 0
      %412 = vmatpush2.bf16.msra.mxu0 0
      %413 = vmatprep.subr.bf16.mxu0 0
      %414 = vmatpush2.bf16.msra.mxu0 0
      %415 = vmatprep.subr.bf16.mxu0 0
      %416 = vmatpush2.bf16.msra.mxu0 0
      %417 = vmatprep.subr.bf16.mxu0 0
      %418 = vmatpush2.bf16.msra.mxu0 0
      %419 = vmatprep.subr.bf16.mxu0 0
      %420 = vmatpush2.bf16.msra.mxu0 0
      %421 = vmatprep.subr.bf16.mxu0 0
      %422 = vmatpush2.bf16.msra.mxu0 0
      %423 = vmatprep.subr.bf16.mxu0 0
      %424 = vmatpush2.bf16.msra.mxu0 0
      %425 = vmatprep.subr.bf16.mxu0 0
      %426 = vmatpush2.bf16.msra.mxu0 0
      %427 = vmatprep.mubr.bf16.mxu0 0
      %428 = vmatmul.mubr.bf16.gmra.mxu0 %v380
      %v429 = vpop.f32.mrf.mxu0
      %v430 = vadd.f32 0.0, %v429
      %v431 = vpop.f32.mrf.mxu0
      %v432 = vpop.f32.mrf.mxu0
      %v433 = vadd.f32 0.0, %v432
      %v434 = vpop.f32.mrf.mxu0
      %435 = vmatprep.mubr.bf16.mxu0 0
      %436 = vmatmul.mubr.bf16.gmra.mxu0 %v383
      %v437 = vpop.f32.mrf.mxu0
      %v438 = vadd.f32 0.0, %v437
      %v439 = vpop.f32.mrf.mxu0
      %v440 = vpop.f32.mrf.mxu0
      %v441 = vadd.f32 0.0, %v440
      %v442 = vpop.f32.mrf.mxu0
      %443 = vmatprep.mubr.bf16.mxu0 0
      %444 = vmatmul.mubr.bf16.gmra.mxu0 %v386
      %v445 = vpop.f32.mrf.mxu0
      %v446 = vadd.f32 0.0, %v445
      %v447 = vpop.f32.mrf.mxu0
      %v448 = vpop.f32.mrf.mxu0
      %v449 = vadd.f32 0.0, %v448
      %v450 = vpop.f32.mrf.mxu0
      %451 = vmatprep.mubr.bf16.mxu0 0
      %452 = vmatmul.mubr.bf16.gmra.mxu0 %v389
      %v453 = vpop.f32.mrf.mxu0
      %v454 = vadd.f32 0.0, %v453
      %v455 = vpop.f32.mrf.mxu0
      %v456 = vpop.f32.mrf.mxu0
      %v457 = vadd.f32 0.0, %v456
      %v458 = vpop.f32.mrf.mxu0
      %459 = vdwg.mxu0
      %v468 = vunpack.c.l.b16 %v232
      %v469 = vunpack.c.l.b16 %v233
      %v470 = vunpack.c.l.b16 %v234
      %v471 = vunpack.c.l.b16 %v235
      %v472 = vunpack.c.l.b16 %v236
      %v473 = vunpack.c.l.b16 %v237
      %v474 = vunpack.c.l.b16 %v238
      %v475 = vunpack.c.l.b16 %v239
      %v476 = vpack.c.b16 %v469, %v468
      %v477 = vpack.c.b16 %v471, %v470
      %v478 = vpack.c.b16 %v473, %v472
      %v479 = vpack.c.b16 %v475, %v474
      %v481 = vsel %vm378, %v476, 0
      %v484 = vsel %vm378, %v477, 0
      %v487 = vsel %vm378, %v478, 0
      %v490 = vsel %vm378, %v479, 0
      %v493 = vsel %vm391, %v240, 0
      %495 = vmatprep.subr.bf16.mxu0 0
      %496 = vmatpush1.bf16.msra.mxu0 0
      %497 = vmatprep.subr.bf16.mxu0 0
      %498 = vmatpush1.bf16.msra.mxu0 0
      %499 = vmatprep.subr.bf16.mxu0 0
      %500 = vmatpush1.bf16.msra.mxu0 0
      %501 = vmatprep.subr.bf16.mxu0 0
      %502 = vmatpush1.bf16.msra.mxu0 0
      %503 = vmatprep.subr.bf16.mxu0 0
      %504 = vmatpush1.bf16.msra.mxu0 0
      %505 = vmatprep.subr.bf16.mxu0 0
      %506 = vmatpush1.bf16.msra.mxu0 0
      %507 = vmatprep.subr.bf16.mxu0 0
      %508 = vmatpush1.bf16.msra.mxu0 0
      %509 = vmatprep.subr.bf16.mxu0 0
      %510 = vmatpush1.bf16.msra.mxu0 %v493
      %511 = vmatprep.subr.bf16.mxu0 0
      %512 = vmatpush2.bf16.msra.mxu0 0
      %513 = vmatprep.subr.bf16.mxu0 0
      %514 = vmatpush2.bf16.msra.mxu0 0
      %515 = vmatprep.subr.bf16.mxu0 0
      %516 = vmatpush2.bf16.msra.mxu0 0
      %517 = vmatprep.subr.bf16.mxu0 0
      %518 = vmatpush2.bf16.msra.mxu0 0
      %519 = vmatprep.subr.bf16.mxu0 0
      %520 = vmatpush2.bf16.msra.mxu0 0
      %521 = vmatprep.subr.bf16.mxu0 0
      %522 = vmatpush2.bf16.msra.mxu0 0
      %523 = vmatprep.subr.bf16.mxu0 0
      %524 = vmatpush2.bf16.msra.mxu0 0
      %525 = vmatprep.subr.bf16.mxu0 0
      %526 = vmatpush2.bf16.msra.mxu0 0
      %527 = vmatprep.mubr.bf16.mxu0 0
      %528 = vmatmul.mubr.bf16.gmra.mxu0 %v481
      %v529 = vpop.f32.mrf.mxu0
      %v530 = vadd.f32 %v430, %v529
      %v531 = vpop.f32.mrf.mxu0
      %v532 = vpop.f32.mrf.mxu0
      %v533 = vadd.f32 %v433, %v532
      %v534 = vpop.f32.mrf.mxu0
      %535 = vmatprep.mubr.bf16.mxu0 0
      %536 = vmatmul.mubr.bf16.gmra.mxu0 %v484
      %v537 = vpop.f32.mrf.mxu0
      %v538 = vadd.f32 %v438, %v537
      %v539 = vpop.f32.mrf.mxu0
      %v540 = vpop.f32.mrf.mxu0
      %v541 = vadd.f32 %v441, %v540
      %v542 = vpop.f32.mrf.mxu0
      %543 = vmatprep.mubr.bf16.mxu0 0
      %544 = vmatmul.mubr.bf16.gmra.mxu0 %v487
      %v545 = vpop.f32.mrf.mxu0
      %v546 = vadd.f32 %v446, %v545
      %v547 = vpop.f32.mrf.mxu0
      %v548 = vpop.f32.mrf.mxu0
      %v549 = vadd.f32 %v449, %v548
      %v550 = vpop.f32.mrf.mxu0
      %551 = vmatprep.mubr.bf16.mxu0 0
      %552 = vmatmul.mubr.bf16.gmra.mxu0 %v490
      %v553 = vpop.f32.mrf.mxu0
      %v554 = vadd.f32 %v454, %v553
      %v555 = vpop.f32.mrf.mxu0
      %v556 = vpop.f32.mrf.mxu0
      %v557 = vadd.f32 %v457, %v556
      %v558 = vpop.f32.mrf.mxu0
      %559 = vdwg.mxu0
      %v560 = vld [vmem:[%s231] sm:$0xe]
      %v561 = vld [vmem:[%s231 + $0x8] sm:$0xe]
      %v562 = vld [vmem:[%s231 + $0x10] sm:$0xe]
      %v563 = vld [vmem:[%s231 + $0x18] sm:$0xe]
      %v564 = vld [vmem:[%s231 + $0x20] sm:$0xe]
      %v565 = vld [vmem:[%s231 + $0x28] sm:$0xe]
      %v566 = vld [vmem:[%s231 + $0x30] sm:$0xe]
      %v567 = vld [vmem:[%s231 + $0x38] sm:$0xe]
      %vm584 = vcmask 1042432
      %vm585 = vcmask 1046532
      %vm586 = vmor %vm584, %vm585
      %v587 = vrot.slane %v560, 5
      %v588 = vrot.slane %v587, 4
      %v589 = vrot.slane %v241, 5
      %v590 = vsel %vm586, %v588, %v589
      %v591 = vrot.slane %v561, 5
      %v592 = vrot.slane %v591, 4
      %v593 = vrot.slane %v242, 5
      %v594 = vsel %vm586, %v592, %v593
      %v595 = vrot.slane %v562, 5
      %v596 = vrot.slane %v595, 4
      %v597 = vrot.slane %v243, 5
      %v598 = vsel %vm586, %v596, %v597
      %v599 = vrot.slane %v563, 5
      %v600 = vrot.slane %v599, 4
      %v601 = vrot.slane %v244, 5
      %v602 = vsel %vm586, %v600, %v601
      %v603 = vrot.slane %v564, 5
      %v604 = vrot.slane %v603, 4
      %v605 = vrot.slane %v245, 5
      %v606 = vsel %vm586, %v604, %v605
      %v607 = vrot.slane %v565, 5
      %v608 = vrot.slane %v607, 4
      %v609 = vrot.slane %v246, 5
      %v610 = vsel %vm586, %v608, %v609
      %v611 = vrot.slane %v566, 5
      %v612 = vrot.slane %v611, 4
      %v613 = vrot.slane %v247, 5
      %v614 = vsel %vm586, %v612, %v613
      %v615 = vrot.slane %v567, 5
      %v616 = vrot.slane %v615, 4
      %v617 = vrot.slane %v248, 5
      %v618 = vsel %vm586, %v616, %v617
      %s619 = scalar_lea.vmem %s1, 8
      %v620 = vld [vmem:[%s619] sm:$0xf]
      %v621 = vunpack.c.l.b16 %v590
      %v622 = vunpack.c.l.b16 %v594
      %v623 = vunpack.c.l.b16 %v598
      %v624 = vunpack.c.l.b16 %v602
      %v625 = vunpack.c.l.b16 %v606
      %v626 = vunpack.c.l.b16 %v610
      %v627 = vunpack.c.l.b16 %v614
      %v628 = vunpack.c.l.b16 %v618
      %v629 = vpack.c.b16 %v622, %v621
      %v630 = vpack.c.b16 %v624, %v623
      %v631 = vpack.c.b16 %v626, %v625
      %v632 = vpack.c.b16 %v628, %v627
      %v634 = vsel %vm378, %v629, 0
      %v637 = vsel %vm378, %v630, 0
      %v640 = vsel %vm378, %v631, 0
      %v643 = vsel %vm378, %v632, 0
      %v646 = vsel %vm391, %v620, 0
      %648 = vmatprep.subr.bf16.mxu0 0
      %649 = vmatpush1.bf16.msra.mxu0 0
      %650 = vmatprep.subr.bf16.mxu0 0
      %651 = vmatpush1.bf16.msra.mxu0 0
      %652 = vmatprep.subr.bf16.mxu0 0
      %653 = vmatpush1.bf16.msra.mxu0 0
      %654 = vmatprep.subr.bf16.mxu0 0
      %655 = vmatpush1.bf16.msra.mxu0 0
      %656 = vmatprep.subr.bf16.mxu0 0
      %657 = vmatpush1.bf16.msra.mxu0 0
      %658 = vmatprep.subr.bf16.mxu0 0
      %659 = vmatpush1.bf16.msra.mxu0 0
      %660 = vmatprep.subr.bf16.mxu0 0
      %661 = vmatpush1.bf16.msra.mxu0 0
      %662 = vmatprep.subr.bf16.mxu0 0
      %663 = vmatpush1.bf16.msra.mxu0 %v646
      %664 = vmatprep.subr.bf16.mxu0 0
      %665 = vmatpush2.bf16.msra.mxu0 0
      %666 = vmatprep.subr.bf16.mxu0 0
      %667 = vmatpush2.bf16.msra.mxu0 0
      %668 = vmatprep.subr.bf16.mxu0 0
      %669 = vmatpush2.bf16.msra.mxu0 0
      %670 = vmatprep.subr.bf16.mxu0 0
      %671 = vmatpush2.bf16.msra.mxu0 0
      %672 = vmatprep.subr.bf16.mxu0 0
      %673 = vmatpush2.bf16.msra.mxu0 0
      %674 = vmatprep.subr.bf16.mxu0 0
      %675 = vmatpush2.bf16.msra.mxu0 0
      %676 = vmatprep.subr.bf16.mxu0 0
      %677 = vmatpush2.bf16.msra.mxu0 0
      %678 = vmatprep.subr.bf16.mxu0 0
      %679 = vmatpush2.bf16.msra.mxu0 0
      %680 = vmatprep.mubr.bf16.mxu0 0
      %681 = vmatmul.mubr.bf16.gmra.mxu0 %v634
      %v682 = vpop.f32.mrf.mxu0
      %v683 = vadd.f32 0.0, %v682
      %v684 = vpop.f32.mrf.mxu0
      %v685 = vpop.f32.mrf.mxu0
      %v686 = vadd.f32 0.0, %v685
      %v687 = vpop.f32.mrf.mxu0
      %688 = vmatprep.mubr.bf16.mxu0 0
      %689 = vmatmul.mubr.bf16.gmra.mxu0 %v637
      %v690 = vpop.f32.mrf.mxu0
      %v691 = vadd.f32 0.0, %v690
      %v692 = vpop.f32.mrf.mxu0
      %v693 = vpop.f32.mrf.mxu0
      %v694 = vadd.f32 0.0, %v693
      %v695 = vpop.f32.mrf.mxu0
      %696 = vmatprep.mubr.bf16.mxu0 0
      %697 = vmatmul.mubr.bf16.gmra.mxu0 %v640
      %v698 = vpop.f32.mrf.mxu0
      %v699 = vadd.f32 0.0, %v698
      %v700 = vpop.f32.mrf.mxu0
      %v701 = vpop.f32.mrf.mxu0
      %v702 = vadd.f32 0.0, %v701
      %v703 = vpop.f32.mrf.mxu0
      %704 = vmatprep.mubr.bf16.mxu0 0
      %705 = vmatmul.mubr.bf16.gmra.mxu0 %v643
      %v706 = vpop.f32.mrf.mxu0
      %v707 = vadd.f32 0.0, %v706
      %v708 = vpop.f32.mrf.mxu0
      %v709 = vpop.f32.mrf.mxu0
      %v710 = vadd.f32 0.0, %v709
      %v711 = vpop.f32.mrf.mxu0
      %712 = vdwg.mxu0
      %v713 = vadd.f32 %v530, %v683
      %v714 = vadd.f32 %v533, %v686
      %v715 = vadd.f32 %v538, %v691
      %v716 = vadd.f32 %v541, %v694
      %v717 = vadd.f32 %v546, %v699
      %v718 = vadd.f32 %v549, %v702
      %v719 = vadd.f32 %v554, %v707
      %v720 = vadd.f32 %v557, %v710
      %s721 = sadd.s32 %s228, 1
      %s722 = smul.u32 %s721, 2
      %s723 = smul.addr %s722, 4
      %s724 = scalar_lea.vmem %s214, %s723
      %v725 = vld [vmem:[%s724] sm:$0xf]
      %v726 = vld [vmem:[%s724 + $0x8] sm:$0xf]
      %v727 = vld [vmem:[%s724 + $0x10] sm:$0xf]
      %v728 = vld [vmem:[%s724 + $0x18] sm:$0xf]
      %v729 = vld [vmem:[%s724 + $0x20] sm:$0xf]
      %v730 = vld [vmem:[%s724 + $0x28] sm:$0xf]
      %v731 = vld [vmem:[%s724 + $0x30] sm:$0xf]
      %v732 = vld [vmem:[%s724 + $0x38] sm:$0xf]
      %s733 = scalar_lea.vmem %s1, 12
      %v734 = vld [vmem:[%s733] sm:$0xf]
      %v743 = vunpack.c.l.b16 %v725
      %v744 = vunpack.c.l.b16 %v726
      %v745 = vunpack.c.l.b16 %v727
      %v746 = vunpack.c.l.b16 %v728
      %v747 = vunpack.c.l.b16 %v729
      %v748 = vunpack.c.l.b16 %v730
      %v749 = vunpack.c.l.b16 %v731
      %v750 = vunpack.c.l.b16 %v732
      %v751 = vpack.c.b16 %v744, %v743
      %v752 = vpack.c.b16 %v746, %v745
      %v753 = vpack.c.b16 %v748, %v747
      %v754 = vpack.c.b16 %v750, %v749
      %v756 = vsel %vm378, %v751, 0
      %v759 = vsel %vm378, %v752, 0
      %v762 = vsel %vm378, %v753, 0
      %v765 = vsel %vm378, %v754, 0
      %v768 = vsel %vm391, %v734, 0
      %770 = vmatprep.subr.bf16.mxu0 0
      %771 = vmatpush1.bf16.msra.mxu0 0
      %772 = vmatprep.subr.bf16.mxu0 0
      %773 = vmatpush1.bf16.msra.mxu0 0
      %774 = vmatprep.subr.bf16.mxu0 0
      %775 = vmatpush1.bf16.msra.mxu0 0
      %776 = vmatprep.subr.bf16.mxu0 0
      %777 = vmatpush1.bf16.msra.mxu0 0
      %778 = vmatprep.subr.bf16.mxu0 0
      %779 = vmatpush1.bf16.msra.mxu0 0
      %780 = vmatprep.subr.bf16.mxu0 0
      %781 = vmatpush1.bf16.msra.mxu0 0
      %782 = vmatprep.subr.bf16.mxu0 0
      %783 = vmatpush1.bf16.msra.mxu0 0
      %784 = vmatprep.subr.bf16.mxu0 0
      %785 = vmatpush1.bf16.msra.mxu0 %v768
      %786 = vmatprep.subr.bf16.mxu0 0
      %787 = vmatpush2.bf16.msra.mxu0 0
      %788 = vmatprep.subr.bf16.mxu0 0
      %789 = vmatpush2.bf16.msra.mxu0 0
      %790 = vmatprep.subr.bf16.mxu0 0
      %791 = vmatpush2.bf16.msra.mxu0 0
      %792 = vmatprep.subr.bf16.mxu0 0
      %793 = vmatpush2.bf16.msra.mxu0 0
      %794 = vmatprep.subr.bf16.mxu0 0
      %795 = vmatpush2.bf16.msra.mxu0 0
      %796 = vmatprep.subr.bf16.mxu0 0
      %797 = vmatpush2.bf16.msra.mxu0 0
      %798 = vmatprep.subr.bf16.mxu0 0
      %799 = vmatpush2.bf16.msra.mxu0 0
      %800 = vmatprep.subr.bf16.mxu0 0
      %801 = vmatpush2.bf16.msra.mxu0 0
      %802 = vmatprep.mubr.bf16.mxu0 0
      %803 = vmatmul.mubr.bf16.gmra.mxu0 %v756
      %v804 = vpop.f32.mrf.mxu0
      %v805 = vadd.f32 0.0, %v804
      %v806 = vpop.f32.mrf.mxu0
      %v807 = vpop.f32.mrf.mxu0
      %v808 = vadd.f32 0.0, %v807
      %v809 = vpop.f32.mrf.mxu0
      %810 = vmatprep.mubr.bf16.mxu0 0
      %811 = vmatmul.mubr.bf16.gmra.mxu0 %v759
      %v812 = vpop.f32.mrf.mxu0
      %v813 = vadd.f32 0.0, %v812
      %v814 = vpop.f32.mrf.mxu0
      %v815 = vpop.f32.mrf.mxu0
      %v816 = vadd.f32 0.0, %v815
      %v817 = vpop.f32.mrf.mxu0
      %818 = vmatprep.mubr.bf16.mxu0 0
      %819 = vmatmul.mubr.bf16.gmra.mxu0 %v762
      %v820 = vpop.f32.mrf.mxu0
      %v821 = vadd.f32 0.0, %v820
      %v822 = vpop.f32.mrf.mxu0
      %v823 = vpop.f32.mrf.mxu0
      %v824 = vadd.f32 0.0, %v823
      %v825 = vpop.f32.mrf.mxu0
      %826 = vmatprep.mubr.bf16.mxu0 0
      %827 = vmatmul.mubr.bf16.gmra.mxu0 %v765
      %v828 = vpop.f32.mrf.mxu0
      %v829 = vadd.f32 0.0, %v828
      %v830 = vpop.f32.mrf.mxu0
      %v831 = vpop.f32.mrf.mxu0
      %v832 = vadd.f32 0.0, %v831
      %v833 = vpop.f32.mrf.mxu0
      %834 = vdwg.mxu0
      %v835 = vadd.f32 %v713, %v805
      %v836 = vadd.f32 %v714, %v808
      %v837 = vadd.f32 %v715, %v813
      %v838 = vadd.f32 %v716, %v816
      %v839 = vadd.f32 %v717, %v821
      %v840 = vadd.f32 %v718, %v824
      %v841 = vadd.f32 %v719, %v829
      %v842 = vadd.f32 %v720, %v832
      %v843 = vld [vmem:[%s724] sm:$0xf]
      %v844 = vld [vmem:[%s724 + $0x4] sm:$0x1]
      %v845 = vld [vmem:[%s724 + $0x8] sm:$0xf]
      %v846 = vld [vmem:[%s724 + $0xc] sm:$0x1]
      %v847 = vld [vmem:[%s724 + $0x10] sm:$0xf]
      %v848 = vld [vmem:[%s724 + $0x14] sm:$0x1]
      %v849 = vld [vmem:[%s724 + $0x18] sm:$0xf]
      %v850 = vld [vmem:[%s724 + $0x1c] sm:$0x1]
      %v851 = vld [vmem:[%s724 + $0x20] sm:$0xf]
      %v852 = vld [vmem:[%s724 + $0x24] sm:$0x1]
      %v853 = vld [vmem:[%s724 + $0x28] sm:$0xf]
      %v854 = vld [vmem:[%s724 + $0x2c] sm:$0x1]
      %v855 = vld [vmem:[%s724 + $0x30] sm:$0xf]
      %v856 = vld [vmem:[%s724 + $0x34] sm:$0x1]
      %v857 = vld [vmem:[%s724 + $0x38] sm:$0xf]
      %v858 = vld [vmem:[%s724 + $0x3c] sm:$0x1]
      %v860 = vshrl.u32 %v843, 16
      %v862 = vrot.slane %v860, 4
      %v863 = vshll.u32 %v843, 16
      %v865 = vrot.slane %v863, 5
      %v866 = vor.u32 %v862, %v865
      %v867 = vrot.slane %v866, 4
      %v869 = vshll.u32 %v844, 16
      %v871 = vrot.slane %v869, 5
      %v872 = vsel %vm251, %v867, %v871
      %v874 = vshrl.u32 %v845, 16
      %v876 = vrot.slane %v874, 4
      %v877 = vshll.u32 %v845, 16
      %v879 = vrot.slane %v877, 5
      %v880 = vor.u32 %v876, %v879
      %v881 = vrot.slane %v880, 4
      %v883 = vshll.u32 %v846, 16
      %v885 = vrot.slane %v883, 5
      %v886 = vsel %vm251, %v881, %v885
      %v888 = vshrl.u32 %v847, 16
      %v890 = vrot.slane %v888, 4
      %v891 = vshll.u32 %v847, 16
      %v893 = vrot.slane %v891, 5
      %v894 = vor.u32 %v890, %v893
      %v895 = vrot.slane %v894, 4
      %v897 = vshll.u32 %v848, 16
      %v899 = vrot.slane %v897, 5
      %v900 = vsel %vm251, %v895, %v899
      %v902 = vshrl.u32 %v849, 16
      %v904 = vrot.slane %v902, 4
      %v905 = vshll.u32 %v849, 16
      %v907 = vrot.slane %v905, 5
      %v908 = vor.u32 %v904, %v907
      %v909 = vrot.slane %v908, 4
      %v911 = vshll.u32 %v850, 16
      %v913 = vrot.slane %v911, 5
      %v914 = vsel %vm251, %v909, %v913
      %v916 = vshrl.u32 %v851, 16
      %v918 = vrot.slane %v916, 4
      %v919 = vshll.u32 %v851, 16
      %v921 = vrot.slane %v919, 5
      %v922 = vor.u32 %v918, %v921
      %v923 = vrot.slane %v922, 4
      %v925 = vshll.u32 %v852, 16
      %v927 = vrot.slane %v925, 5
      %v928 = vsel %vm251, %v923, %v927
      %v930 = vshrl.u32 %v853, 16
      %v932 = vrot.slane %v930, 4
      %v933 = vshll.u32 %v853, 16
      %v935 = vrot.slane %v933, 5
      %v936 = vor.u32 %v932, %v935
      %v937 = vrot.slane %v936, 4
      %v939 = vshll.u32 %v854, 16
      %v941 = vrot.slane %v939, 5
      %v942 = vsel %vm251, %v937, %v941
      %v944 = vshrl.u32 %v855, 16
      %v946 = vrot.slane %v944, 4
      %v947 = vshll.u32 %v855, 16
      %v949 = vrot.slane %v947, 5
      %v950 = vor.u32 %v946, %v949
      %v951 = vrot.slane %v950, 4
      %v953 = vshll.u32 %v856, 16
      %v955 = vrot.slane %v953, 5
      %v956 = vsel %vm251, %v951, %v955
      %v958 = vshrl.u32 %v857, 16
      %v960 = vrot.slane %v958, 4
      %v961 = vshll.u32 %v857, 16
      %v963 = vrot.slane %v961, 5
      %v964 = vor.u32 %v960, %v963
      %v965 = vrot.slane %v964, 4
      %v967 = vshll.u32 %v858, 16
      %v969 = vrot.slane %v967, 5
      %v970 = vsel %vm251, %v965, %v969
      %s971 = scalar_lea.vmem %s1, 16
      %v972 = vld [vmem:[%s971] sm:$0xf]
      %v973 = vunpack.c.l.b16 %v872
      %v974 = vunpack.c.l.b16 %v886
      %v975 = vunpack.c.l.b16 %v900
      %v976 = vunpack.c.l.b16 %v914
      %v977 = vunpack.c.l.b16 %v928
      %v978 = vunpack.c.l.b16 %v942
      %v979 = vunpack.c.l.b16 %v956
      %v980 = vunpack.c.l.b16 %v970
      %v981 = vpack.c.b16 %v974, %v973
      %v982 = vpack.c.b16 %v976, %v975
      %v983 = vpack.c.b16 %v978, %v977
      %v984 = vpack.c.b16 %v980, %v979
      %v986 = vsel %vm378, %v981, 0
      %v989 = vsel %vm378, %v982, 0
      %v992 = vsel %vm378, %v983, 0
      %v995 = vsel %vm378, %v984, 0
      %v998 = vsel %vm391, %v972, 0
      %1000 = vmatprep.subr.bf16.mxu0 0
      %1001 = vmatpush1.bf16.msra.mxu0 0
      %1002 = vmatprep.subr.bf16.mxu0 0
      %1003 = vmatpush1.bf16.msra.mxu0 0
      %1004 = vmatprep.subr.bf16.mxu0 0
      %1005 = vmatpush1.bf16.msra.mxu0 0
      %1006 = vmatprep.subr.bf16.mxu0 0
      %1007 = vmatpush1.bf16.msra.mxu0 0
      %1008 = vmatprep.subr.bf16.mxu0 0
      %1009 = vmatpush1.bf16.msra.mxu0 0
      %1010 = vmatprep.subr.bf16.mxu0 0
      %1011 = vmatpush1.bf16.msra.mxu0 0
      %1012 = vmatprep.subr.bf16.mxu0 0
      %1013 = vmatpush1.bf16.msra.mxu0 0
      %1014 = vmatprep.subr.bf16.mxu0 0
      %1015 = vmatpush1.bf16.msra.mxu0 %v998
      %1016 = vmatprep.subr.bf16.mxu0 0
      %1017 = vmatpush2.bf16.msra.mxu0 0
      %1018 = vmatprep.subr.bf16.mxu0 0
      %1019 = vmatpush2.bf16.msra.mxu0 0
      %1020 = vmatprep.subr.bf16.mxu0 0
      %1021 = vmatpush2.bf16.msra.mxu0 0
      %1022 = vmatprep.subr.bf16.mxu0 0
      %1023 = vmatpush2.bf16.msra.mxu0 0
      %1024 = vmatprep.subr.bf16.mxu0 0
      %1025 = vmatpush2.bf16.msra.mxu0 0
      %1026 = vmatprep.subr.bf16.mxu0 0
      %1027 = vmatpush2.bf16.msra.mxu0 0
      %1028 = vmatprep.subr.bf16.mxu0 0
      %1029 = vmatpush2.bf16.msra.mxu0 0
      %1030 = vmatprep.subr.bf16.mxu0 0
      %1031 = vmatpush2.bf16.msra.mxu0 0
      %1032 = vmatprep.mubr.bf16.mxu0 0
      %1033 = vmatmul.mubr.bf16.gmra.mxu0 %v986
      %v1034 = vpop.f32.mrf.mxu0
      %v1035 = vadd.f32 0.0, %v1034
      %v1036 = vpop.f32.mrf.mxu0
      %v1037 = vpop.f32.mrf.mxu0
      %v1038 = vadd.f32 0.0, %v1037
      %v1039 = vpop.f32.mrf.mxu0
      %1040 = vmatprep.mubr.bf16.mxu0 0
      %1041 = vmatmul.mubr.bf16.gmra.mxu0 %v989
      %v1042 = vpop.f32.mrf.mxu0
      %v1043 = vadd.f32 0.0, %v1042
      %v1044 = vpop.f32.mrf.mxu0
      %v1045 = vpop.f32.mrf.mxu0
      %v1046 = vadd.f32 0.0, %v1045
      %v1047 = vpop.f32.mrf.mxu0
      %1048 = vmatprep.mubr.bf16.mxu0 0
      %1049 = vmatmul.mubr.bf16.gmra.mxu0 %v992
      %v1050 = vpop.f32.mrf.mxu0
      %v1051 = vadd.f32 0.0, %v1050
      %v1052 = vpop.f32.mrf.mxu0
      %v1053 = vpop.f32.mrf.mxu0
      %v1054 = vadd.f32 0.0, %v1053
      %v1055 = vpop.f32.mrf.mxu0
      %1056 = vmatprep.mubr.bf16.mxu0 0
      %1057 = vmatmul.mubr.bf16.gmra.mxu0 %v995
      %v1058 = vpop.f32.mrf.mxu0
      %v1059 = vadd.f32 0.0, %v1058
      %v1060 = vpop.f32.mrf.mxu0
      %v1061 = vpop.f32.mrf.mxu0
      %v1062 = vadd.f32 0.0, %v1061
      %v1063 = vpop.f32.mrf.mxu0
      %1064 = vdwg.mxu0
      %v1065 = vadd.f32 %v835, %v1035
      %v1066 = vadd.f32 %v836, %v1038
      %v1067 = vadd.f32 %v837, %v1043
      %v1068 = vadd.f32 %v838, %v1046
      %v1069 = vadd.f32 %v839, %v1051
      %v1070 = vadd.f32 %v840, %v1054
      %v1071 = vadd.f32 %v841, %v1059
      %v1072 = vadd.f32 %v842, %v1062
      %v1073 = vld [vmem:[%s724] sm:$0xe]
      %v1074 = vld [vmem:[%s724 + $0x8] sm:$0xe]
      %v1075 = vld [vmem:[%s724 + $0x10] sm:$0xe]
      %v1076 = vld [vmem:[%s724 + $0x18] sm:$0xe]
      %v1077 = vld [vmem:[%s724 + $0x20] sm:$0xe]
      %v1078 = vld [vmem:[%s724 + $0x28] sm:$0xe]
      %v1079 = vld [vmem:[%s724 + $0x30] sm:$0xe]
      %v1080 = vld [vmem:[%s724 + $0x38] sm:$0xe]
      %v1097 = vrot.slane %v1073, 5
      %v1098 = vrot.slane %v1097, 4
      %v1099 = vrot.slane %v844, 5
      %v1100 = vsel %vm586, %v1098, %v1099
      %v1101 = vrot.slane %v1074, 5
      %v1102 = vrot.slane %v1101, 4
      %v1103 = vrot.slane %v846, 5
      %v1104 = vsel %vm586, %v1102, %v1103
      %v1105 = vrot.slane %v1075, 5
      %v1106 = vrot.slane %v1105, 4
      %v1107 = vrot.slane %v848, 5
      %v1108 = vsel %vm586, %v1106, %v1107
      %v1109 = vrot.slane %v1076, 5
      %v1110 = vrot.slane %v1109, 4
      %v1111 = vrot.slane %v850, 5
      %v1112 = vsel %vm586, %v1110, %v1111
      %v1113 = vrot.slane %v1077, 5
      %v1114 = vrot.slane %v1113, 4
      %v1115 = vrot.slane %v852, 5
      %v1116 = vsel %vm586, %v1114, %v1115
      %v1117 = vrot.slane %v1078, 5
      %v1118 = vrot.slane %v1117, 4
      %v1119 = vrot.slane %v854, 5
      %v1120 = vsel %vm586, %v1118, %v1119
      %v1121 = vrot.slane %v1079, 5
      %v1122 = vrot.slane %v1121, 4
      %v1123 = vrot.slane %v856, 5
      %v1124 = vsel %vm586, %v1122, %v1123
      %v1125 = vrot.slane %v1080, 5
      %v1126 = vrot.slane %v1125, 4
      %v1127 = vrot.slane %v858, 5
      %v1128 = vsel %vm586, %v1126, %v1127
      %s1129 = scalar_lea.vmem %s1, 20
      %v1130 = vld [vmem:[%s1129] sm:$0xf]
      %v1131 = vunpack.c.l.b16 %v1100
      %v1132 = vunpack.c.l.b16 %v1104
      %v1133 = vunpack.c.l.b16 %v1108
      %v1134 = vunpack.c.l.b16 %v1112
      %v1135 = vunpack.c.l.b16 %v1116
      %v1136 = vunpack.c.l.b16 %v1120
      %v1137 = vunpack.c.l.b16 %v1124
      %v1138 = vunpack.c.l.b16 %v1128
      %v1139 = vpack.c.b16 %v1132, %v1131
      %v1140 = vpack.c.b16 %v1134, %v1133
      %v1141 = vpack.c.b16 %v1136, %v1135
      %v1142 = vpack.c.b16 %v1138, %v1137
      %v1144 = vsel %vm378, %v1139, 0
      %v1147 = vsel %vm378, %v1140, 0
      %v1150 = vsel %vm378, %v1141, 0
      %v1153 = vsel %vm378, %v1142, 0
      %v1156 = vsel %vm391, %v1130, 0
      %1158 = vmatprep.subr.bf16.mxu0 0
      %1159 = vmatpush1.bf16.msra.mxu0 0
      %1160 = vmatprep.subr.bf16.mxu0 0
      %1161 = vmatpush1.bf16.msra.mxu0 0
      %1162 = vmatprep.subr.bf16.mxu0 0
      %1163 = vmatpush1.bf16.msra.mxu0 0
      %1164 = vmatprep.subr.bf16.mxu0 0
      %1165 = vmatpush1.bf16.msra.mxu0 0
      %1166 = vmatprep.subr.bf16.mxu0 0
      %1167 = vmatpush1.bf16.msra.mxu0 0
      %1168 = vmatprep.subr.bf16.mxu0 0
      %1169 = vmatpush1.bf16.msra.mxu0 0
      %1170 = vmatprep.subr.bf16.mxu0 0
      %1171 = vmatpush1.bf16.msra.mxu0 0
      %1172 = vmatprep.subr.bf16.mxu0 0
      %1173 = vmatpush1.bf16.msra.mxu0 %v1156
      %1174 = vmatprep.subr.bf16.mxu0 0
      %1175 = vmatpush2.bf16.msra.mxu0 0
      %1176 = vmatprep.subr.bf16.mxu0 0
      %1177 = vmatpush2.bf16.msra.mxu0 0
      %1178 = vmatprep.subr.bf16.mxu0 0
      %1179 = vmatpush2.bf16.msra.mxu0 0
      %1180 = vmatprep.subr.bf16.mxu0 0
      %1181 = vmatpush2.bf16.msra.mxu0 0
      %1182 = vmatprep.subr.bf16.mxu0 0
      %1183 = vmatpush2.bf16.msra.mxu0 0
      %1184 = vmatprep.subr.bf16.mxu0 0
      %1185 = vmatpush2.bf16.msra.mxu0 0
      %1186 = vmatprep.subr.bf16.mxu0 0
      %1187 = vmatpush2.bf16.msra.mxu0 0
      %1188 = vmatprep.subr.bf16.mxu0 0
      %1189 = vmatpush2.bf16.msra.mxu0 0
      %1190 = vmatprep.mubr.bf16.mxu0 0
      %1191 = vmatmul.mubr.bf16.gmra.mxu0 %v1144
      %v1192 = vpop.f32.mrf.mxu0
      %v1193 = vadd.f32 0.0, %v1192
      %v1194 = vpop.f32.mrf.mxu0
      %v1195 = vpop.f32.mrf.mxu0
      %v1196 = vadd.f32 0.0, %v1195
      %v1197 = vpop.f32.mrf.mxu0
      %1198 = vmatprep.mubr.bf16.mxu0 0
      %1199 = vmatmul.mubr.bf16.gmra.mxu0 %v1147
      %v1200 = vpop.f32.mrf.mxu0
      %v1201 = vadd.f32 0.0, %v1200
      %v1202 = vpop.f32.mrf.mxu0
      %v1203 = vpop.f32.mrf.mxu0
      %v1204 = vadd.f32 0.0, %v1203
      %v1205 = vpop.f32.mrf.mxu0
      %1206 = vmatprep.mubr.bf16.mxu0 0
      %1207 = vmatmul.mubr.bf16.gmra.mxu0 %v1150
      %v1208 = vpop.f32.mrf.mxu0
      %v1209 = vadd.f32 0.0, %v1208
      %v1210 = vpop.f32.mrf.mxu0
      %v1211 = vpop.f32.mrf.mxu0
      %v1212 = vadd.f32 0.0, %v1211
      %v1213 = vpop.f32.mrf.mxu0
      %1214 = vmatprep.mubr.bf16.mxu0 0
      %1215 = vmatmul.mubr.bf16.gmra.mxu0 %v1153
      %v1216 = vpop.f32.mrf.mxu0
      %v1217 = vadd.f32 0.0, %v1216
      %v1218 = vpop.f32.mrf.mxu0
      %v1219 = vpop.f32.mrf.mxu0
      %v1220 = vadd.f32 0.0, %v1219
      %v1221 = vpop.f32.mrf.mxu0
      %1222 = vdwg.mxu0
      %v1223 = vadd.f32 %v1065, %v1193
      %v1224 = vadd.f32 %v1066, %v1196
      %v1225 = vadd.f32 %v1067, %v1201
      %v1226 = vadd.f32 %v1068, %v1204
      %v1227 = vadd.f32 %v1069, %v1209
      %v1228 = vadd.f32 %v1070, %v1212
      %v1229 = vadd.f32 %v1071, %v1217
      %v1230 = vadd.f32 %v1072, %v1220
      %s1231 = sadd.s32 %s228, 2
      %s1232 = smul.u32 %s1231, 2
      %s1233 = smul.addr %s1232, 4
      %s1234 = scalar_lea.vmem %s214, %s1233
      %v1235 = vld [vmem:[%s1234] sm:$0xf]
      %v1236 = vld [vmem:[%s1234 + $0x8] sm:$0xf]
      %v1237 = vld [vmem:[%s1234 + $0x10] sm:$0xf]
      %v1238 = vld [vmem:[%s1234 + $0x18] sm:$0xf]
      %v1239 = vld [vmem:[%s1234 + $0x20] sm:$0xf]
      %v1240 = vld [vmem:[%s1234 + $0x28] sm:$0xf]
      %v1241 = vld [vmem:[%s1234 + $0x30] sm:$0xf]
      %v1242 = vld [vmem:[%s1234 + $0x38] sm:$0xf]
      %s1243 = scalar_lea.vmem %s1, 24
      %v1244 = vld [vmem:[%s1243] sm:$0xf]
      %v1253 = vunpack.c.l.b16 %v1235
      %v1254 = vunpack.c.l.b16 %v1236
      %v1255 = vunpack.c.l.b16 %v1237
      %v1256 = vunpack.c.l.b16 %v1238
      %v1257 = vunpack.c.l.b16 %v1239
      %v1258 = vunpack.c.l.b16 %v1240
      %v1259 = vunpack.c.l.b16 %v1241
      %v1260 = vunpack.c.l.b16 %v1242
      %v1261 = vpack.c.b16 %v1254, %v1253
      %v1262 = vpack.c.b16 %v1256, %v1255
      %v1263 = vpack.c.b16 %v1258, %v1257
      %v1264 = vpack.c.b16 %v1260, %v1259
      %v1266 = vsel %vm378, %v1261, 0
      %v1269 = vsel %vm378, %v1262, 0
      %v1272 = vsel %vm378, %v1263, 0
      %v1275 = vsel %vm378, %v1264, 0
      %v1278 = vsel %vm391, %v1244, 0
      %1280 = vmatprep.subr.bf16.mxu0 0
      %1281 = vmatpush1.bf16.msra.mxu0 0
      %1282 = vmatprep.subr.bf16.mxu0 0
      %1283 = vmatpush1.bf16.msra.mxu0 0
      %1284 = vmatprep.subr.bf16.mxu0 0
      %1285 = vmatpush1.bf16.msra.mxu0 0
      %1286 = vmatprep.subr.bf16.mxu0 0
      %1287 = vmatpush1.bf16.msra.mxu0 0
      %1288 = vmatprep.subr.bf16.mxu0 0
      %1289 = vmatpush1.bf16.msra.mxu0 0
      %1290 = vmatprep.subr.bf16.mxu0 0
      %1291 = vmatpush1.bf16.msra.mxu0 0
      %1292 = vmatprep.subr.bf16.mxu0 0
      %1293 = vmatpush1.bf16.msra.mxu0 0
      %1294 = vmatprep.subr.bf16.mxu0 0
      %1295 = vmatpush1.bf16.msra.mxu0 %v1278
      %1296 = vmatprep.subr.bf16.mxu0 0
      %1297 = vmatpush2.bf16.msra.mxu0 0
      %1298 = vmatprep.subr.bf16.mxu0 0
      %1299 = vmatpush2.bf16.msra.mxu0 0
      %1300 = vmatprep.subr.bf16.mxu0 0
      %1301 = vmatpush2.bf16.msra.mxu0 0
      %1302 = vmatprep.subr.bf16.mxu0 0
      %1303 = vmatpush2.bf16.msra.mxu0 0
      %1304 = vmatprep.subr.bf16.mxu0 0
      %1305 = vmatpush2.bf16.msra.mxu0 0
      %1306 = vmatprep.subr.bf16.mxu0 0
      %1307 = vmatpush2.bf16.msra.mxu0 0
      %1308 = vmatprep.subr.bf16.mxu0 0
      %1309 = vmatpush2.bf16.msra.mxu0 0
      %1310 = vmatprep.subr.bf16.mxu0 0
      %1311 = vmatpush2.bf16.msra.mxu0 0
      %1312 = vmatprep.mubr.bf16.mxu0 0
      %1313 = vmatmul.mubr.bf16.gmra.mxu0 %v1266
      %v1314 = vpop.f32.mrf.mxu0
      %v1315 = vadd.f32 0.0, %v1314
      %v1316 = vpop.f32.mrf.mxu0
      %v1317 = vpop.f32.mrf.mxu0
      %v1318 = vadd.f32 0.0, %v1317
      %v1319 = vpop.f32.mrf.mxu0
      %1320 = vmatprep.mubr.bf16.mxu0 0
      %1321 = vmatmul.mubr.bf16.gmra.mxu0 %v1269
      %v1322 = vpop.f32.mrf.mxu0
      %v1323 = vadd.f32 0.0, %v1322
      %v1324 = vpop.f32.mrf.mxu0
      %v1325 = vpop.f32.mrf.mxu0
      %v1326 = vadd.f32 0.0, %v1325
      %v1327 = vpop.f32.mrf.mxu0
      %1328 = vmatprep.mubr.bf16.mxu0 0
      %1329 = vmatmul.mubr.bf16.gmra.mxu0 %v1272
      %v1330 = vpop.f32.mrf.mxu0
      %v1331 = vadd.f32 0.0, %v1330
      %v1332 = vpop.f32.mrf.mxu0
      %v1333 = vpop.f32.mrf.mxu0
      %v1334 = vadd.f32 0.0, %v1333
      %v1335 = vpop.f32.mrf.mxu0
      %1336 = vmatprep.mubr.bf16.mxu0 0
      %1337 = vmatmul.mubr.bf16.gmra.mxu0 %v1275
      %v1338 = vpop.f32.mrf.mxu0
      %v1339 = vadd.f32 0.0, %v1338
      %v1340 = vpop.f32.mrf.mxu0
      %v1341 = vpop.f32.mrf.mxu0
      %v1342 = vadd.f32 0.0, %v1341
      %v1343 = vpop.f32.mrf.mxu0
      %1344 = vdwg.mxu0
      %v1345 = vadd.f32 %v1223, %v1315
      %v1346 = vadd.f32 %v1224, %v1318
      %v1347 = vadd.f32 %v1225, %v1323
      %v1348 = vadd.f32 %v1226, %v1326
      %v1349 = vadd.f32 %v1227, %v1331
      %v1350 = vadd.f32 %v1228, %v1334
      %v1351 = vadd.f32 %v1229, %v1339
      %v1352 = vadd.f32 %v1230, %v1342
      %v1353 = vld [vmem:[%s1234] sm:$0xf]
      %v1354 = vld [vmem:[%s1234 + $0x4] sm:$0x1]
      %v1355 = vld [vmem:[%s1234 + $0x8] sm:$0xf]
      %v1356 = vld [vmem:[%s1234 + $0xc] sm:$0x1]
      %v1357 = vld [vmem:[%s1234 + $0x10] sm:$0xf]
      %v1358 = vld [vmem:[%s1234 + $0x14] sm:$0x1]
      %v1359 = vld [vmem:[%s1234 + $0x18] sm:$0xf]
      %v1360 = vld [vmem:[%s1234 + $0x1c] sm:$0x1]
      %v1361 = vld [vmem:[%s1234 + $0x20] sm:$0xf]
      %v1362 = vld [vmem:[%s1234 + $0x24] sm:$0x1]
      %v1363 = vld [vmem:[%s1234 + $0x28] sm:$0xf]
      %v1364 = vld [vmem:[%s1234 + $0x2c] sm:$0x1]
      %v1365 = vld [vmem:[%s1234 + $0x30] sm:$0xf]
      %v1366 = vld [vmem:[%s1234 + $0x34] sm:$0x1]
      %v1367 = vld [vmem:[%s1234 + $0x38] sm:$0xf]
      %v1368 = vld [vmem:[%s1234 + $0x3c] sm:$0x1]
      %v1370 = vshrl.u32 %v1353, 16
      %v1372 = vrot.slane %v1370, 4
      %v1373 = vshll.u32 %v1353, 16
      %v1375 = vrot.slane %v1373, 5
      %v1376 = vor.u32 %v1372, %v1375
      %v1377 = vrot.slane %v1376, 4
      %v1379 = vshll.u32 %v1354, 16
      %v1381 = vrot.slane %v1379, 5
      %v1382 = vsel %vm251, %v1377, %v1381
      %v1384 = vshrl.u32 %v1355, 16
      %v1386 = vrot.slane %v1384, 4
      %v1387 = vshll.u32 %v1355, 16
      %v1389 = vrot.slane %v1387, 5
      %v1390 = vor.u32 %v1386, %v1389
      %v1391 = vrot.slane %v1390, 4
      %v1393 = vshll.u32 %v1356, 16
      %v1395 = vrot.slane %v1393, 5
      %v1396 = vsel %vm251, %v1391, %v1395
      %v1398 = vshrl.u32 %v1357, 16
      %v1400 = vrot.slane %v1398, 4
      %v1401 = vshll.u32 %v1357, 16
      %v1403 = vrot.slane %v1401, 5
      %v1404 = vor.u32 %v1400, %v1403
      %v1405 = vrot.slane %v1404, 4
      %v1407 = vshll.u32 %v1358, 16
      %v1409 = vrot.slane %v1407, 5
      %v1410 = vsel %vm251, %v1405, %v1409
      %v1412 = vshrl.u32 %v1359, 16
      %v1414 = vrot.slane %v1412, 4
      %v1415 = vshll.u32 %v1359, 16
      %v1417 = vrot.slane %v1415, 5
      %v1418 = vor.u32 %v1414, %v1417
      %v1419 = vrot.slane %v1418, 4
      %v1421 = vshll.u32 %v1360, 16
      %v1423 = vrot.slane %v1421, 5
      %v1424 = vsel %vm251, %v1419, %v1423
      %v1426 = vshrl.u32 %v1361, 16
      %v1428 = vrot.slane %v1426, 4
      %v1429 = vshll.u32 %v1361, 16
      %v1431 = vrot.slane %v1429, 5
      %v1432 = vor.u32 %v1428, %v1431
      %v1433 = vrot.slane %v1432, 4
      %v1435 = vshll.u32 %v1362, 16
      %v1437 = vrot.slane %v1435, 5
      %v1438 = vsel %vm251, %v1433, %v1437
      %v1440 = vshrl.u32 %v1363, 16
      %v1442 = vrot.slane %v1440, 4
      %v1443 = vshll.u32 %v1363, 16
      %v1445 = vrot.slane %v1443, 5
      %v1446 = vor.u32 %v1442, %v1445
      %v1447 = vrot.slane %v1446, 4
      %v1449 = vshll.u32 %v1364, 16
      %v1451 = vrot.slane %v1449, 5
      %v1452 = vsel %vm251, %v1447, %v1451
      %v1454 = vshrl.u32 %v1365, 16
      %v1456 = vrot.slane %v1454, 4
      %v1457 = vshll.u32 %v1365, 16
      %v1459 = vrot.slane %v1457, 5
      %v1460 = vor.u32 %v1456, %v1459
      %v1461 = vrot.slane %v1460, 4
      %v1463 = vshll.u32 %v1366, 16
      %v1465 = vrot.slane %v1463, 5
      %v1466 = vsel %vm251, %v1461, %v1465
      %v1468 = vshrl.u32 %v1367, 16
      %v1470 = vrot.slane %v1468, 4
      %v1471 = vshll.u32 %v1367, 16
      %v1473 = vrot.slane %v1471, 5
      %v1474 = vor.u32 %v1470, %v1473
      %v1475 = vrot.slane %v1474, 4
      %v1477 = vshll.u32 %v1368, 16
      %v1479 = vrot.slane %v1477, 5
      %v1480 = vsel %vm251, %v1475, %v1479
      %s1481 = scalar_lea.vmem %s1, 28
      %v1482 = vld [vmem:[%s1481] sm:$0xf]
      %v1483 = vunpack.c.l.b16 %v1382
      %v1484 = vunpack.c.l.b16 %v1396
      %v1485 = vunpack.c.l.b16 %v1410
      %v1486 = vunpack.c.l.b16 %v1424
      %v1487 = vunpack.c.l.b16 %v1438
      %v1488 = vunpack.c.l.b16 %v1452
      %v1489 = vunpack.c.l.b16 %v1466
      %v1490 = vunpack.c.l.b16 %v1480
      %v1491 = vpack.c.b16 %v1484, %v1483
      %v1492 = vpack.c.b16 %v1486, %v1485
      %v1493 = vpack.c.b16 %v1488, %v1487
      %v1494 = vpack.c.b16 %v1490, %v1489
      %v1496 = vsel %vm378, %v1491, 0
      %v1499 = vsel %vm378, %v1492, 0
      %v1502 = vsel %vm378, %v1493, 0
      %v1505 = vsel %vm378, %v1494, 0
      %v1508 = vsel %vm391, %v1482, 0
      %1510 = vmatprep.subr.bf16.mxu0 0
      %1511 = vmatpush1.bf16.msra.mxu0 0
      %1512 = vmatprep.subr.bf16.mxu0 0
      %1513 = vmatpush1.bf16.msra.mxu0 0
      %1514 = vmatprep.subr.bf16.mxu0 0
      %1515 = vmatpush1.bf16.msra.mxu0 0
      %1516 = vmatprep.subr.bf16.mxu0 0
      %1517 = vmatpush1.bf16.msra.mxu0 0
      %1518 = vmatprep.subr.bf16.mxu0 0
      %1519 = vmatpush1.bf16.msra.mxu0 0
      %1520 = vmatprep.subr.bf16.mxu0 0
      %1521 = vmatpush1.bf16.msra.mxu0 0
      %1522 = vmatprep.subr.bf16.mxu0 0
      %1523 = vmatpush1.bf16.msra.mxu0 0
      %1524 = vmatprep.subr.bf16.mxu0 0
      %1525 = vmatpush1.bf16.msra.mxu0 %v1508
      %1526 = vmatprep.subr.bf16.mxu0 0
      %1527 = vmatpush2.bf16.msra.mxu0 0
      %1528 = vmatprep.subr.bf16.mxu0 0
      %1529 = vmatpush2.bf16.msra.mxu0 0
      %1530 = vmatprep.subr.bf16.mxu0 0
      %1531 = vmatpush2.bf16.msra.mxu0 0
      %1532 = vmatprep.subr.bf16.mxu0 0
      %1533 = vmatpush2.bf16.msra.mxu0 0
      %1534 = vmatprep.subr.bf16.mxu0 0
      %1535 = vmatpush2.bf16.msra.mxu0 0
      %1536 = vmatprep.subr.bf16.mxu0 0
      %1537 = vmatpush2.bf16.msra.mxu0 0
      %1538 = vmatprep.subr.bf16.mxu0 0
      %1539 = vmatpush2.bf16.msra.mxu0 0
      %1540 = vmatprep.subr.bf16.mxu0 0
      %1541 = vmatpush2.bf16.msra.mxu0 0
      %1542 = vmatprep.mubr.bf16.mxu0 0
      %1543 = vmatmul.mubr.bf16.gmra.mxu0 %v1496
      %v1544 = vpop.f32.mrf.mxu0
      %v1545 = vadd.f32 0.0, %v1544
      %v1546 = vpop.f32.mrf.mxu0
      %v1547 = vpop.f32.mrf.mxu0
      %v1548 = vadd.f32 0.0, %v1547
      %v1549 = vpop.f32.mrf.mxu0
      %1550 = vmatprep.mubr.bf16.mxu0 0
      %1551 = vmatmul.mubr.bf16.gmra.mxu0 %v1499
      %v1552 = vpop.f32.mrf.mxu0
      %v1553 = vadd.f32 0.0, %v1552
      %v1554 = vpop.f32.mrf.mxu0
      %v1555 = vpop.f32.mrf.mxu0
      %v1556 = vadd.f32 0.0, %v1555
      %v1557 = vpop.f32.mrf.mxu0
      %1558 = vmatprep.mubr.bf16.mxu0 0
      %1559 = vmatmul.mubr.bf16.gmra.mxu0 %v1502
      %v1560 = vpop.f32.mrf.mxu0
      %v1561 = vadd.f32 0.0, %v1560
      %v1562 = vpop.f32.mrf.mxu0
      %v1563 = vpop.f32.mrf.mxu0
      %v1564 = vadd.f32 0.0, %v1563
      %v1565 = vpop.f32.mrf.mxu0
      %1566 = vmatprep.mubr.bf16.mxu0 0
      %1567 = vmatmul.mubr.bf16.gmra.mxu0 %v1505
      %v1568 = vpop.f32.mrf.mxu0
      %v1569 = vadd.f32 0.0, %v1568
      %v1570 = vpop.f32.mrf.mxu0
      %v1571 = vpop.f32.mrf.mxu0
      %v1572 = vadd.f32 0.0, %v1571
      %v1573 = vpop.f32.mrf.mxu0
      %1574 = vdwg.mxu0
      %v1575 = vadd.f32 %v1345, %v1545
      %v1576 = vadd.f32 %v1346, %v1548
      %v1577 = vadd.f32 %v1347, %v1553
      %v1578 = vadd.f32 %v1348, %v1556
      %v1579 = vadd.f32 %v1349, %v1561
      %v1580 = vadd.f32 %v1350, %v1564
      %v1581 = vadd.f32 %v1351, %v1569
      %v1582 = vadd.f32 %v1352, %v1572
      %v1583 = vld [vmem:[%s1234] sm:$0xe]
      %v1584 = vld [vmem:[%s1234 + $0x8] sm:$0xe]
      %v1585 = vld [vmem:[%s1234 + $0x10] sm:$0xe]
      %v1586 = vld [vmem:[%s1234 + $0x18] sm:$0xe]
      %v1587 = vld [vmem:[%s1234 + $0x20] sm:$0xe]
      %v1588 = vld [vmem:[%s1234 + $0x28] sm:$0xe]
      %v1589 = vld [vmem:[%s1234 + $0x30] sm:$0xe]
      %v1590 = vld [vmem:[%s1234 + $0x38] sm:$0xe]
      %v1607 = vrot.slane %v1583, 5
      %v1608 = vrot.slane %v1607, 4
      %v1609 = vrot.slane %v1354, 5
      %v1610 = vsel %vm586, %v1608, %v1609
      %v1611 = vrot.slane %v1584, 5
      %v1612 = vrot.slane %v1611, 4
      %v1613 = vrot.slane %v1356, 5
      %v1614 = vsel %vm586, %v1612, %v1613
      %v1615 = vrot.slane %v1585, 5
      %v1616 = vrot.slane %v1615, 4
      %v1617 = vrot.slane %v1358, 5
      %v1618 = vsel %vm586, %v1616, %v1617
      %v1619 = vrot.slane %v1586, 5
      %v1620 = vrot.slane %v1619, 4
      %v1621 = vrot.slane %v1360, 5
      %v1622 = vsel %vm586, %v1620, %v1621
      %v1623 = vrot.slane %v1587, 5
      %v1624 = vrot.slane %v1623, 4
      %v1625 = vrot.slane %v1362, 5
      %v1626 = vsel %vm586, %v1624, %v1625
      %v1627 = vrot.slane %v1588, 5
      %v1628 = vrot.slane %v1627, 4
      %v1629 = vrot.slane %v1364, 5
      %v1630 = vsel %vm586, %v1628, %v1629
      %v1631 = vrot.slane %v1589, 5
      %v1632 = vrot.slane %v1631, 4
      %v1633 = vrot.slane %v1366, 5
      %v1634 = vsel %vm586, %v1632, %v1633
      %v1635 = vrot.slane %v1590, 5
      %v1636 = vrot.slane %v1635, 4
      %v1637 = vrot.slane %v1368, 5
      %v1638 = vsel %vm586, %v1636, %v1637
      %s1639 = scalar_lea.vmem %s1, 32
      %v1640 = vld [vmem:[%s1639] sm:$0xf]
      %v1641 = vunpack.c.l.b16 %v1610
      %v1642 = vunpack.c.l.b16 %v1614
      %v1643 = vunpack.c.l.b16 %v1618
      %v1644 = vunpack.c.l.b16 %v1622
      %v1645 = vunpack.c.l.b16 %v1626
      %v1646 = vunpack.c.l.b16 %v1630
      %v1647 = vunpack.c.l.b16 %v1634
      %v1648 = vunpack.c.l.b16 %v1638
      %v1649 = vpack.c.b16 %v1642, %v1641
      %v1650 = vpack.c.b16 %v1644, %v1643
      %v1651 = vpack.c.b16 %v1646, %v1645
      %v1652 = vpack.c.b16 %v1648, %v1647
      %v1654 = vsel %vm378, %v1649, 0
      %v1657 = vsel %vm378, %v1650, 0
      %v1660 = vsel %vm378, %v1651, 0
      %v1663 = vsel %vm378, %v1652, 0
      %v1666 = vsel %vm391, %v1640, 0
      %1668 = vmatprep.subr.bf16.mxu0 0
      %1669 = vmatpush1.bf16.msra.mxu0 0
      %1670 = vmatprep.subr.bf16.mxu0 0
      %1671 = vmatpush1.bf16.msra.mxu0 0
      %1672 = vmatprep.subr.bf16.mxu0 0
      %1673 = vmatpush1.bf16.msra.mxu0 0
      %1674 = vmatprep.subr.bf16.mxu0 0
      %1675 = vmatpush1.bf16.msra.mxu0 0
      %1676 = vmatprep.subr.bf16.mxu0 0
      %1677 = vmatpush1.bf16.msra.mxu0 0
      %1678 = vmatprep.subr.bf16.mxu0 0
      %1679 = vmatpush1.bf16.msra.mxu0 0
      %1680 = vmatprep.subr.bf16.mxu0 0
      %1681 = vmatpush1.bf16.msra.mxu0 0
      %1682 = vmatprep.subr.bf16.mxu0 0
      %1683 = vmatpush1.bf16.msra.mxu0 %v1666
      %1684 = vmatprep.subr.bf16.mxu0 0
      %1685 = vmatpush2.bf16.msra.mxu0 0
      %1686 = vmatprep.subr.bf16.mxu0 0
      %1687 = vmatpush2.bf16.msra.mxu0 0
      %1688 = vmatprep.subr.bf16.mxu0 0
      %1689 = vmatpush2.bf16.msra.mxu0 0
      %1690 = vmatprep.subr.bf16.mxu0 0
      %1691 = vmatpush2.bf16.msra.mxu0 0
      %1692 = vmatprep.subr.bf16.mxu0 0
      %1693 = vmatpush2.bf16.msra.mxu0 0
      %1694 = vmatprep.subr.bf16.mxu0 0
      %1695 = vmatpush2.bf16.msra.mxu0 0
      %1696 = vmatprep.subr.bf16.mxu0 0
      %1697 = vmatpush2.bf16.msra.mxu0 0
      %1698 = vmatprep.subr.bf16.mxu0 0
      %1699 = vmatpush2.bf16.msra.mxu0 0
      %1700 = vmatprep.mubr.bf16.mxu0 0
      %1701 = vmatmul.mubr.bf16.gmra.mxu0 %v1654
      %v1702 = vpop.f32.mrf.mxu0
      %v1703 = vadd.f32 0.0, %v1702
      %v1704 = vpop.f32.mrf.mxu0
      %v1705 = vpop.f32.mrf.mxu0
      %v1706 = vadd.f32 0.0, %v1705
      %v1707 = vpop.f32.mrf.mxu0
      %1708 = vmatprep.mubr.bf16.mxu0 0
      %1709 = vmatmul.mubr.bf16.gmra.mxu0 %v1657
      %v1710 = vpop.f32.mrf.mxu0
      %v1711 = vadd.f32 0.0, %v1710
      %v1712 = vpop.f32.mrf.mxu0
      %v1713 = vpop.f32.mrf.mxu0
      %v1714 = vadd.f32 0.0, %v1713
      %v1715 = vpop.f32.mrf.mxu0
      %1716 = vmatprep.mubr.bf16.mxu0 0
      %1717 = vmatmul.mubr.bf16.gmra.mxu0 %v1660
      %v1718 = vpop.f32.mrf.mxu0
      %v1719 = vadd.f32 0.0, %v1718
      %v1720 = vpop.f32.mrf.mxu0
      %v1721 = vpop.f32.mrf.mxu0
      %v1722 = vadd.f32 0.0, %v1721
      %v1723 = vpop.f32.mrf.mxu0
      %1724 = vmatprep.mubr.bf16.mxu0 0
      %1725 = vmatmul.mubr.bf16.gmra.mxu0 %v1663
      %v1726 = vpop.f32.mrf.mxu0
      %v1727 = vadd.f32 0.0, %v1726
      %v1728 = vpop.f32.mrf.mxu0
      %v1729 = vpop.f32.mrf.mxu0
      %v1730 = vadd.f32 0.0, %v1729
      %v1731 = vpop.f32.mrf.mxu0
      %1732 = vdwg.mxu0
      %v1733 = vadd.f32 %v1575, %v1703
      %v1734 = vadd.f32 %v1576, %v1706
      %v1735 = vadd.f32 %v1577, %v1711
      %v1736 = vadd.f32 %v1578, %v1714
      %v1737 = vadd.f32 %v1579, %v1719
      %v1738 = vadd.f32 %v1580, %v1722
      %v1739 = vadd.f32 %v1581, %v1727
      %v1740 = vadd.f32 %v1582, %v1730
      %v1741 = vld [vmem:[%s2] sm:$0x1]
      %v1743 = vlaneseq
      %v1744 = vshrl.u32 %v1743, 7
      %v1745 = vsub.s32 0, %v1744
      %v1746 = vrot.slane %v1741, %v1745
      %v1748 = vadd.f32 %v1733, %v1746
      %v1749 = vadd.f32 %v1734, %v1746
      %v1750 = vadd.f32 %v1735, %v1746
      %v1751 = vadd.f32 %v1736, %v1746
      %v1752 = vadd.f32 %v1737, %v1746
      %v1753 = vadd.f32 %v1738, %v1746
      %v1754 = vadd.f32 %v1739, %v1746
      %v1755 = vadd.f32 %v1740, %v1746
      %1756 = vst [vmem:[%s220] sm:$0xff] %v1748
      %1757 = vst [vmem:[%s220 + $0x8] sm:$0xff] %v1749
      %1758 = vst [vmem:[%s220 + $0x10] sm:$0xff] %v1750
      %1759 = vst [vmem:[%s220 + $0x18] sm:$0xff] %v1751
      %1760 = vst [vmem:[%s220 + $0x20] sm:$0xff] %v1752
      %1761 = vst [vmem:[%s220 + $0x28] sm:$0xff] %v1753
      %1762 = vst [vmem:[%s220 + $0x30] sm:$0xff] %v1754
      %1763 = vst [vmem:[%s220 + $0x38] sm:$0xff] %v1755
      %v1764 = vadd.f32 %v1748, %v1749
      %v1765 = vadd.f32 %v1764, %v1750
      %v1766 = vadd.f32 %v1765, %v1751
      %v1767 = vadd.f32 %v1766, %v1752
      %v1768 = vadd.f32 %v1767, %v1753
      %v1769 = vadd.f32 %v1768, %v1754
      %v1770 = vadd.f32 %v1769, %v1755
      %v1771 = vrot.slane %v1770, 4
      %v1772 = vadd.f32 %v1770, %v1771
      %v1773 = vrot.slane %v1772, 2
      %v1774 = vadd.f32 %v1772, %v1773
      %v1775 = vrot.slane %v1774, 1
      %v1776 = vadd.f32 %v1774, %v1775
      %v1777 = vmul.f32 %v1748, %v1748
      %v1778 = vmul.f32 %v1749, %v1749
      %v1779 = vmul.f32 %v1750, %v1750
      %v1780 = vmul.f32 %v1751, %v1751
      %v1781 = vmul.f32 %v1752, %v1752
      %v1782 = vmul.f32 %v1753, %v1753
      %v1783 = vmul.f32 %v1754, %v1754
      %v1784 = vmul.f32 %v1755, %v1755
      %v1785 = vadd.f32 %v1777, %v1778
      %v1786 = vadd.f32 %v1785, %v1779
      %v1787 = vadd.f32 %v1786, %v1780
      %v1788 = vadd.f32 %v1787, %v1781
      %v1789 = vadd.f32 %v1788, %v1782
      %v1790 = vadd.f32 %v1789, %v1783
      %v1791 = vadd.f32 %v1790, %v1784
      %v1792 = vrot.slane %v1791, 4
      %v1793 = vadd.f32 %v1791, %v1792
      %v1794 = vrot.slane %v1793, 2
      %v1795 = vadd.f32 %v1793, %v1794
      %v1796 = vrot.slane %v1795, 1
      %v1797 = vadd.f32 %v1795, %v1796
      %p1798 = scmp.eq.s32.totalorder %s21, 0
      // Predicated region
      $region33: #{resblock_forward.10} parent=31 // pred_check
        %p1799 = pneg %p1798
      $region34: #{resblock_forward.10} parent=31 // pred_check_branch
        %1801 = sbr.rel (%p1799) target = $region36
      $region35: #{resblock_forward.10} parent=31 // pred_region
        %1802 = vst [vmem:[%s226] sm:$0x1] %v1776
        %1803 = vst [vmem:[%s226 + $0x1] sm:$0x1] %v1797
      $region36: #{resblock_forward.10} parent=31 // pred_fallthru
        _
      %p1804 = scmp.ne.s32.totalorder %s21, 0
      // Predicated region
      $region37: #{resblock_forward.10} parent=31 // pred_check
        %p1805 = pneg %p1804
      $region38: #{resblock_forward.10} parent=31 // pred_check_branch
        %1807 = sbr.rel (%p1805) target = $region40
      $region39: #{resblock_forward.10} parent=31 // pred_region
        %v1808 = vld [vmem:[%s226] sm:$0x1]
        %v1809 = vadd.f32 %v1808, %v1776
        %1810 = vst [vmem:[%s226] sm:$0x1] %v1809
        %v1811 = vld [vmem:[%s226 + $0x1] sm:$0x1]
        %v1812 = vadd.f32 %v1811, %v1797
        %1813 = vst [vmem:[%s226 + $0x1] sm:$0x1] %v1812
      $region40: #{resblock_forward.10} parent=31 // pred_fallthru
        _
      %s1814 = sadd.s32 %s20, %s21
      %s1815 = smul.u32 8, %s1814
      %p1816 = scmp.lt.s32.totalorder %s1815, 15
      %s1817 = scalar_select %p1816, %s1815, 15
      %s1818 = smul.addr %s1817, 8
      %s1819 = scalar_lea.vmem %s3, %s1818
      %p1820 = scmp.lt.s32.totalorder %s20, 1
      %s1821 = scalar_select %p1820, %s20, 1
      %s1822 = smul.addr %s1821, 2
      %s1823 = scalar_lea.vmem %s4, %s1822
      // Predicated region
      $region41: #{resblock_forward.10} parent=31 // pred_check
        %p1824 = pneg %p116
      $region42: #{resblock_forward.10} parent=31 // pred_check_branch
        %1826 = sbr.rel (%p1824) target = $region44
      $region43: #{resblock_forward.10} parent=31 // pred_region
        %s1827 = sadd.s32 %s20, %s21
        %s1828 = smul.u32 8, %s1827
      $region44: #{resblock_forward.10} parent=31 // pred_fallthru
        _
      // Predicated region
      $region45: #{resblock_forward.10} parent=31 // pred_check
        %p1829 = pneg %p142
      $region46: #{resblock_forward.10} parent=31 // pred_check_branch
        %1831 = sbr.rel (%p1829) target = $region48
      $region47: #{resblock_forward.10} parent=31 // pred_region
        _
      $region48: #{resblock_forward.10} parent=31 // pred_fallthru
        _
    $region32: #{resblock_forward.10} parent=5 // pred_fallthru
      _
    %p1832 = scmp.le.s32.totalorder 2, %s11
    // Predicated region
    $region49: #{resblock_forward.10} parent=5 // pred_check
      %p1833 = pneg %p1832
    $region50: #{resblock_forward.10} parent=5 // pred_check_branch
      %1835 = sbr.rel (%p1833) target = $region52
    $region51: #{resblock_forward.10} parent=5 // pred_region
      %s1836 = ssub.s32 %s11, 2
      // Predicated region
      $region53: #{resblock_forward.10} parent=51 // pred_check
        %p1837 = pneg %p122
      $region54: #{resblock_forward.10} parent=51 // pred_check_branch
        %1839 = sbr.rel (%p1837) target = $region56
      $region55: #{resblock_forward.10} parent=51 // pred_region
        %s1840 = sadd.s32 %s22, %s23
        %s1841 = smul.u32 8, %s1840
        %p1842 = scmp.lt.s32.totalorder %s1841, 15
        %s1843 = scalar_select %p1842, %s1841, 15
        %s1844 = smul.addr %s1843, 8
        %s1845 = scalar_lea.vmem %s3, %s1844
      $region56: #{resblock_forward.10} parent=51 // pred_fallthru
        _
      // Predicated region
      $region57: #{resblock_forward.10} parent=51 // pred_check
        %p1846 = pneg %p148
      $region58: #{resblock_forward.10} parent=51 // pred_check_branch
        %1848 = sbr.rel (%p1846) target = $region60
      $region59: #{resblock_forward.10} parent=51 // pred_region
        %p1849 = scmp.lt.s32.totalorder %s22, 1
        %s1850 = scalar_select %p1849, %s22, 1
        %s1851 = smul.addr %s1850, 2
        %s1852 = scalar_lea.vmem %s4, %s1851
      $region60: #{resblock_forward.10} parent=51 // pred_fallthru
        _
    $region52: #{resblock_forward.10} parent=5 // pred_fallthru
      _
  $region6: #{resblock_forward.10} parent=0 // loop_footer
    %s15 = sadd.s32 1, %s11
  $region7: #{resblock_forward.10} parent=0 // loop_footer_branch
    %10 = sbr.rel target = $region3
  $region8: #{resblock_forward.10} parent=0 // loop_exit
    _

// kernel: resblock_forward.6
$region0: #{resblock_forward.6}
  #allocation0 [shape = 'u32[]', space=smem, size = 0x4, offset = 0x4, fixed_abs, tag = 'smem constant byte address 0x4 - core index']
  #allocation1 [shape = 'u32[144,128]{1,0:T(1,128)}', space=vmem, size = 0x12000, scoped, tag = 'internal scratch']
  %s0 = inlined_call_operand.vmem [shape: bf16[2,8,8,16], index: 0, kind: input, shape index: {}]
  %s1 = inlined_call_operand.vmem [shape: bf16[1,4,128], index: 1, kind: input, shape index: {}]
  %s2 = inlined_call_operand.vmem [shape: f32[1,128], index: 2, kind: input, shape index: {}]
  %s3 = inlined_call_operand.vmem [shape: f32[128,128], index: 3, kind: output, shape index: {0}]
  %s4 = inlined_call_operand.vmem [shape: f32[2,2,128], index: 4, kind: output, shape index: {1}]
  %5 = xla_tuple %s3, %s4
  %s6 = sld [smem:[#allocation0]]
  $region61: #{resblock_forward.6} parent=0
    _
  %s8 = ssub.s32 1, %s6
  %s9 = scalar_select 0, %s8, %s6
  loop: start=0, step=1, limit=4
  $region2: #{resblock_forward.6} parent=0 // loop_pre_header
    _
  $region3: #{resblock_forward.6} parent=0 // loop_header
    %s11 = sphi 0, %s15
    %p12 = scmp.ge.s32.totalorder %s11, 4
    %s18 = sphi 0, %s30
    %s19 = sphi 0, %s26
    %s20 = sphi 0, %s18
    %s21 = sphi 0, %s19
    %s22 = sphi 0, %s20
    %s23 = sphi 0, %s21
    %s33 = sphi 0, %s35
    %s36 = sphi 0, %s33
    %s37 = sphi 0, %s36
    %s53 = sphi 0, %s37
    %s57 = sphi 0, %s57
    %s59 = sphi 0, %s57
    %s60 = sphi 0, %s59
    %s74 = sphi 0, %s60
    %s78 = sphi 0, %s78
    %s80 = sphi 0, %s78
    %s81 = sphi 0, %s80
    %s95 = sphi 0, %s81
    %s103 = sphi 0, %s105
    %s106 = sphi 0, %s103
    %s107 = sphi 0, %s106
    %s123 = sphi 0, %s107
    %s129 = sphi 0, %s131
    %s132 = sphi 0, %s129
    %s133 = sphi 0, %s132
    %s149 = sphi 0, %s133
  $region4: #{resblock_forward.6} parent=0 // loop_header_branch
    %14 = sbr.rel (%p12) target = $region8
  $region5: #{resblock_forward.6} parent=0 // loop_body
    %s16 = ssub.s32 %s11, 1
    %s17 = ssub.s32 %s11, 2
    %s24 = sadd.s32 1, %s19
    %p25 = scmp.ge.s32.totalorder %s24, 1
    %s26 = scalar_select %p25, 0, %s24
    %s27 = sadd.s32 1, %s18
    %s28 = scalar_select %p25, %s27, %s18
    %p29 = scmp.ge.s32.totalorder %s28, 2
    %s30 = scalar_select %p29, 0, %s28
    %s31 = ssub.s32 %s18, %s30
    %p32 = scmp.eq.s32.totalorder %s31, 0
    %s34 = sadd.s32 %s33, 1
    %s35 = scalar_select %p32, %s33, %s34
    %p38 = pneg %p32
    %p39 = scmp.eq.s32.totalorder %s11, 1
    %p40 = por %p38, %p39
    %p41 = scmp.ne.s32.totalorder %s33, %s36
    %p42 = scmp.eq.s32.totalorder %s11, 0
    %p43 = por %p41, %p42
    %p44 = scmp.ne.s32.totalorder %s33, %s36
    %p45 = scmp.eq.s32.totalorder %s16, 1
    %p46 = por %p44, %p45
    %p47 = scmp.ne.s32.totalorder %s36, %s37
    %p48 = scmp.eq.s32.totalorder %s16, 0
    %p49 = por %p47, %p48
    %p50 = scmp.ne.s32.totalorder %s36, %s37
    %p51 = scmp.eq.s32.totalorder %s17, 1
    %p52 = por %p50, %p51
    %p54 = scmp.ne.s32.totalorder %s37, %s53
    %p55 = scmp.eq.s32.totalorder %s17, 0
    %p56 = por %p54, %p55
    %s58 = sadd.s32 %s57, 1
    %p61 = scmp.eq.s32.totalorder %s11, 1
    %p62 = scmp.ne.s32.totalorder %s57, %s59
    %p63 = scmp.eq.s32.totalorder %s11, 0
    %p64 = por %p62, %p63
    %p65 = scmp.ne.s32.totalorder %s57, %s59
    %p66 = scmp.eq.s32.totalorder %s16, 1
    %p67 = por %p65, %p66
    %p68 = scmp.ne.s32.totalorder %s59, %s60
    %p69 = scmp.eq.s32.totalorder %s16, 0
    %p70 = por %p68, %p69
    %p71 = scmp.ne.s32.totalorder %s59, %s60
    %p72 = scmp.eq.s32.totalorder %s17, 1
    %p73 = por %p71, %p72
    %p75 = scmp.ne.s32.totalorder %s60, %s74
    %p76 = scmp.eq.s32.totalorder %s17, 0
    %p77 = por %p75, %p76
    %s79 = sadd.s32 %s78, 1
    %p82 = scmp.eq.s32.totalorder %s11, 1
    %p83 = scmp.ne.s32.totalorder %s78, %s80
    %p84 = scmp.eq.s32.totalorder %s11, 0
    %p85 = por %p83, %p84
    %p86 = scmp.ne.s32.totalorder %s78, %s80
    %p87 = scmp.eq.s32.totalorder %s16, 1
    %p88 = por %p86, %p87
    %p89 = scmp.ne.s32.totalorder %s80, %s81
    %p90 = scmp.eq.s32.totalorder %s16, 0
    %p91 = por %p89, %p90
    %p92 = scmp.ne.s32.totalorder %s80, %s81
    %p93 = scmp.eq.s32.totalorder %s17, 1
    %p94 = por %p92, %p93
    %p96 = scmp.ne.s32.totalorder %s81, %s95
    %p97 = scmp.eq.s32.totalorder %s17, 0
    %p98 = por %p96, %p97
    %s99 = sadd.s32 %s18, %s19
    %s100 = sadd.s32 %s30, %s26
    %s101 = ssub.s32 %s99, %s100
    %p102 = scmp.eq.s32.totalorder %s101, 0
    %s104 = sadd.s32 %s103, 1
    %s105 = scalar_select %p102, %s103, %s104
    %p108 = pneg %p102
    %p109 = scmp.eq.s32.totalorder %s11, 1
    %p110 = por %p108, %p109
    %p111 = scmp.ne.s32.totalorder %s103, %s106
    %p112 = scmp.eq.s32.totalorder %s11, 0
    %p113 = por %p111, %p112
    %p114 = scmp.ne.s32.totalorder %s103, %s106
    %p115 = scmp.eq.s32.totalorder %s16, 1
    %p116 = por %p114, %p115
    %p117 = scmp.ne.s32.totalorder %s106, %s107
    %p118 = scmp.eq.s32.totalorder %s16, 0
    %p119 = por %p117, %p118
    %p120 = scmp.ne.s32.totalorder %s106, %s107
    %p121 = scmp.eq.s32.totalorder %s17, 1
    %p122 = por %p120, %p121
    %p124 = scmp.ne.s32.totalorder %s107, %s123
    %p125 = scmp.eq.s32.totalorder %s17, 0
    %p126 = por %p124, %p125
    %s127 = ssub.s32 %s18, %s30
    %p128 = scmp.eq.s32.totalorder %s127, 0
    %s130 = sadd.s32 %s129, 1
    %s131 = scalar_select %p128, %s129, %s130
    %p134 = pneg %p128
    %p135 = scmp.eq.s32.totalorder %s11, 1
    %p136 = por %p134, %p135
    %p137 = scmp.ne.s32.totalorder %s129, %s132
    %p138 = scmp.eq.s32.totalorder %s11, 0
    %p139 = por %p137, %p138
    %p140 = scmp.ne.s32.totalorder %s129, %s132
    %p141 = scmp.eq.s32.totalorder %s16, 1
    %p142 = por %p140, %p141
    %p143 = scmp.ne.s32.totalorder %s132, %s133
    %p144 = scmp.eq.s32.totalorder %s16, 0
    %p145 = por %p143, %p144
    %p146 = scmp.ne.s32.totalorder %s132, %s133
    %p147 = scmp.eq.s32.totalorder %s17, 1
    %p148 = por %p146, %p147
    %p150 = scmp.ne.s32.totalorder %s133, %s149
    %p151 = scmp.eq.s32.totalorder %s17, 0
    %p152 = por %p150, %p151
    %p153 = scmp.le.s32.totalorder 1, %s11
    %p154 = scmp.lt.s32.totalorder %s11, 3
    %p155 = pnand %p153, %p154
    %p156 = pneg %p155
    // Predicated region
    $region9: #{resblock_forward.6} parent=5 // pred_check
      _
    $region10: #{resblock_forward.6} parent=5 // pred_check_branch
      %158 = sbr.rel (%p155) target = $region12
    $region11: #{resblock_forward.6} parent=5 // pred_region
      %s159 = ssub.s32 %s11, 1
      // Predicated region
      $region13: #{resblock_forward.6} parent=11 // pred_check
        %p160 = pneg %p70
      $region14: #{resblock_forward.6} parent=11 // pred_check_branch
        %162 = sbr.rel (%p160) target = $region16
      $region15: #{resblock_forward.6} parent=11 // pred_region
        _
      $region16: #{resblock_forward.6} parent=11 // pred_fallthru
        _
      // Predicated region
      $region17: #{resblock_forward.6} parent=11 // pred_check
        %p163 = pneg %p91
      $region18: #{resblock_forward.6} parent=11 // pred_check_branch
        %165 = sbr.rel (%p163) target = $region20
      $region19: #{resblock_forward.6} parent=11 // pred_region
        _
      $region20: #{resblock_forward.6} parent=11 // pred_fallthru
        _
    $region12: #{resblock_forward.6} parent=5 // pred_fallthru
      _
    %p166 = scmp.lt.s32.totalorder %s11, 2
    // Predicated region
    $region21: #{resblock_forward.6} parent=5 // pred_check
      %p167 = pneg %p166
    $region22: #{resblock_forward.6} parent=5 // pred_check_branch
      %169 = sbr.rel (%p167) target = $region24
    $region23: #{resblock_forward.6} parent=5 // pred_region
      // Predicated region
      $region25: #{resblock_forward.6} parent=23 // pred_check
        %p170 = pneg %p43
      $region26: #{resblock_forward.6} parent=23 // pred_check_branch
        %172 = sbr.rel (%p170) target = $region28
      $region27: #{resblock_forward.6} parent=23 // pred_region
        %p173 = scmp.lt.s32.totalorder %s18, 1
        %s174 = scalar_select %p173, %s18, 1
        %s175 = smul.addr %s174, 8
        %s176 = smul.addr %s175, 4
        %s177 = scalar_lea.vmem %s0, %s176
      $region28: #{resblock_forward.6} parent=23 // pred_fallthru
        _
    $region24: #{resblock_forward.6} parent=5 // pred_fallthru
      _
    %p178 = scmp.le.s32.totalorder 1, %s11
    %p179 = scmp.lt.s32.totalorder %s11, 3
    %p180 = pnand %p178, %p179
    %p181 = pneg %p180
    // Predicated region
    $region29: #{resblock_forward.6} parent=5 // pred_check
      _
    $region30: #{resblock_forward.6} parent=5 // pred_check_branch
      %183 = sbr.rel (%p180) target = $region32
    $region31: #{resblock_forward.6} parent=5 // pred_region
      %s184 = ssub.s32 %s11, 1
      %p185 = scmp.lt.s32.totalorder %s20, 1
      %s186 = scalar_select %p185, %s20, 1
      %s187 = smul.addr %s186, 8
      %s188 = smul.addr %s187, 4
      %s189 = scalar_lea.vmem %s0, %s188
      %p190 = pneg %p49
      %p191 = pneg %p46
      %p192 = pneg %p70
      %p193 = pneg %p67
      %p194 = pneg %p91
      %p195 = pneg %p88
      %p196 = pneg %p119
      %p197 = pneg %p116
      %s198 = sadd.s32 %s20, %s21
      %s199 = smul.u32 8, %s198
      %p200 = scmp.lt.s32.totalorder %s199, 15
      %s201 = scalar_select %p200, %s199, 15
      %s202 = smul.addr %s201, 8
      %s203 = scalar_lea.vmem %s3, %s202
      %p204 = pneg %p145
      %p205 = pneg %p142
      %p206 = scmp.lt.s32.totalorder %s20, 1
      %s207 = scalar_select %p206, %s20, 1
      %s208 = smul.addr %s207, 2
      %s209 = scalar_lea.vmem %s4, %s208
      %p210 = scmp.lt.s32.totalorder %s20, 1
      %s211 = scalar_select %p210, %s20, 1
      %s212 = smul.addr %s211, 8
      %s213 = smul.addr %s212, 4
      %s214 = scalar_lea.vmem %s0, %s213
      %s215 = sadd.s32 %s20, %s21
      %s216 = smul.u32 8, %s215
      %p217 = scmp.lt.s32.totalorder %s216, 15
      %s218 = scalar_select %p217, %s216, 15
      %s219 = smul.addr %s218, 8
      %s220 = scalar_lea.vmem %s3, %s219
      %s221 = sadd.s32 %s20, %s21
      %s222 = smul.u32 8, %s221
      %p223 = scmp.lt.s32.totalorder %s20, 1
      %s224 = scalar_select %p223, %s20, 1
      %s225 = smul.addr %s224, 2
      %s226 = scalar_lea.vmem %s4, %s225
      %s228 = smul.u32 %s21, 8
      %s229 = smul.addr %s228, 4
      %s230 = scalar_lea.vmem %s214, %s229
      %v231 = vld [vmem:[%s230] sm:$0xf]
      %v232 = vld [vmem:[%s230 + $0x4] sm:$0xf]
      %v233 = vld [vmem:[%s230 + $0x8] sm:$0xf]
      %v234 = vld [vmem:[%s230 + $0xc] sm:$0xf]
      %v235 = vld [vmem:[%s230 + $0x10] sm:$0xf]
      %v236 = vld [vmem:[%s230 + $0x14] sm:$0xf]
      %v237 = vld [vmem:[%s230 + $0x18] sm:$0xf]
      %v238 = vld [vmem:[%s230 + $0x1c] sm:$0xf]
      %v239 = vld [vmem:[%s1] sm:$0x3]
      %v240 = vld [vmem:[%s2] sm:$0x1]
      %v242 = vlaneseq
      %v243 = vshrl.u32 %v242, 7
      %v244 = vsub.s32 0, %v243
      %v245 = vrot.slane %v240, %v244
      %v255 = vunpack.c.l.b16 %v231
      %v256 = vunpack.c.l.b16 %v232
      %v257 = vunpack.c.l.b16 %v233
      %v258 = vunpack.c.l.b16 %v234
      %v259 = vunpack.c.l.b16 %v235
      %v260 = vunpack.c.l.b16 %v236
      %v261 = vunpack.c.l.b16 %v237
      %v262 = vunpack.c.l.b16 %v238
      %v263 = vpack.c.b16 %v256, %v255
      %v264 = vpack.c.b16 %v258, %v257
      %v265 = vpack.c.b16 %v260, %v259
      %v266 = vpack.c.b16 %v262, %v261
      %vm267 = vcmask 31744
      %v269 = vsel %vm267, %v263, 0
      %v272 = vsel %vm267, %v264, 0
      %v275 = vsel %vm267, %v265, 0
      %v278 = vsel %vm267, %v266, 0
      %vm280 = vcmask 1041408
      %v282 = vsel %vm280, %v239, 0
      %284 = vmatprep.subr.bf16.mxu0 0
      %285 = vmatpush1.bf16.msra.mxu0 0
      %286 = vmatprep.subr.bf16.mxu0 0
      %287 = vmatpush1.bf16.msra.mxu0 0
      %288 = vmatprep.subr.bf16.mxu0 0
      %289 = vmatpush1.bf16.msra.mxu0 0
      %290 = vmatprep.subr.bf16.mxu0 0
      %291 = vmatpush1.bf16.msra.mxu0 0
      %292 = vmatprep.subr.bf16.mxu0 0
      %293 = vmatpush1.bf16.msra.mxu0 0
      %294 = vmatprep.subr.bf16.mxu0 0
      %295 = vmatpush1.bf16.msra.mxu0 0
      %296 = vmatprep.subr.bf16.mxu0 0
      %297 = vmatpush1.bf16.msra.mxu0 0
      %298 = vmatprep.subr.bf16.mxu0 0
      %299 = vmatpush1.bf16.msra.mxu0 %v282
      %300 = vmatprep.subr.bf16.mxu0 0
      %301 = vmatpush2.bf16.msra.mxu0 0
      %302 = vmatprep.subr.bf16.mxu0 0
      %303 = vmatpush2.bf16.msra.mxu0 0
      %304 = vmatprep.subr.bf16.mxu0 0
      %305 = vmatpush2.bf16.msra.mxu0 0
      %306 = vmatprep.subr.bf16.mxu0 0
      %307 = vmatpush2.bf16.msra.mxu0 0
      %308 = vmatprep.subr.bf16.mxu0 0
      %309 = vmatpush2.bf16.msra.mxu0 0
      %310 = vmatprep.subr.bf16.mxu0 0
      %311 = vmatpush2.bf16.msra.mxu0 0
      %312 = vmatprep.subr.bf16.mxu0 0
      %313 = vmatpush2.bf16.msra.mxu0 0
      %314 = vmatprep.subr.bf16.mxu0 0
      %315 = vmatpush2.bf16.msra.mxu0 0
      %316 = vmatprep.mubr.bf16.mxu0 0
      %317 = vmatmul.mubr.bf16.gmra.mxu0 %v269
      %v318 = vpop.f32.mrf.mxu0
      %v319 = vadd.f32 %v245, %v318
      %v320 = vpop.f32.mrf.mxu0
      %v321 = vpop.f32.mrf.mxu0
      %v322 = vadd.f32 %v245, %v321
      %v323 = vpop.f32.mrf.mxu0
      %324 = vmatprep.mubr.bf16.mxu0 0
      %325 = vmatmul.mubr.bf16.gmra.mxu0 %v272
      %v326 = vpop.f32.mrf.mxu0
      %v327 = vadd.f32 %v245, %v326
      %v328 = vpop.f32.mrf.mxu0
      %v329 = vpop.f32.mrf.mxu0
      %v330 = vadd.f32 %v245, %v329
      %v331 = vpop.f32.mrf.mxu0
      %332 = vmatprep.mubr.bf16.mxu0 0
      %333 = vmatmul.mubr.bf16.gmra.mxu0 %v275
      %v334 = vpop.f32.mrf.mxu0
      %v335 = vadd.f32 %v245, %v334
      %v336 = vpop.f32.mrf.mxu0
      %v337 = vpop.f32.mrf.mxu0
      %v338 = vadd.f32 %v245, %v337
      %v339 = vpop.f32.mrf.mxu0
      %340 = vmatprep.mubr.bf16.mxu0 0
      %341 = vmatmul.mubr.bf16.gmra.mxu0 %v278
      %v342 = vpop.f32.mrf.mxu0
      %v343 = vadd.f32 %v245, %v342
      %v344 = vpop.f32.mrf.mxu0
      %v345 = vpop.f32.mrf.mxu0
      %v346 = vadd.f32 %v245, %v345
      %v347 = vpop.f32.mrf.mxu0
      %348 = vdwg.mxu0
      %349 = vst [vmem:[%s220] sm:$0xff] %v319
      %350 = vst [vmem:[%s220 + $0x8] sm:$0xff] %v322
      %351 = vst [vmem:[%s220 + $0x10] sm:$0xff] %v327
      %352 = vst [vmem:[%s220 + $0x18] sm:$0xff] %v330
      %353 = vst [vmem:[%s220 + $0x20] sm:$0xff] %v335
      %354 = vst [vmem:[%s220 + $0x28] sm:$0xff] %v338
      %355 = vst [vmem:[%s220 + $0x30] sm:$0xff] %v343
      %356 = vst [vmem:[%s220 + $0x38] sm:$0xff] %v346
      %v357 = vadd.f32 %v319, %v322
      %v358 = vadd.f32 %v357, %v327
      %v359 = vadd.f32 %v358, %v330
      %v360 = vadd.f32 %v359, %v335
      %v361 = vadd.f32 %v360, %v338
      %v362 = vadd.f32 %v361, %v343
      %v363 = vadd.f32 %v362, %v346
      %v364 = vrot.slane %v363, 4
      %v365 = vadd.f32 %v363, %v364
      %v366 = vrot.slane %v365, 2
      %v367 = vadd.f32 %v365, %v366
      %v368 = vrot.slane %v367, 1
      %v369 = vadd.f32 %v367, %v368
      %v370 = vmul.f32 %v319, %v319
      %v371 = vmul.f32 %v322, %v322
      %v372 = vmul.f32 %v327, %v327
      %v373 = vmul.f32 %v330, %v330
      %v374 = vmul.f32 %v335, %v335
      %v375 = vmul.f32 %v338, %v338
      %v376 = vmul.f32 %v343, %v343
      %v377 = vmul.f32 %v346, %v346
      %v378 = vadd.f32 %v370, %v371
      %v379 = vadd.f32 %v378, %v372
      %v380 = vadd.f32 %v379, %v373
      %v381 = vadd.f32 %v380, %v374
      %v382 = vadd.f32 %v381, %v375
      %v383 = vadd.f32 %v382, %v376
      %v384 = vadd.f32 %v383, %v377
      %v385 = vrot.slane %v384, 4
      %v386 = vadd.f32 %v384, %v385
      %v387 = vrot.slane %v386, 2
      %v388 = vadd.f32 %v386, %v387
      %v389 = vrot.slane %v388, 1
      %v390 = vadd.f32 %v388, %v389
      %p391 = scmp.eq.s32.totalorder %s21, 0
      // Predicated region
      $region33: #{resblock_forward.6} parent=31 // pred_check
        %p392 = pneg %p391
      $region34: #{resblock_forward.6} parent=31 // pred_check_branch
        %394 = sbr.rel (%p392) target = $region36
      $region35: #{resblock_forward.6} parent=31 // pred_region
        %395 = vst [vmem:[%s226] sm:$0x1] %v369
        %396 = vst [vmem:[%s226 + $0x1] sm:$0x1] %v390
      $region36: #{resblock_forward.6} parent=31 // pred_fallthru
        _
      %p397 = scmp.ne.s32.totalorder %s21, 0
      // Predicated region
      $region37: #{resblock_forward.6} parent=31 // pred_check
        %p398 = pneg %p397
      $region38: #{resblock_forward.6} parent=31 // pred_check_branch
        %400 = sbr.rel (%p398) target = $region40
      $region39: #{resblock_forward.6} parent=31 // pred_region
        %v401 = vld [vmem:[%s226] sm:$0x1]
        %v402 = vadd.f32 %v401, %v369
        %403 = vst [vmem:[%s226] sm:$0x1] %v402
        %v404 = vld [vmem:[%s226 + $0x1] sm:$0x1]
        %v405 = vadd.f32 %v404, %v390
        %406 = vst [vmem:[%s226 + $0x1] sm:$0x1] %v405
      $region40: #{resblock_forward.6} parent=31 // pred_fallthru
        _
      %s407 = sadd.s32 %s20, %s21
      %s408 = smul.u32 8, %s407
      %p409 = scmp.lt.s32.totalorder %s408, 15
      %s410 = scalar_select %p409, %s408, 15
      %s411 = smul.addr %s410, 8
      %s412 = scalar_lea.vmem %s3, %s411
      %p413 = scmp.lt.s32.totalorder %s20, 1
      %s414 = scalar_select %p413, %s20, 1
      %s415 = smul.addr %s414, 2
      %s416 = scalar_lea.vmem %s4, %s415
      // Predicated region
      $region41: #{resblock_forward.6} parent=31 // pred_check
        %p417 = pneg %p116
      $region42: #{resblock_forward.6} parent=31 // pred_check_branch
        %419 = sbr.rel (%p417) target = $region44
      $region43: #{resblock_forward.6} parent=31 // pred_region
        %s420 = sadd.s32 %s20, %s21
        %s421 = smul.u32 8, %s420
      $region44: #{resblock_forward.6} parent=31 // pred_fallthru
        _
      // Predicated region
      $region45: #{resblock_forward.6} parent=31 // pred_check
        %p422 = pneg %p142
      $region46: #{resblock_forward.6} parent=31 // pred_check_branch
        %424 = sbr.rel (%p422) target = $region48
      $region47: #{resblock_forward.6} parent=31 // pred_region
        _
      $region48: #{resblock_forward.6} parent=31 // pred_fallthru
        _
    $region32: #{resblock_forward.6} parent=5 // pred_fallthru
      _
    %p425 = scmp.le.s32.totalorder 2, %s11
    // Predicated region
    $region49: #{resblock_forward.6} parent=5 // pred_check
      %p426 = pneg %p425
    $region50: #{resblock_forward.6} parent=5 // pred_check_branch
      %428 = sbr.rel (%p426) target = $region52
    $region51: #{resblock_forward.6} parent=5 // pred_region
      %s429 = ssub.s32 %s11, 2
      // Predicated region
      $region53: #{resblock_forward.6} parent=51 // pred_check
        %p430 = pneg %p122
      $region54: #{resblock_forward.6} parent=51 // pred_check_branch
        %432 = sbr.rel (%p430) target = $region56
      $region55: #{resblock_forward.6} parent=51 // pred_region
        %s433 = sadd.s32 %s22, %s23
        %s434 = smul.u32 8, %s433
        %p435 = scmp.lt.s32.totalorder %s434, 15
        %s436 = scalar_select %p435, %s434, 15
        %s437 = smul.addr %s436, 8
        %s438 = scalar_lea.vmem %s3, %s437
      $region56: #{resblock_forward.6} parent=51 // pred_fallthru
        _
      // Predicated region
      $region57: #{resblock_forward.6} parent=51 // pred_check
        %p439 = pneg %p148
      $region58: #{resblock_forward.6} parent=51 // pred_check_branch
        %441 = sbr.rel (%p439) target = $region60
      $region59: #{resblock_forward.6} parent=51 // pred_region
        %p442 = scmp.lt.s32.totalorder %s22, 1
        %s443 = scalar_select %p442, %s22, 1
        %s444 = smul.addr %s443, 2
        %s445 = scalar_lea.vmem %s4, %s444
      $region60: #{resblock_forward.6} parent=51 // pred_fallthru
        _
    $region52: #{resblock_forward.6} parent=5 // pred_fallthru
      _
  $region6: #{resblock_forward.6} parent=0 // loop_footer
    %s15 = sadd.s32 1, %s11
  $region7: #{resblock_forward.6} parent=0 // loop_footer_branch
    %10 = sbr.rel target = $region3
  $region8: #{resblock_forward.6} parent=0 // loop_exit
    _

</llo_original>
